<compile_context>
chip_gen: v7x
topology: tpu7x:2x2x1
jax: 0.10.0
libtpu: 0.0.40
codegen_flags: <defaults>
</compile_context>

<pallas_src>
import numpy as np
import jax
import jax.numpy as jnp
from jax.experimental import pallas as pl
from jax.experimental.pallas import tpu as pltpu


def lstm_kernel(x_ref,          # (1, T*BB, I)  time-major rows within the batch chunk
                wih0_ref,       # (I, 4H)
                whh0_ref,       # (H, 4H)
                b0_ref,         # (1, 4H) = b_ih0 + b_hh0
                wih1_ref,       # (H, 4H)
                whh1_ref,       # (H, 4H)
                b1_ref,         # (1, 4H) = b_ih1 + b_hh1
                fcw_ref,        # (H, 1)
                fcb_ref,        # (1, 1)
                out_ref):       # (BB, 1)
    TB = x_ref.shape[1]
    H4 = whh0_ref.shape[1]
    H = H4 // 4
    BB = out_ref.shape[0]
    T = TB // BB

    whh0 = whh0_ref[...]
    wih1 = wih1_ref[...]
    whh1 = whh1_ref[...]
    b1 = b1_ref[...]

    # ---- hoisted layer-0 input projection: no recurrent dependence, one big matmul ----
    x2 = x_ref[0]                                                        # (T*BB, I)
    xproj = (jnp.dot(x2, wih0_ref[...], preferred_element_type=jnp.float32)
             + b0_ref[...])                                              # (T*BB, 4H)

    def activate(gates, c):
        # One sigmoid + one tanh over the full 128-lane gate vreg, then static
        # 32-lane slices in PyTorch (i, f, g, o) order.
        sig = jax.nn.sigmoid(gates)
        th = jnp.tanh(gates)
        i_g = sig[:, 0 * H:1 * H]
        f_g = sig[:, 1 * H:2 * H]
        g_g = th[:, 2 * H:3 * H]
        o_g = sig[:, 3 * H:4 * H]
        c_new = f_g * c + i_g * g_g
        h_new = o_g * jnp.tanh(c_new)
        return h_new, c_new

    h0 = jnp.zeros((BB, H), jnp.float32)
    c0 = jnp.zeros((BB, H), jnp.float32)
    h1 = jnp.zeros((BB, H), jnp.float32)
    c1 = jnp.zeros((BB, H), jnp.float32)

    # T is a small static trip count: fully unroll for scheduler visibility
    # (layer-1(t) can overlap layer-0(t+1) once h0(t) is ready).
    for t in range(T):
        # layer 0: x-term comes from the hoisted projection (contiguous, 8-row-aligned slice)
        g0 = xproj[t * BB:(t + 1) * BB, :] + jnp.dot(
            h0, whh0, preferred_element_type=jnp.float32)
        h0, c0 = activate(g0, c0)
        # layer 1: input is layer-0 hidden state at the same timestep
        g1 = (jnp.dot(h0, wih1, preferred_element_type=jnp.float32)
              + jnp.dot(h1, whh1, preferred_element_type=jnp.float32) + b1)
        h1, c1 = activate(g1, c1)

    # fc on the last timestep's top-layer hidden state: (BB,H)@(H,1) + b -> (BB,1)
    out_ref[...] = (jnp.dot(h1, fcw_ref[...], preferred_element_type=jnp.float32)
                    + fcb_ref[...])


def lstm_forward(x, params, *, batch_block=8):
    """x: (B, T, input_size) float32 -> (B,) float32 (matches PyTorch out.view(-1))."""
    B, T, I = x.shape
    BB = min(batch_block, B)
    assert B % BB == 0, "demo wrapper expects B to be a multiple of the batch block"
    nB = B // BB

    # Pack x once (cheap XLA ops, outside the recurrence) so each grid program gets a
    # contiguous time-major slab: row (t*BB + j) of chunk i == x[i*BB + j, t, :].
    x_g = x.reshape(nB, BB, T, I).transpose(0, 2, 1, 3).reshape(nB, T * BB, I)

    def full_spec(arr):
        return pl.BlockSpec(arr.shape, lambda i, nd=arr.ndim: (0,) * nd)

    out = pl.pallas_call(
        lstm_kernel,
        out_shape=jax.ShapeDtypeStruct((B, 1), jnp.float32),
        grid=(nB,),
        in_specs=[
            pl.BlockSpec((1, T * BB, I), lambda i: (i, 0, 0)),
            full_spec(params["wih0"]), full_spec(params["whh0"]), full_spec(params["b0"]),
            full_spec(params["wih1"]), full_spec(params["whh1"]), full_spec(params["b1"]),
            full_spec(params["fcw"]), full_spec(params["fcb"]),
        ],
        out_specs=pl.BlockSpec((BB, 1), lambda i: (i, 0)),
        compiler_params=pltpu.CompilerParams(
            dimension_semantics=("parallel",)),  # v7x: shard batch chunks across both TCs
    )(x_g,
      params["wih0"], params["whh0"], params["b0"],
      params["wih1"], params["whh1"], params["b1"],
      params["fcw"], params["fcb"])
    return out.reshape(-1)


def make_params(key, input_size, hidden_size, output_size):
    """Deterministic PyTorch-like init: U(-1/sqrt(H), 1/sqrt(H)), then fused/transposed."""
    H = hidden_size
    k = 1.0 / np.sqrt(H)
    keys = jax.random.split(key, 10)

    def u(kk, shape):
        return jax.random.uniform(kk, shape, jnp.float32, minval=-k, maxval=k)

    # PyTorch layouts: W_ih (4H, in), W_hh (4H, H), biases (4H,), gate order (i, f, g, o)
    w_ih0 = u(keys[0], (4 * H, input_size))
    w_hh0 = u(keys[1], (4 * H, H))
    b_ih0 = u(keys[2], (4 * H,))
    b_hh0 = u(keys[3], (4 * H,))
    w_ih1 = u(keys[4], (4 * H, H))
    w_hh1 = u(keys[5], (4 * H, H))
    b_ih1 = u(keys[6], (4 * H,))
    b_hh1 = u(keys[7], (4 * H,))
    fcw = u(keys[8], (output_size, H))
    fcb = u(keys[9], (output_size,))

    # Fused, pre-transposed (in_dim, 4H) contraction layouts; gate order preserved; biases combined.
    return {
        "wih0": jnp.transpose(w_ih0),                   # (I, 4H)
        "whh0": jnp.transpose(w_hh0),                   # (H, 4H)
        "b0": (b_ih0 + b_hh0).reshape(1, 4 * H),        # (1, 4H)
        "wih1": jnp.transpose(w_ih1),                   # (H, 4H)
        "whh1": jnp.transpose(w_hh1),                   # (H, 4H)
        "b1": (b_ih1 + b_hh1).reshape(1, 4 * H),        # (1, 4H)
        "fcw": jnp.transpose(fcw),                      # (H, 1)
        "fcb": fcb.reshape(1, output_size),             # (1, 1)
    }


def lstm_forward_ref(x, params):
    """Pure-JAX reference of the same forward pass (PyTorch LSTM semantics)."""
    B, T, _ = x.shape
    H = params["whh0"].shape[0]

    def cell(x_t, h, c, wih, whh, b):
        g = x_t @ wih + h @ whh + b
        i_g = jax.nn.sigmoid(g[:, 0 * H:1 * H])
        f_g = jax.nn.sigmoid(g[:, 1 * H:2 * H])
        g_g = jnp.tanh(g[:, 2 * H:3 * H])
        o_g = jax.nn.sigmoid(g[:, 3 * H:4 * H])
        c = f_g * c + i_g * g_g
        h = o_g * jnp.tanh(c)
        return h, c

    h0 = c0 = h1 = c1 = jnp.zeros((B, H), jnp.float32)
    for t in range(T):
        x_t = x[:, t, :]
        h0, c0 = cell(x_t, h0, c0, params["wih0"], params["whh0"], params["b0"])
        h1, c1 = cell(h0, h1, c1, params["wih1"], params["whh1"], params["b1"])
    out = h1 @ params["fcw"] + params["fcb"]
    return out.reshape(-1)


if __name__ == "__main__":
    B, T = 16, 10               # many windows batched per call; T = window size
    input_size = 16
    hidden_size = 32            # 4*H = 128 -> one lane-dense gate vreg
    num_layers = 2              # fixed at 2 in this kernel (matches the module)
    output_size = 1

    key = jax.random.PRNGKey(0)
    kx, kp = jax.random.split(key)
    x = jax.random.normal(kx, (B, T, input_size), dtype=jnp.float32)
    params = make_params(kp, input_size, hidden_size, output_size)

    out = jax.block_until_ready(lstm_forward(x, params))
    ref = jax.block_until_ready(lstm_forward_ref(x, params))

    assert out.shape == (B,)
    np.testing.assert_allclose(np.asarray(out), np.asarray(ref), rtol=1e-5, atol=1e-5)
    print("KERNEL_OK")
</pallas_src>

<mosaic_0001>
module attributes {stable_mosaic.version = 11 : i64} {
  func.func @lstm_kernel(%arg0: i32, %arg1: memref<1x80x16xf32, #tpu.memory_space<vmem>>, %arg2: memref<16x128xf32, #tpu.memory_space<vmem>>, %arg3: memref<32x128xf32, #tpu.memory_space<vmem>>, %arg4: memref<1x128xf32, #tpu.memory_space<vmem>>, %arg5: memref<32x128xf32, #tpu.memory_space<vmem>>, %arg6: memref<32x128xf32, #tpu.memory_space<vmem>>, %arg7: memref<1x128xf32, #tpu.memory_space<vmem>>, %arg8: memref<32x1xf32, #tpu.memory_space<vmem>>, %arg9: memref<1x1xf32, #tpu.memory_space<vmem>>, %arg10: memref<8x1xf32, #tpu.memory_space<vmem>>) attributes {dimension_semantics = [#tpu.dimension_semantics<parallel>], iteration_bounds = array<i64: 2>, scalar_prefetch = 0 : i64, scratch_operands = 0 : i64, tpu.core_type = #tpu.core_type<tc>, window_params = [{transform_indices = @transform_0, window_bounds = array<i64: 1, 80, 16>}, {pipeline_mode = #tpu.pipeline_mode<synchronous>, transform_indices = @transform_1, window_bounds = array<i64: 16, 128>}, {pipeline_mode = #tpu.pipeline_mode<synchronous>, transform_indices = @transform_2, window_bounds = array<i64: 32, 128>}, {pipeline_mode = #tpu.pipeline_mode<synchronous>, transform_indices = @transform_3, window_bounds = array<i64: 1, 128>}, {pipeline_mode = #tpu.pipeline_mode<synchronous>, transform_indices = @transform_4, window_bounds = array<i64: 32, 128>}, {pipeline_mode = #tpu.pipeline_mode<synchronous>, transform_indices = @transform_5, window_bounds = array<i64: 32, 128>}, {pipeline_mode = #tpu.pipeline_mode<synchronous>, transform_indices = @transform_6, window_bounds = array<i64: 1, 128>}, {pipeline_mode = #tpu.pipeline_mode<synchronous>, transform_indices = @transform_7, window_bounds = array<i64: 32, 1>}, {pipeline_mode = #tpu.pipeline_mode<synchronous>, transform_indices = @transform_8, window_bounds = array<i64: 1, 1>}, {transform_indices = @transform_9, window_bounds = array<i64: 8, 1>}]} {
    %c0 = arith.constant 0 : index
    %c0_0 = arith.constant 0 : index
    %0 = vector.load %arg3[%c0, %c0_0] : memref<32x128xf32, #tpu.memory_space<vmem>>, vector<32x128xf32>
    %c0_1 = arith.constant 0 : index
    %c0_2 = arith.constant 0 : index
    %1 = vector.load %arg5[%c0_1, %c0_2] : memref<32x128xf32, #tpu.memory_space<vmem>>, vector<32x128xf32>
    %c0_3 = arith.constant 0 : index
    %c0_4 = arith.constant 0 : index
    %2 = vector.load %arg6[%c0_3, %c0_4] : memref<32x128xf32, #tpu.memory_space<vmem>>, vector<32x128xf32>
    %c0_5 = arith.constant 0 : index
    %c0_6 = arith.constant 0 : index
    %3 = vector.load %arg7[%c0_5, %c0_6] : memref<1x128xf32, #tpu.memory_space<vmem>>, vector<1x128xf32>
    %c0_7 = arith.constant 0 : index
    %c0_8 = arith.constant 0 : index
    %c0_9 = arith.constant 0 : index
    %4 = vector.load %arg1[%c0_7, %c0_8, %c0_9] : memref<1x80x16xf32, #tpu.memory_space<vmem>>, vector<1x80x16xf32>
    %5 = vector.shape_cast %4 : vector<1x80x16xf32> to vector<80x16xf32>
    %c0_10 = arith.constant 0 : index
    %c0_11 = arith.constant 0 : index
    %6 = vector.load %arg2[%c0_10, %c0_11] : memref<16x128xf32, #tpu.memory_space<vmem>>, vector<16x128xf32>
    %cst = arith.constant dense<0.000000e+00> : vector<80x128xf32>
    %7 = tpu.matmul %5, %6, %cst {dimension_numbers = #tpu.dot_dimension_numbers<[1], [0], [0], [1], [0, 0, 1, 1], [], []>} : vector<80x16xf32>, vector<16x128xf32>, vector<80x128xf32> -> vector<80x128xf32>
    %c0_12 = arith.constant 0 : index
    %c0_13 = arith.constant 0 : index
    %8 = vector.load %arg4[%c0_12, %c0_13] : memref<1x128xf32, #tpu.memory_space<vmem>>, vector<1x128xf32>
    %9 = vector.broadcast %8 : vector<1x128xf32> to vector<80x128xf32>
    %10 = arith.addf %7, %9 : vector<80x128xf32>
    %cst_14 = arith.constant 0.000000e+00 : f32
    %11 = vector.broadcast %cst_14 : f32 to vector<8x32xf32>
    %cst_15 = arith.constant 0.000000e+00 : f32
    %12 = vector.broadcast %cst_15 : f32 to vector<8x32xf32>
    %cst_16 = arith.constant 0.000000e+00 : f32
    %13 = vector.broadcast %cst_16 : f32 to vector<8x32xf32>
    %cst_17 = arith.constant 0.000000e+00 : f32
    %14 = vector.broadcast %cst_17 : f32 to vector<8x32xf32>
    %15 = vector.extract_strided_slice %10 {offsets = [0, 0], sizes = [8, 128], strides = [1, 1]} : vector<80x128xf32> to vector<8x128xf32>
    %cst_18 = arith.constant dense<0.000000e+00> : vector<8x128xf32>
    %16 = tpu.matmul %11, %0, %cst_18 {dimension_numbers = #tpu.dot_dimension_numbers<[1], [0], [0], [1], [0, 0, 1, 1], [], []>} : vector<8x32xf32>, vector<32x128xf32>, vector<8x128xf32> -> vector<8x128xf32>
    %17 = arith.addf %15, %16 : vector<8x128xf32>
    %18 = arith.negf %17 : vector<8x128xf32>
    %19 = math.exp %18 : vector<8x128xf32>
    %cst_19 = arith.constant 1.000000e+00 : f32
    %20 = vector.broadcast %cst_19 : f32 to vector<8x128xf32>
    %21 = arith.addf %20, %19 : vector<8x128xf32>
    %22 = arith.divf %20, %21 : vector<8x128xf32>
    %23 = math.tanh %17 : vector<8x128xf32>
    %24 = vector.extract_strided_slice %22 {offsets = [0, 0], sizes = [8, 32], strides = [1, 1]} : vector<8x128xf32> to vector<8x32xf32>
    %25 = vector.extract_strided_slice %22 {offsets = [0, 32], sizes = [8, 32], strides = [1, 1]} : vector<8x128xf32> to vector<8x32xf32>
    %26 = vector.extract_strided_slice %23 {offsets = [0, 64], sizes = [8, 32], strides = [1, 1]} : vector<8x128xf32> to vector<8x32xf32>
    %27 = vector.extract_strided_slice %22 {offsets = [0, 96], sizes = [8, 32], strides = [1, 1]} : vector<8x128xf32> to vector<8x32xf32>
    %28 = arith.mulf %25, %12 : vector<8x32xf32>
    %29 = arith.mulf %24, %26 : vector<8x32xf32>
    %30 = arith.addf %28, %29 : vector<8x32xf32>
    %31 = math.tanh %30 : vector<8x32xf32>
    %32 = arith.mulf %27, %31 : vector<8x32xf32>
    %cst_20 = arith.constant dense<0.000000e+00> : vector<8x128xf32>
    %33 = tpu.matmul %32, %1, %cst_20 {dimension_numbers = #tpu.dot_dimension_numbers<[1], [0], [0], [1], [0, 0, 1, 1], [], []>} : vector<8x32xf32>, vector<32x128xf32>, vector<8x128xf32> -> vector<8x128xf32>
    %cst_21 = arith.constant dense<0.000000e+00> : vector<8x128xf32>
    %34 = tpu.matmul %13, %2, %cst_21 {dimension_numbers = #tpu.dot_dimension_numbers<[1], [0], [0], [1], [0, 0, 1, 1], [], []>} : vector<8x32xf32>, vector<32x128xf32>, vector<8x128xf32> -> vector<8x128xf32>
    %35 = arith.addf %33, %34 : vector<8x128xf32>
    %36 = vector.broadcast %3 : vector<1x128xf32> to vector<8x128xf32>
    %37 = arith.addf %35, %36 : vector<8x128xf32>
    %38 = arith.negf %37 : vector<8x128xf32>
    %39 = math.exp %38 : vector<8x128xf32>
    %cst_22 = arith.constant 1.000000e+00 : f32
    %40 = vector.broadcast %cst_22 : f32 to vector<8x128xf32>
    %41 = arith.addf %40, %39 : vector<8x128xf32>
    %42 = arith.divf %40, %41 : vector<8x128xf32>
    %43 = math.tanh %37 : vector<8x128xf32>
    %44 = vector.extract_strided_slice %42 {offsets = [0, 0], sizes = [8, 32], strides = [1, 1]} : vector<8x128xf32> to vector<8x32xf32>
    %45 = vector.extract_strided_slice %42 {offsets = [0, 32], sizes = [8, 32], strides = [1, 1]} : vector<8x128xf32> to vector<8x32xf32>
    %46 = vector.extract_strided_slice %43 {offsets = [0, 64], sizes = [8, 32], strides = [1, 1]} : vector<8x128xf32> to vector<8x32xf32>
    %47 = vector.extract_strided_slice %42 {offsets = [0, 96], sizes = [8, 32], strides = [1, 1]} : vector<8x128xf32> to vector<8x32xf32>
    %48 = arith.mulf %45, %14 : vector<8x32xf32>
    %49 = arith.mulf %44, %46 : vector<8x32xf32>
    %50 = arith.addf %48, %49 : vector<8x32xf32>
    %51 = math.tanh %50 : vector<8x32xf32>
    %52 = arith.mulf %47, %51 : vector<8x32xf32>
    %53 = vector.extract_strided_slice %10 {offsets = [8, 0], sizes = [8, 128], strides = [1, 1]} : vector<80x128xf32> to vector<8x128xf32>
    %cst_23 = arith.constant dense<0.000000e+00> : vector<8x128xf32>
    %54 = tpu.matmul %32, %0, %cst_23 {dimension_numbers = #tpu.dot_dimension_numbers<[1], [0], [0], [1], [0, 0, 1, 1], [], []>} : vector<8x32xf32>, vector<32x128xf32>, vector<8x128xf32> -> vector<8x128xf32>
    %55 = arith.addf %53, %54 : vector<8x128xf32>
    %56 = arith.negf %55 : vector<8x128xf32>
    %57 = math.exp %56 : vector<8x128xf32>
    %cst_24 = arith.constant 1.000000e+00 : f32
    %58 = vector.broadcast %cst_24 : f32 to vector<8x128xf32>
    %59 = arith.addf %58, %57 : vector<8x128xf32>
    %60 = arith.divf %58, %59 : vector<8x128xf32>
    %61 = math.tanh %55 : vector<8x128xf32>
    %62 = vector.extract_strided_slice %60 {offsets = [0, 0], sizes = [8, 32], strides = [1, 1]} : vector<8x128xf32> to vector<8x32xf32>
    %63 = vector.extract_strided_slice %60 {offsets = [0, 32], sizes = [8, 32], strides = [1, 1]} : vector<8x128xf32> to vector<8x32xf32>
    %64 = vector.extract_strided_slice %61 {offsets = [0, 64], sizes = [8, 32], strides = [1, 1]} : vector<8x128xf32> to vector<8x32xf32>
    %65 = vector.extract_strided_slice %60 {offsets = [0, 96], sizes = [8, 32], strides = [1, 1]} : vector<8x128xf32> to vector<8x32xf32>
    %66 = arith.mulf %63, %30 : vector<8x32xf32>
    %67 = arith.mulf %62, %64 : vector<8x32xf32>
    %68 = arith.addf %66, %67 : vector<8x32xf32>
    %69 = math.tanh %68 : vector<8x32xf32>
    %70 = arith.mulf %65, %69 : vector<8x32xf32>
    %cst_25 = arith.constant dense<0.000000e+00> : vector<8x128xf32>
    %71 = tpu.matmul %70, %1, %cst_25 {dimension_numbers = #tpu.dot_dimension_numbers<[1], [0], [0], [1], [0, 0, 1, 1], [], []>} : vector<8x32xf32>, vector<32x128xf32>, vector<8x128xf32> -> vector<8x128xf32>
    %cst_26 = arith.constant dense<0.000000e+00> : vector<8x128xf32>
    %72 = tpu.matmul %52, %2, %cst_26 {dimension_numbers = #tpu.dot_dimension_numbers<[1], [0], [0], [1], [0, 0, 1, 1], [], []>} : vector<8x32xf32>, vector<32x128xf32>, vector<8x128xf32> -> vector<8x128xf32>
    %73 = arith.addf %71, %72 : vector<8x128xf32>
    %74 = vector.broadcast %3 : vector<1x128xf32> to vector<8x128xf32>
    %75 = arith.addf %73, %74 : vector<8x128xf32>
    %76 = arith.negf %75 : vector<8x128xf32>
    %77 = math.exp %76 : vector<8x128xf32>
    %cst_27 = arith.constant 1.000000e+00 : f32
    %78 = vector.broadcast %cst_27 : f32 to vector<8x128xf32>
    %79 = arith.addf %78, %77 : vector<8x128xf32>
    %80 = arith.divf %78, %79 : vector<8x128xf32>
    %81 = math.tanh %75 : vector<8x128xf32>
    %82 = vector.extract_strided_slice %80 {offsets = [0, 0], sizes = [8, 32], strides = [1, 1]} : vector<8x128xf32> to vector<8x32xf32>
    %83 = vector.extract_strided_slice %80 {offsets = [0, 32], sizes = [8, 32], strides = [1, 1]} : vector<8x128xf32> to vector<8x32xf32>
    %84 = vector.extract_strided_slice %81 {offsets = [0, 64], sizes = [8, 32], strides = [1, 1]} : vector<8x128xf32> to vector<8x32xf32>
    %85 = vector.extract_strided_slice %80 {offsets = [0, 96], sizes = [8, 32], strides = [1, 1]} : vector<8x128xf32> to vector<8x32xf32>
    %86 = arith.mulf %83, %50 : vector<8x32xf32>
    %87 = arith.mulf %82, %84 : vector<8x32xf32>
    %88 = arith.addf %86, %87 : vector<8x32xf32>
    %89 = math.tanh %88 : vector<8x32xf32>
    %90 = arith.mulf %85, %89 : vector<8x32xf32>
    %91 = vector.extract_strided_slice %10 {offsets = [16, 0], sizes = [8, 128], strides = [1, 1]} : vector<80x128xf32> to vector<8x128xf32>
    %cst_28 = arith.constant dense<0.000000e+00> : vector<8x128xf32>
    %92 = tpu.matmul %70, %0, %cst_28 {dimension_numbers = #tpu.dot_dimension_numbers<[1], [0], [0], [1], [0, 0, 1, 1], [], []>} : vector<8x32xf32>, vector<32x128xf32>, vector<8x128xf32> -> vector<8x128xf32>
    %93 = arith.addf %91, %92 : vector<8x128xf32>
    %94 = arith.negf %93 : vector<8x128xf32>
    %95 = math.exp %94 : vector<8x128xf32>
    %cst_29 = arith.constant 1.000000e+00 : f32
    %96 = vector.broadcast %cst_29 : f32 to vector<8x128xf32>
    %97 = arith.addf %96, %95 : vector<8x128xf32>
    %98 = arith.divf %96, %97 : vector<8x128xf32>
    %99 = math.tanh %93 : vector<8x128xf32>
    %100 = vector.extract_strided_slice %98 {offsets = [0, 0], sizes = [8, 32], strides = [1, 1]} : vector<8x128xf32> to vector<8x32xf32>
    %101 = vector.extract_strided_slice %98 {offsets = [0, 32], sizes = [8, 32], strides = [1, 1]} : vector<8x128xf32> to vector<8x32xf32>
    %102 = vector.extract_strided_slice %99 {offsets = [0, 64], sizes = [8, 32], strides = [1, 1]} : vector<8x128xf32> to vector<8x32xf32>
    %103 = vector.extract_strided_slice %98 {offsets = [0, 96], sizes = [8, 32], strides = [1, 1]} : vector<8x128xf32> to vector<8x32xf32>
    %104 = arith.mulf %101, %68 : vector<8x32xf32>
    %105 = arith.mulf %100, %102 : vector<8x32xf32>
    %106 = arith.addf %104, %105 : vector<8x32xf32>
    %107 = math.tanh %106 : vector<8x32xf32>
    %108 = arith.mulf %103, %107 : vector<8x32xf32>
    %cst_30 = arith.constant dense<0.000000e+00> : vector<8x128xf32>
    %109 = tpu.matmul %108, %1, %cst_30 {dimension_numbers = #tpu.dot_dimension_numbers<[1], [0], [0], [1], [0, 0, 1, 1], [], []>} : vector<8x32xf32>, vector<32x128xf32>, vector<8x128xf32> -> vector<8x128xf32>
    %cst_31 = arith.constant dense<0.000000e+00> : vector<8x128xf32>
    %110 = tpu.matmul %90, %2, %cst_31 {dimension_numbers = #tpu.dot_dimension_numbers<[1], [0], [0], [1], [0, 0, 1, 1], [], []>} : vector<8x32xf32>, vector<32x128xf32>, vector<8x128xf32> -> vector<8x128xf32>
    %111 = arith.addf %109, %110 : vector<8x128xf32>
    %112 = vector.broadcast %3 : vector<1x128xf32> to vector<8x128xf32>
    %113 = arith.addf %111, %112 : vector<8x128xf32>
    %114 = arith.negf %113 : vector<8x128xf32>
    %115 = math.exp %114 : vector<8x128xf32>
    %cst_32 = arith.constant 1.000000e+00 : f32
    %116 = vector.broadcast %cst_32 : f32 to vector<8x128xf32>
    %117 = arith.addf %116, %115 : vector<8x128xf32>
    %118 = arith.divf %116, %117 : vector<8x128xf32>
    %119 = math.tanh %113 : vector<8x128xf32>
    %120 = vector.extract_strided_slice %118 {offsets = [0, 0], sizes = [8, 32], strides = [1, 1]} : vector<8x128xf32> to vector<8x32xf32>
    %121 = vector.extract_strided_slice %118 {offsets = [0, 32], sizes = [8, 32], strides = [1, 1]} : vector<8x128xf32> to vector<8x32xf32>
    %122 = vector.extract_strided_slice %119 {offsets = [0, 64], sizes = [8, 32], strides = [1, 1]} : vector<8x128xf32> to vector<8x32xf32>
    %123 = vector.extract_strided_slice %118 {offsets = [0, 96], sizes = [8, 32], strides = [1, 1]} : vector<8x128xf32> to vector<8x32xf32>
    %124 = arith.mulf %121, %88 : vector<8x32xf32>
    %125 = arith.mulf %120, %122 : vector<8x32xf32>
    %126 = arith.addf %124, %125 : vector<8x32xf32>
    %127 = math.tanh %126 : vector<8x32xf32>
    %128 = arith.mulf %123, %127 : vector<8x32xf32>
    %129 = vector.extract_strided_slice %10 {offsets = [24, 0], sizes = [8, 128], strides = [1, 1]} : vector<80x128xf32> to vector<8x128xf32>
    %cst_33 = arith.constant dense<0.000000e+00> : vector<8x128xf32>
    %130 = tpu.matmul %108, %0, %cst_33 {dimension_numbers = #tpu.dot_dimension_numbers<[1], [0], [0], [1], [0, 0, 1, 1], [], []>} : vector<8x32xf32>, vector<32x128xf32>, vector<8x128xf32> -> vector<8x128xf32>
    %131 = arith.addf %129, %130 : vector<8x128xf32>
    %132 = arith.negf %131 : vector<8x128xf32>
    %133 = math.exp %132 : vector<8x128xf32>
    %cst_34 = arith.constant 1.000000e+00 : f32
    %134 = vector.broadcast %cst_34 : f32 to vector<8x128xf32>
    %135 = arith.addf %134, %133 : vector<8x128xf32>
    %136 = arith.divf %134, %135 : vector<8x128xf32>
    %137 = math.tanh %131 : vector<8x128xf32>
    %138 = vector.extract_strided_slice %136 {offsets = [0, 0], sizes = [8, 32], strides = [1, 1]} : vector<8x128xf32> to vector<8x32xf32>
    %139 = vector.extract_strided_slice %136 {offsets = [0, 32], sizes = [8, 32], strides = [1, 1]} : vector<8x128xf32> to vector<8x32xf32>
    %140 = vector.extract_strided_slice %137 {offsets = [0, 64], sizes = [8, 32], strides = [1, 1]} : vector<8x128xf32> to vector<8x32xf32>
    %141 = vector.extract_strided_slice %136 {offsets = [0, 96], sizes = [8, 32], strides = [1, 1]} : vector<8x128xf32> to vector<8x32xf32>
    %142 = arith.mulf %139, %106 : vector<8x32xf32>
    %143 = arith.mulf %138, %140 : vector<8x32xf32>
    %144 = arith.addf %142, %143 : vector<8x32xf32>
    %145 = math.tanh %144 : vector<8x32xf32>
    %146 = arith.mulf %141, %145 : vector<8x32xf32>
    %cst_35 = arith.constant dense<0.000000e+00> : vector<8x128xf32>
    %147 = tpu.matmul %146, %1, %cst_35 {dimension_numbers = #tpu.dot_dimension_numbers<[1], [0], [0], [1], [0, 0, 1, 1], [], []>} : vector<8x32xf32>, vector<32x128xf32>, vector<8x128xf32> -> vector<8x128xf32>
    %cst_36 = arith.constant dense<0.000000e+00> : vector<8x128xf32>
    %148 = tpu.matmul %128, %2, %cst_36 {dimension_numbers = #tpu.dot_dimension_numbers<[1], [0], [0], [1], [0, 0, 1, 1], [], []>} : vector<8x32xf32>, vector<32x128xf32>, vector<8x128xf32> -> vector<8x128xf32>
    %149 = arith.addf %147, %148 : vector<8x128xf32>
    %150 = vector.broadcast %3 : vector<1x128xf32> to vector<8x128xf32>
    %151 = arith.addf %149, %150 : vector<8x128xf32>
    %152 = arith.negf %151 : vector<8x128xf32>
    %153 = math.exp %152 : vector<8x128xf32>
    %cst_37 = arith.constant 1.000000e+00 : f32
    %154 = vector.broadcast %cst_37 : f32 to vector<8x128xf32>
    %155 = arith.addf %154, %153 : vector<8x128xf32>
    %156 = arith.divf %154, %155 : vector<8x128xf32>
    %157 = math.tanh %151 : vector<8x128xf32>
    %158 = vector.extract_strided_slice %156 {offsets = [0, 0], sizes = [8, 32], strides = [1, 1]} : vector<8x128xf32> to vector<8x32xf32>
    %159 = vector.extract_strided_slice %156 {offsets = [0, 32], sizes = [8, 32], strides = [1, 1]} : vector<8x128xf32> to vector<8x32xf32>
    %160 = vector.extract_strided_slice %157 {offsets = [0, 64], sizes = [8, 32], strides = [1, 1]} : vector<8x128xf32> to vector<8x32xf32>
    %161 = vector.extract_strided_slice %156 {offsets = [0, 96], sizes = [8, 32], strides = [1, 1]} : vector<8x128xf32> to vector<8x32xf32>
    %162 = arith.mulf %159, %126 : vector<8x32xf32>
    %163 = arith.mulf %158, %160 : vector<8x32xf32>
    %164 = arith.addf %162, %163 : vector<8x32xf32>
    %165 = math.tanh %164 : vector<8x32xf32>
    %166 = arith.mulf %161, %165 : vector<8x32xf32>
    %167 = vector.extract_strided_slice %10 {offsets = [32, 0], sizes = [8, 128], strides = [1, 1]} : vector<80x128xf32> to vector<8x128xf32>
    %cst_38 = arith.constant dense<0.000000e+00> : vector<8x128xf32>
    %168 = tpu.matmul %146, %0, %cst_38 {dimension_numbers = #tpu.dot_dimension_numbers<[1], [0], [0], [1], [0, 0, 1, 1], [], []>} : vector<8x32xf32>, vector<32x128xf32>, vector<8x128xf32> -> vector<8x128xf32>
    %169 = arith.addf %167, %168 : vector<8x128xf32>
    %170 = arith.negf %169 : vector<8x128xf32>
    %171 = math.exp %170 : vector<8x128xf32>
    %cst_39 = arith.constant 1.000000e+00 : f32
    %172 = vector.broadcast %cst_39 : f32 to vector<8x128xf32>
    %173 = arith.addf %172, %171 : vector<8x128xf32>
    %174 = arith.divf %172, %173 : vector<8x128xf32>
    %175 = math.tanh %169 : vector<8x128xf32>
    %176 = vector.extract_strided_slice %174 {offsets = [0, 0], sizes = [8, 32], strides = [1, 1]} : vector<8x128xf32> to vector<8x32xf32>
    %177 = vector.extract_strided_slice %174 {offsets = [0, 32], sizes = [8, 32], strides = [1, 1]} : vector<8x128xf32> to vector<8x32xf32>
    %178 = vector.extract_strided_slice %175 {offsets = [0, 64], sizes = [8, 32], strides = [1, 1]} : vector<8x128xf32> to vector<8x32xf32>
    %179 = vector.extract_strided_slice %174 {offsets = [0, 96], sizes = [8, 32], strides = [1, 1]} : vector<8x128xf32> to vector<8x32xf32>
    %180 = arith.mulf %177, %144 : vector<8x32xf32>
    %181 = arith.mulf %176, %178 : vector<8x32xf32>
    %182 = arith.addf %180, %181 : vector<8x32xf32>
    %183 = math.tanh %182 : vector<8x32xf32>
    %184 = arith.mulf %179, %183 : vector<8x32xf32>
    %cst_40 = arith.constant dense<0.000000e+00> : vector<8x128xf32>
    %185 = tpu.matmul %184, %1, %cst_40 {dimension_numbers = #tpu.dot_dimension_numbers<[1], [0], [0], [1], [0, 0, 1, 1], [], []>} : vector<8x32xf32>, vector<32x128xf32>, vector<8x128xf32> -> vector<8x128xf32>
    %cst_41 = arith.constant dense<0.000000e+00> : vector<8x128xf32>
    %186 = tpu.matmul %166, %2, %cst_41 {dimension_numbers = #tpu.dot_dimension_numbers<[1], [0], [0], [1], [0, 0, 1, 1], [], []>} : vector<8x32xf32>, vector<32x128xf32>, vector<8x128xf32> -> vector<8x128xf32>
    %187 = arith.addf %185, %186 : vector<8x128xf32>
    %188 = vector.broadcast %3 : vector<1x128xf32> to vector<8x128xf32>
    %189 = arith.addf %187, %188 : vector<8x128xf32>
    %190 = arith.negf %189 : vector<8x128xf32>
    %191 = math.exp %190 : vector<8x128xf32>
    %cst_42 = arith.constant 1.000000e+00 : f32
    %192 = vector.broadcast %cst_42 : f32 to vector<8x128xf32>
    %193 = arith.addf %192, %191 : vector<8x128xf32>
    %194 = arith.divf %192, %193 : vector<8x128xf32>
    %195 = math.tanh %189 : vector<8x128xf32>
    %196 = vector.extract_strided_slice %194 {offsets = [0, 0], sizes = [8, 32], strides = [1, 1]} : vector<8x128xf32> to vector<8x32xf32>
    %197 = vector.extract_strided_slice %194 {offsets = [0, 32], sizes = [8, 32], strides = [1, 1]} : vector<8x128xf32> to vector<8x32xf32>
    %198 = vector.extract_strided_slice %195 {offsets = [0, 64], sizes = [8, 32], strides = [1, 1]} : vector<8x128xf32> to vector<8x32xf32>
    %199 = vector.extract_strided_slice %194 {offsets = [0, 96], sizes = [8, 32], strides = [1, 1]} : vector<8x128xf32> to vector<8x32xf32>
    %200 = arith.mulf %197, %164 : vector<8x32xf32>
    %201 = arith.mulf %196, %198 : vector<8x32xf32>
    %202 = arith.addf %200, %201 : vector<8x32xf32>
    %203 = math.tanh %202 : vector<8x32xf32>
    %204 = arith.mulf %199, %203 : vector<8x32xf32>
    %205 = vector.extract_strided_slice %10 {offsets = [40, 0], sizes = [8, 128], strides = [1, 1]} : vector<80x128xf32> to vector<8x128xf32>
    %cst_43 = arith.constant dense<0.000000e+00> : vector<8x128xf32>
    %206 = tpu.matmul %184, %0, %cst_43 {dimension_numbers = #tpu.dot_dimension_numbers<[1], [0], [0], [1], [0, 0, 1, 1], [], []>} : vector<8x32xf32>, vector<32x128xf32>, vector<8x128xf32> -> vector<8x128xf32>
    %207 = arith.addf %205, %206 : vector<8x128xf32>
    %208 = arith.negf %207 : vector<8x128xf32>
    %209 = math.exp %208 : vector<8x128xf32>
    %cst_44 = arith.constant 1.000000e+00 : f32
    %210 = vector.broadcast %cst_44 : f32 to vector<8x128xf32>
    %211 = arith.addf %210, %209 : vector<8x128xf32>
    %212 = arith.divf %210, %211 : vector<8x128xf32>
    %213 = math.tanh %207 : vector<8x128xf32>
    %214 = vector.extract_strided_slice %212 {offsets = [0, 0], sizes = [8, 32], strides = [1, 1]} : vector<8x128xf32> to vector<8x32xf32>
    %215 = vector.extract_strided_slice %212 {offsets = [0, 32], sizes = [8, 32], strides = [1, 1]} : vector<8x128xf32> to vector<8x32xf32>
    %216 = vector.extract_strided_slice %213 {offsets = [0, 64], sizes = [8, 32], strides = [1, 1]} : vector<8x128xf32> to vector<8x32xf32>
    %217 = vector.extract_strided_slice %212 {offsets = [0, 96], sizes = [8, 32], strides = [1, 1]} : vector<8x128xf32> to vector<8x32xf32>
    %218 = arith.mulf %215, %182 : vector<8x32xf32>
    %219 = arith.mulf %214, %216 : vector<8x32xf32>
    %220 = arith.addf %218, %219 : vector<8x32xf32>
    %221 = math.tanh %220 : vector<8x32xf32>
    %222 = arith.mulf %217, %221 : vector<8x32xf32>
    %cst_45 = arith.constant dense<0.000000e+00> : vector<8x128xf32>
    %223 = tpu.matmul %222, %1, %cst_45 {dimension_numbers = #tpu.dot_dimension_numbers<[1], [0], [0], [1], [0, 0, 1, 1], [], []>} : vector<8x32xf32>, vector<32x128xf32>, vector<8x128xf32> -> vector<8x128xf32>
    %cst_46 = arith.constant dense<0.000000e+00> : vector<8x128xf32>
    %224 = tpu.matmul %204, %2, %cst_46 {dimension_numbers = #tpu.dot_dimension_numbers<[1], [0], [0], [1], [0, 0, 1, 1], [], []>} : vector<8x32xf32>, vector<32x128xf32>, vector<8x128xf32> -> vector<8x128xf32>
    %225 = arith.addf %223, %224 : vector<8x128xf32>
    %226 = vector.broadcast %3 : vector<1x128xf32> to vector<8x128xf32>
    %227 = arith.addf %225, %226 : vector<8x128xf32>
    %228 = arith.negf %227 : vector<8x128xf32>
    %229 = math.exp %228 : vector<8x128xf32>
    %cst_47 = arith.constant 1.000000e+00 : f32
    %230 = vector.broadcast %cst_47 : f32 to vector<8x128xf32>
    %231 = arith.addf %230, %229 : vector<8x128xf32>
    %232 = arith.divf %230, %231 : vector<8x128xf32>
    %233 = math.tanh %227 : vector<8x128xf32>
    %234 = vector.extract_strided_slice %232 {offsets = [0, 0], sizes = [8, 32], strides = [1, 1]} : vector<8x128xf32> to vector<8x32xf32>
    %235 = vector.extract_strided_slice %232 {offsets = [0, 32], sizes = [8, 32], strides = [1, 1]} : vector<8x128xf32> to vector<8x32xf32>
    %236 = vector.extract_strided_slice %233 {offsets = [0, 64], sizes = [8, 32], strides = [1, 1]} : vector<8x128xf32> to vector<8x32xf32>
    %237 = vector.extract_strided_slice %232 {offsets = [0, 96], sizes = [8, 32], strides = [1, 1]} : vector<8x128xf32> to vector<8x32xf32>
    %238 = arith.mulf %235, %202 : vector<8x32xf32>
    %239 = arith.mulf %234, %236 : vector<8x32xf32>
    %240 = arith.addf %238, %239 : vector<8x32xf32>
    %241 = math.tanh %240 : vector<8x32xf32>
    %242 = arith.mulf %237, %241 : vector<8x32xf32>
    %243 = vector.extract_strided_slice %10 {offsets = [48, 0], sizes = [8, 128], strides = [1, 1]} : vector<80x128xf32> to vector<8x128xf32>
    %cst_48 = arith.constant dense<0.000000e+00> : vector<8x128xf32>
    %244 = tpu.matmul %222, %0, %cst_48 {dimension_numbers = #tpu.dot_dimension_numbers<[1], [0], [0], [1], [0, 0, 1, 1], [], []>} : vector<8x32xf32>, vector<32x128xf32>, vector<8x128xf32> -> vector<8x128xf32>
    %245 = arith.addf %243, %244 : vector<8x128xf32>
    %246 = arith.negf %245 : vector<8x128xf32>
    %247 = math.exp %246 : vector<8x128xf32>
    %cst_49 = arith.constant 1.000000e+00 : f32
    %248 = vector.broadcast %cst_49 : f32 to vector<8x128xf32>
    %249 = arith.addf %248, %247 : vector<8x128xf32>
    %250 = arith.divf %248, %249 : vector<8x128xf32>
    %251 = math.tanh %245 : vector<8x128xf32>
    %252 = vector.extract_strided_slice %250 {offsets = [0, 0], sizes = [8, 32], strides = [1, 1]} : vector<8x128xf32> to vector<8x32xf32>
    %253 = vector.extract_strided_slice %250 {offsets = [0, 32], sizes = [8, 32], strides = [1, 1]} : vector<8x128xf32> to vector<8x32xf32>
    %254 = vector.extract_strided_slice %251 {offsets = [0, 64], sizes = [8, 32], strides = [1, 1]} : vector<8x128xf32> to vector<8x32xf32>
    %255 = vector.extract_strided_slice %250 {offsets = [0, 96], sizes = [8, 32], strides = [1, 1]} : vector<8x128xf32> to vector<8x32xf32>
    %256 = arith.mulf %253, %220 : vector<8x32xf32>
    %257 = arith.mulf %252, %254 : vector<8x32xf32>
    %258 = arith.addf %256, %257 : vector<8x32xf32>
    %259 = math.tanh %258 : vector<8x32xf32>
    %260 = arith.mulf %255, %259 : vector<8x32xf32>
    %cst_50 = arith.constant dense<0.000000e+00> : vector<8x128xf32>
    %261 = tpu.matmul %260, %1, %cst_50 {dimension_numbers = #tpu.dot_dimension_numbers<[1], [0], [0], [1], [0, 0, 1, 1], [], []>} : vector<8x32xf32>, vector<32x128xf32>, vector<8x128xf32> -> vector<8x128xf32>
    %cst_51 = arith.constant dense<0.000000e+00> : vector<8x128xf32>
    %262 = tpu.matmul %242, %2, %cst_51 {dimension_numbers = #tpu.dot_dimension_numbers<[1], [0], [0], [1], [0, 0, 1, 1], [], []>} : vector<8x32xf32>, vector<32x128xf32>, vector<8x128xf32> -> vector<8x128xf32>
    %263 = arith.addf %261, %262 : vector<8x128xf32>
    %264 = vector.broadcast %3 : vector<1x128xf32> to vector<8x128xf32>
    %265 = arith.addf %263, %264 : vector<8x128xf32>
    %266 = arith.negf %265 : vector<8x128xf32>
    %267 = math.exp %266 : vector<8x128xf32>
    %cst_52 = arith.constant 1.000000e+00 : f32
    %268 = vector.broadcast %cst_52 : f32 to vector<8x128xf32>
    %269 = arith.addf %268, %267 : vector<8x128xf32>
    %270 = arith.divf %268, %269 : vector<8x128xf32>
    %271 = math.tanh %265 : vector<8x128xf32>
    %272 = vector.extract_strided_slice %270 {offsets = [0, 0], sizes = [8, 32], strides = [1, 1]} : vector<8x128xf32> to vector<8x32xf32>
    %273 = vector.extract_strided_slice %270 {offsets = [0, 32], sizes = [8, 32], strides = [1, 1]} : vector<8x128xf32> to vector<8x32xf32>
    %274 = vector.extract_strided_slice %271 {offsets = [0, 64], sizes = [8, 32], strides = [1, 1]} : vector<8x128xf32> to vector<8x32xf32>
    %275 = vector.extract_strided_slice %270 {offsets = [0, 96], sizes = [8, 32], strides = [1, 1]} : vector<8x128xf32> to vector<8x32xf32>
    %276 = arith.mulf %273, %240 : vector<8x32xf32>
    %277 = arith.mulf %272, %274 : vector<8x32xf32>
    %278 = arith.addf %276, %277 : vector<8x32xf32>
    %279 = math.tanh %278 : vector<8x32xf32>
    %280 = arith.mulf %275, %279 : vector<8x32xf32>
    %281 = vector.extract_strided_slice %10 {offsets = [56, 0], sizes = [8, 128], strides = [1, 1]} : vector<80x128xf32> to vector<8x128xf32>
    %cst_53 = arith.constant dense<0.000000e+00> : vector<8x128xf32>
    %282 = tpu.matmul %260, %0, %cst_53 {dimension_numbers = #tpu.dot_dimension_numbers<[1], [0], [0], [1], [0, 0, 1, 1], [], []>} : vector<8x32xf32>, vector<32x128xf32>, vector<8x128xf32> -> vector<8x128xf32>
    %283 = arith.addf %281, %282 : vector<8x128xf32>
    %284 = arith.negf %283 : vector<8x128xf32>
    %285 = math.exp %284 : vector<8x128xf32>
    %cst_54 = arith.constant 1.000000e+00 : f32
    %286 = vector.broadcast %cst_54 : f32 to vector<8x128xf32>
    %287 = arith.addf %286, %285 : vector<8x128xf32>
    %288 = arith.divf %286, %287 : vector<8x128xf32>
    %289 = math.tanh %283 : vector<8x128xf32>
    %290 = vector.extract_strided_slice %288 {offsets = [0, 0], sizes = [8, 32], strides = [1, 1]} : vector<8x128xf32> to vector<8x32xf32>
    %291 = vector.extract_strided_slice %288 {offsets = [0, 32], sizes = [8, 32], strides = [1, 1]} : vector<8x128xf32> to vector<8x32xf32>
    %292 = vector.extract_strided_slice %289 {offsets = [0, 64], sizes = [8, 32], strides = [1, 1]} : vector<8x128xf32> to vector<8x32xf32>
    %293 = vector.extract_strided_slice %288 {offsets = [0, 96], sizes = [8, 32], strides = [1, 1]} : vector<8x128xf32> to vector<8x32xf32>
    %294 = arith.mulf %291, %258 : vector<8x32xf32>
    %295 = arith.mulf %290, %292 : vector<8x32xf32>
    %296 = arith.addf %294, %295 : vector<8x32xf32>
    %297 = math.tanh %296 : vector<8x32xf32>
    %298 = arith.mulf %293, %297 : vector<8x32xf32>
    %cst_55 = arith.constant dense<0.000000e+00> : vector<8x128xf32>
    %299 = tpu.matmul %298, %1, %cst_55 {dimension_numbers = #tpu.dot_dimension_numbers<[1], [0], [0], [1], [0, 0, 1, 1], [], []>} : vector<8x32xf32>, vector<32x128xf32>, vector<8x128xf32> -> vector<8x128xf32>
    %cst_56 = arith.constant dense<0.000000e+00> : vector<8x128xf32>
    %300 = tpu.matmul %280, %2, %cst_56 {dimension_numbers = #tpu.dot_dimension_numbers<[1], [0], [0], [1], [0, 0, 1, 1], [], []>} : vector<8x32xf32>, vector<32x128xf32>, vector<8x128xf32> -> vector<8x128xf32>
    %301 = arith.addf %299, %300 : vector<8x128xf32>
    %302 = vector.broadcast %3 : vector<1x128xf32> to vector<8x128xf32>
    %303 = arith.addf %301, %302 : vector<8x128xf32>
    %304 = arith.negf %303 : vector<8x128xf32>
    %305 = math.exp %304 : vector<8x128xf32>
    %cst_57 = arith.constant 1.000000e+00 : f32
    %306 = vector.broadcast %cst_57 : f32 to vector<8x128xf32>
    %307 = arith.addf %306, %305 : vector<8x128xf32>
    %308 = arith.divf %306, %307 : vector<8x128xf32>
    %309 = math.tanh %303 : vector<8x128xf32>
    %310 = vector.extract_strided_slice %308 {offsets = [0, 0], sizes = [8, 32], strides = [1, 1]} : vector<8x128xf32> to vector<8x32xf32>
    %311 = vector.extract_strided_slice %308 {offsets = [0, 32], sizes = [8, 32], strides = [1, 1]} : vector<8x128xf32> to vector<8x32xf32>
    %312 = vector.extract_strided_slice %309 {offsets = [0, 64], sizes = [8, 32], strides = [1, 1]} : vector<8x128xf32> to vector<8x32xf32>
    %313 = vector.extract_strided_slice %308 {offsets = [0, 96], sizes = [8, 32], strides = [1, 1]} : vector<8x128xf32> to vector<8x32xf32>
    %314 = arith.mulf %311, %278 : vector<8x32xf32>
    %315 = arith.mulf %310, %312 : vector<8x32xf32>
    %316 = arith.addf %314, %315 : vector<8x32xf32>
    %317 = math.tanh %316 : vector<8x32xf32>
    %318 = arith.mulf %313, %317 : vector<8x32xf32>
    %319 = vector.extract_strided_slice %10 {offsets = [64, 0], sizes = [8, 128], strides = [1, 1]} : vector<80x128xf32> to vector<8x128xf32>
    %cst_58 = arith.constant dense<0.000000e+00> : vector<8x128xf32>
    %320 = tpu.matmul %298, %0, %cst_58 {dimension_numbers = #tpu.dot_dimension_numbers<[1], [0], [0], [1], [0, 0, 1, 1], [], []>} : vector<8x32xf32>, vector<32x128xf32>, vector<8x128xf32> -> vector<8x128xf32>
    %321 = arith.addf %319, %320 : vector<8x128xf32>
    %322 = arith.negf %321 : vector<8x128xf32>
    %323 = math.exp %322 : vector<8x128xf32>
    %cst_59 = arith.constant 1.000000e+00 : f32
    %324 = vector.broadcast %cst_59 : f32 to vector<8x128xf32>
    %325 = arith.addf %324, %323 : vector<8x128xf32>
    %326 = arith.divf %324, %325 : vector<8x128xf32>
    %327 = math.tanh %321 : vector<8x128xf32>
    %328 = vector.extract_strided_slice %326 {offsets = [0, 0], sizes = [8, 32], strides = [1, 1]} : vector<8x128xf32> to vector<8x32xf32>
    %329 = vector.extract_strided_slice %326 {offsets = [0, 32], sizes = [8, 32], strides = [1, 1]} : vector<8x128xf32> to vector<8x32xf32>
    %330 = vector.extract_strided_slice %327 {offsets = [0, 64], sizes = [8, 32], strides = [1, 1]} : vector<8x128xf32> to vector<8x32xf32>
    %331 = vector.extract_strided_slice %326 {offsets = [0, 96], sizes = [8, 32], strides = [1, 1]} : vector<8x128xf32> to vector<8x32xf32>
    %332 = arith.mulf %329, %296 : vector<8x32xf32>
    %333 = arith.mulf %328, %330 : vector<8x32xf32>
    %334 = arith.addf %332, %333 : vector<8x32xf32>
    %335 = math.tanh %334 : vector<8x32xf32>
    %336 = arith.mulf %331, %335 : vector<8x32xf32>
    %cst_60 = arith.constant dense<0.000000e+00> : vector<8x128xf32>
    %337 = tpu.matmul %336, %1, %cst_60 {dimension_numbers = #tpu.dot_dimension_numbers<[1], [0], [0], [1], [0, 0, 1, 1], [], []>} : vector<8x32xf32>, vector<32x128xf32>, vector<8x128xf32> -> vector<8x128xf32>
    %cst_61 = arith.constant dense<0.000000e+00> : vector<8x128xf32>
    %338 = tpu.matmul %318, %2, %cst_61 {dimension_numbers = #tpu.dot_dimension_numbers<[1], [0], [0], [1], [0, 0, 1, 1], [], []>} : vector<8x32xf32>, vector<32x128xf32>, vector<8x128xf32> -> vector<8x128xf32>
    %339 = arith.addf %337, %338 : vector<8x128xf32>
    %340 = vector.broadcast %3 : vector<1x128xf32> to vector<8x128xf32>
    %341 = arith.addf %339, %340 : vector<8x128xf32>
    %342 = arith.negf %341 : vector<8x128xf32>
    %343 = math.exp %342 : vector<8x128xf32>
    %cst_62 = arith.constant 1.000000e+00 : f32
    %344 = vector.broadcast %cst_62 : f32 to vector<8x128xf32>
    %345 = arith.addf %344, %343 : vector<8x128xf32>
    %346 = arith.divf %344, %345 : vector<8x128xf32>
    %347 = math.tanh %341 : vector<8x128xf32>
    %348 = vector.extract_strided_slice %346 {offsets = [0, 0], sizes = [8, 32], strides = [1, 1]} : vector<8x128xf32> to vector<8x32xf32>
    %349 = vector.extract_strided_slice %346 {offsets = [0, 32], sizes = [8, 32], strides = [1, 1]} : vector<8x128xf32> to vector<8x32xf32>
    %350 = vector.extract_strided_slice %347 {offsets = [0, 64], sizes = [8, 32], strides = [1, 1]} : vector<8x128xf32> to vector<8x32xf32>
    %351 = vector.extract_strided_slice %346 {offsets = [0, 96], sizes = [8, 32], strides = [1, 1]} : vector<8x128xf32> to vector<8x32xf32>
    %352 = arith.mulf %349, %316 : vector<8x32xf32>
    %353 = arith.mulf %348, %350 : vector<8x32xf32>
    %354 = arith.addf %352, %353 : vector<8x32xf32>
    %355 = math.tanh %354 : vector<8x32xf32>
    %356 = arith.mulf %351, %355 : vector<8x32xf32>
    %357 = vector.extract_strided_slice %10 {offsets = [72, 0], sizes = [8, 128], strides = [1, 1]} : vector<80x128xf32> to vector<8x128xf32>
    %cst_63 = arith.constant dense<0.000000e+00> : vector<8x128xf32>
    %358 = tpu.matmul %336, %0, %cst_63 {dimension_numbers = #tpu.dot_dimension_numbers<[1], [0], [0], [1], [0, 0, 1, 1], [], []>} : vector<8x32xf32>, vector<32x128xf32>, vector<8x128xf32> -> vector<8x128xf32>
    %359 = arith.addf %357, %358 : vector<8x128xf32>
    %360 = arith.negf %359 : vector<8x128xf32>
    %361 = math.exp %360 : vector<8x128xf32>
    %cst_64 = arith.constant 1.000000e+00 : f32
    %362 = vector.broadcast %cst_64 : f32 to vector<8x128xf32>
    %363 = arith.addf %362, %361 : vector<8x128xf32>
    %364 = arith.divf %362, %363 : vector<8x128xf32>
    %365 = math.tanh %359 : vector<8x128xf32>
    %366 = vector.extract_strided_slice %364 {offsets = [0, 0], sizes = [8, 32], strides = [1, 1]} : vector<8x128xf32> to vector<8x32xf32>
    %367 = vector.extract_strided_slice %364 {offsets = [0, 32], sizes = [8, 32], strides = [1, 1]} : vector<8x128xf32> to vector<8x32xf32>
    %368 = vector.extract_strided_slice %365 {offsets = [0, 64], sizes = [8, 32], strides = [1, 1]} : vector<8x128xf32> to vector<8x32xf32>
    %369 = vector.extract_strided_slice %364 {offsets = [0, 96], sizes = [8, 32], strides = [1, 1]} : vector<8x128xf32> to vector<8x32xf32>
    %370 = arith.mulf %367, %334 : vector<8x32xf32>
    %371 = arith.mulf %366, %368 : vector<8x32xf32>
    %372 = arith.addf %370, %371 : vector<8x32xf32>
    %373 = math.tanh %372 : vector<8x32xf32>
    %374 = arith.mulf %369, %373 : vector<8x32xf32>
    %cst_65 = arith.constant dense<0.000000e+00> : vector<8x128xf32>
    %375 = tpu.matmul %374, %1, %cst_65 {dimension_numbers = #tpu.dot_dimension_numbers<[1], [0], [0], [1], [0, 0, 1, 1], [], []>} : vector<8x32xf32>, vector<32x128xf32>, vector<8x128xf32> -> vector<8x128xf32>
    %cst_66 = arith.constant dense<0.000000e+00> : vector<8x128xf32>
    %376 = tpu.matmul %356, %2, %cst_66 {dimension_numbers = #tpu.dot_dimension_numbers<[1], [0], [0], [1], [0, 0, 1, 1], [], []>} : vector<8x32xf32>, vector<32x128xf32>, vector<8x128xf32> -> vector<8x128xf32>
    %377 = arith.addf %375, %376 : vector<8x128xf32>
    %378 = vector.broadcast %3 : vector<1x128xf32> to vector<8x128xf32>
    %379 = arith.addf %377, %378 : vector<8x128xf32>
    %380 = arith.negf %379 : vector<8x128xf32>
    %381 = math.exp %380 : vector<8x128xf32>
    %cst_67 = arith.constant 1.000000e+00 : f32
    %382 = vector.broadcast %cst_67 : f32 to vector<8x128xf32>
    %383 = arith.addf %382, %381 : vector<8x128xf32>
    %384 = arith.divf %382, %383 : vector<8x128xf32>
    %385 = math.tanh %379 : vector<8x128xf32>
    %386 = vector.extract_strided_slice %384 {offsets = [0, 0], sizes = [8, 32], strides = [1, 1]} : vector<8x128xf32> to vector<8x32xf32>
    %387 = vector.extract_strided_slice %384 {offsets = [0, 32], sizes = [8, 32], strides = [1, 1]} : vector<8x128xf32> to vector<8x32xf32>
    %388 = vector.extract_strided_slice %385 {offsets = [0, 64], sizes = [8, 32], strides = [1, 1]} : vector<8x128xf32> to vector<8x32xf32>
    %389 = vector.extract_strided_slice %384 {offsets = [0, 96], sizes = [8, 32], strides = [1, 1]} : vector<8x128xf32> to vector<8x32xf32>
    %390 = arith.mulf %387, %354 : vector<8x32xf32>
    %391 = arith.mulf %386, %388 : vector<8x32xf32>
    %392 = arith.addf %390, %391 : vector<8x32xf32>
    %393 = math.tanh %392 : vector<8x32xf32>
    %394 = arith.mulf %389, %393 : vector<8x32xf32>
    %c0_68 = arith.constant 0 : index
    %c0_69 = arith.constant 0 : index
    %395 = vector.load %arg8[%c0_68, %c0_69] : memref<32x1xf32, #tpu.memory_space<vmem>>, vector<32x1xf32>
    %cst_70 = arith.constant dense<0.000000e+00> : vector<8x1xf32>
    %396 = tpu.matmul %394, %395, %cst_70 {dimension_numbers = #tpu.dot_dimension_numbers<[1], [0], [0], [1], [0, 0, 1, 1], [], []>} : vector<8x32xf32>, vector<32x1xf32>, vector<8x1xf32> -> vector<8x1xf32>
    %c0_71 = arith.constant 0 : index
    %c0_72 = arith.constant 0 : index
    %397 = vector.load %arg9[%c0_71, %c0_72] : memref<1x1xf32, #tpu.memory_space<vmem>>, vector<1x1xf32>
    %398 = vector.broadcast %397 : vector<1x1xf32> to vector<8x1xf32>
    %399 = arith.addf %396, %398 : vector<8x1xf32>
    %c0_73 = arith.constant 0 : index
    %c0_74 = arith.constant 0 : index
    %400 = vector.load %arg10[%c0_73, %c0_74] : memref<8x1xf32, #tpu.memory_space<vmem>>, vector<8x1xf32>
    tpu.vector_store %arg10[%c0_73, %c0_74], %399 {strides = array<i32>} : memref<8x1xf32, #tpu.memory_space<vmem>>, vector<8x1xf32>,
    return
  }
  func.func @transform_0(%arg0: i32) -> (i32, i32, i32) {
    %c0_i32 = arith.constant 0 : i32
    %c0_i32_0 = arith.constant 0 : i32
    %c0_i32_1 = arith.constant 0 : i32
    return %arg0, %c0_i32, %c0_i32_0 : i32, i32, i32
  }
  func.func @transform_1(%arg0: i32) -> (i32, i32) {
    %c0_i32 = arith.constant 0 : i32
    %c0_i32_0 = arith.constant 0 : i32
    %c0_i32_1 = arith.constant 0 : i32
    return %c0_i32, %c0_i32_0 : i32, i32
  }
  func.func @transform_2(%arg0: i32) -> (i32, i32) {
    %c0_i32 = arith.constant 0 : i32
    %c0_i32_0 = arith.constant 0 : i32
    %c0_i32_1 = arith.constant 0 : i32
    return %c0_i32, %c0_i32_0 : i32, i32
  }
  func.func @transform_3(%arg0: i32) -> (i32, i32) {
    %c0_i32 = arith.constant 0 : i32
    %c0_i32_0 = arith.constant 0 : i32
    %c0_i32_1 = arith.constant 0 : i32
    return %c0_i32, %c0_i32_0 : i32, i32
  }
  func.func @transform_4(%arg0: i32) -> (i32, i32) {
    %c0_i32 = arith.constant 0 : i32
    %c0_i32_0 = arith.constant 0 : i32
    %c0_i32_1 = arith.constant 0 : i32
    return %c0_i32, %c0_i32_0 : i32, i32
  }
  func.func @transform_5(%arg0: i32) -> (i32, i32) {
    %c0_i32 = arith.constant 0 : i32
    %c0_i32_0 = arith.constant 0 : i32
    %c0_i32_1 = arith.constant 0 : i32
    return %c0_i32, %c0_i32_0 : i32, i32
  }
  func.func @transform_6(%arg0: i32) -> (i32, i32) {
    %c0_i32 = arith.constant 0 : i32
    %c0_i32_0 = arith.constant 0 : i32
    %c0_i32_1 = arith.constant 0 : i32
    return %c0_i32, %c0_i32_0 : i32, i32
  }
  func.func @transform_7(%arg0: i32) -> (i32, i32) {
    %c0_i32 = arith.constant 0 : i32
    %c0_i32_0 = arith.constant 0 : i32
    %c0_i32_1 = arith.constant 0 : i32
    return %c0_i32, %c0_i32_0 : i32, i32
  }
  func.func @transform_8(%arg0: i32) -> (i32, i32) {
    %c0_i32 = arith.constant 0 : i32
    %c0_i32_0 = arith.constant 0 : i32
    %c0_i32_1 = arith.constant 0 : i32
    return %c0_i32, %c0_i32_0 : i32, i32
  }
  func.func @transform_9(%arg0: i32) -> (i32, i32) {
    %c0_i32 = arith.constant 0 : i32
    %c0_i32_0 = arith.constant 0 : i32
    return %arg0, %c0_i32 : i32, i32
  }
}

</mosaic_0001>

<llo_original>
// kernel: tpu_custom_call.1
$region0: #{tpu_custom_call.1}
  #allocation0 [shape = 'u32[]', space=smem, size = 0x4, offset = 0x4, fixed_abs, tag = 'smem constant byte address 0x4 - core index']
  #allocation1 [shape = 'u32[144,128]{1,0:T(1,128)}', space=vmem, size = 0x12000, scoped, tag = 'internal scratch']
  #allocation2 [shape = 'f32[1,1]{1,0:T(1,128)S(1)}', space=vmem, size = 0x200, scoped, tag = 'scoped memory for tpu_custom_call.1']
  %s0 = inlined_call_operand.vmem [shape: f32[2,80,16], index: 0, kind: input, shape index: {}]
  %s1 = inlined_call_operand.vmem [shape: f32[16,128], index: 1, kind: input, shape index: {}]
  %s2 = inlined_call_operand.vmem [shape: f32[32,128], index: 2, kind: input, shape index: {}]
  %s3 = inlined_call_operand.vmem [shape: f32[1,128], index: 3, kind: input, shape index: {}]
  %s4 = inlined_call_operand.vmem [shape: f32[32,128], index: 4, kind: input, shape index: {}]
  %s5 = inlined_call_operand.vmem [shape: f32[32,128], index: 5, kind: input, shape index: {}]
  %s6 = inlined_call_operand.vmem [shape: f32[1,128], index: 6, kind: input, shape index: {}]
  %s7 = inlined_call_operand.vmem [shape: f32[32,1], index: 7, kind: input, shape index: {}]
  %s8 = inlined_call_operand.<no memory space> [shape: f32[1,1], index: 8, kind: input, shape index: {}]
  %s9 = inlined_call_operand.vmem [shape: f32[16,1], index: 9, kind: output, shape index: {}]
  %s10 = sld [smem:[#allocation0]]
  $region69: #{tpu_custom_call.1} parent=0
    _
  %s12 = ssub.s32 1, %s10
  %s13 = scalar_select 0, %s12, %s10
  %v14 = vstv %s8
  %15 = vst [vmem:[#allocation2] sm:$0x1] %v14
  loop: start=0, step=1, limit=4
  $region2: #{tpu_custom_call.1} parent=0 // loop_pre_header
    _
  $region3: #{tpu_custom_call.1} parent=0 // loop_header
    %s17 = sphi 0, %s21
    %p18 = scmp.ge.s32.totalorder %s17, 4
    %s27 = sphi 0, %s29
    %s30 = sphi 0, %s27
    %s31 = sphi 0, %s30
    %s47 = sphi 0, %s31
    %s51 = sphi 0, %s51
    %s53 = sphi 0, %s51
    %s54 = sphi 0, %s53
    %s68 = sphi 0, %s54
    %s72 = sphi 0, %s72
    %s74 = sphi 0, %s72
    %s75 = sphi 0, %s74
    %s89 = sphi 0, %s75
    %s93 = sphi 0, %s93
    %s95 = sphi 0, %s93
    %s96 = sphi 0, %s95
    %s110 = sphi 0, %s96
    %s114 = sphi 0, %s114
    %s116 = sphi 0, %s114
    %s117 = sphi 0, %s116
    %s131 = sphi 0, %s117
    %s135 = sphi 0, %s135
    %s137 = sphi 0, %s135
    %s138 = sphi 0, %s137
    %s152 = sphi 0, %s138
    %s156 = sphi 0, %s156
    %s158 = sphi 0, %s156
    %s159 = sphi 0, %s158
    %s173 = sphi 0, %s159
    %s177 = sphi 0, %s177
    %s179 = sphi 0, %s177
    %s180 = sphi 0, %s179
    %s194 = sphi 0, %s180
    %s198 = sphi 0, %s198
    %s200 = sphi 0, %s198
    %s201 = sphi 0, %s200
    %s215 = sphi 0, %s201
    %s221 = sphi 0, %s223
    %s224 = sphi 0, %s221
    %s225 = sphi 0, %s224
    %s241 = sphi 0, %s225
  $region4: #{tpu_custom_call.1} parent=0 // loop_header_branch
    %20 = sbr.rel (%p18) target = $region8
  $region5: #{tpu_custom_call.1} parent=0 // loop_body
    %s22 = ssub.s32 %s17, 1
    %s23 = ssub.s32 %s17, 2
    %s24 = sadd.s32 %s17, 1
    %s25 = ssub.s32 %s17, %s24
    %p26 = scmp.eq.s32.totalorder %s25, 0
    %s28 = sadd.s32 %s27, 1
    %s29 = scalar_select %p26, %s27, %s28
    %p32 = pneg %p26
    %p33 = scmp.eq.s32.totalorder %s17, 1
    %p34 = por %p32, %p33
    %p35 = scmp.ne.s32.totalorder %s27, %s30
    %p36 = scmp.eq.s32.totalorder %s17, 0
    %p37 = por %p35, %p36
    %p38 = scmp.ne.s32.totalorder %s27, %s30
    %p39 = scmp.eq.s32.totalorder %s22, 1
    %p40 = por %p38, %p39
    %p41 = scmp.ne.s32.totalorder %s30, %s31
    %p42 = scmp.eq.s32.totalorder %s22, 0
    %p43 = por %p41, %p42
    %p44 = scmp.ne.s32.totalorder %s30, %s31
    %p45 = scmp.eq.s32.totalorder %s23, 1
    %p46 = por %p44, %p45
    %p48 = scmp.ne.s32.totalorder %s31, %s47
    %p49 = scmp.eq.s32.totalorder %s23, 0
    %p50 = por %p48, %p49
    %s52 = sadd.s32 %s51, 1
    %p55 = scmp.eq.s32.totalorder %s17, 1
    %p56 = scmp.ne.s32.totalorder %s51, %s53
    %p57 = scmp.eq.s32.totalorder %s17, 0
    %p58 = por %p56, %p57
    %p59 = scmp.ne.s32.totalorder %s51, %s53
    %p60 = scmp.eq.s32.totalorder %s22, 1
    %p61 = por %p59, %p60
    %p62 = scmp.ne.s32.totalorder %s53, %s54
    %p63 = scmp.eq.s32.totalorder %s22, 0
    %p64 = por %p62, %p63
    %p65 = scmp.ne.s32.totalorder %s53, %s54
    %p66 = scmp.eq.s32.totalorder %s23, 1
    %p67 = por %p65, %p66
    %p69 = scmp.ne.s32.totalorder %s54, %s68
    %p70 = scmp.eq.s32.totalorder %s23, 0
    %p71 = por %p69, %p70
    %s73 = sadd.s32 %s72, 1
    %p76 = scmp.eq.s32.totalorder %s17, 1
    %p77 = scmp.ne.s32.totalorder %s72, %s74
    %p78 = scmp.eq.s32.totalorder %s17, 0
    %p79 = por %p77, %p78
    %p80 = scmp.ne.s32.totalorder %s72, %s74
    %p81 = scmp.eq.s32.totalorder %s22, 1
    %p82 = por %p80, %p81
    %p83 = scmp.ne.s32.totalorder %s74, %s75
    %p84 = scmp.eq.s32.totalorder %s22, 0
    %p85 = por %p83, %p84
    %p86 = scmp.ne.s32.totalorder %s74, %s75
    %p87 = scmp.eq.s32.totalorder %s23, 1
    %p88 = por %p86, %p87
    %p90 = scmp.ne.s32.totalorder %s75, %s89
    %p91 = scmp.eq.s32.totalorder %s23, 0
    %p92 = por %p90, %p91
    %s94 = sadd.s32 %s93, 1
    %p97 = scmp.eq.s32.totalorder %s17, 1
    %p98 = scmp.ne.s32.totalorder %s93, %s95
    %p99 = scmp.eq.s32.totalorder %s17, 0
    %p100 = por %p98, %p99
    %p101 = scmp.ne.s32.totalorder %s93, %s95
    %p102 = scmp.eq.s32.totalorder %s22, 1
    %p103 = por %p101, %p102
    %p104 = scmp.ne.s32.totalorder %s95, %s96
    %p105 = scmp.eq.s32.totalorder %s22, 0
    %p106 = por %p104, %p105
    %p107 = scmp.ne.s32.totalorder %s95, %s96
    %p108 = scmp.eq.s32.totalorder %s23, 1
    %p109 = por %p107, %p108
    %p111 = scmp.ne.s32.totalorder %s96, %s110
    %p112 = scmp.eq.s32.totalorder %s23, 0
    %p113 = por %p111, %p112
    %s115 = sadd.s32 %s114, 1
    %p118 = scmp.eq.s32.totalorder %s17, 1
    %p119 = scmp.ne.s32.totalorder %s114, %s116
    %p120 = scmp.eq.s32.totalorder %s17, 0
    %p121 = por %p119, %p120
    %p122 = scmp.ne.s32.totalorder %s114, %s116
    %p123 = scmp.eq.s32.totalorder %s22, 1
    %p124 = por %p122, %p123
    %p125 = scmp.ne.s32.totalorder %s116, %s117
    %p126 = scmp.eq.s32.totalorder %s22, 0
    %p127 = por %p125, %p126
    %p128 = scmp.ne.s32.totalorder %s116, %s117
    %p129 = scmp.eq.s32.totalorder %s23, 1
    %p130 = por %p128, %p129
    %p132 = scmp.ne.s32.totalorder %s117, %s131
    %p133 = scmp.eq.s32.totalorder %s23, 0
    %p134 = por %p132, %p133
    %s136 = sadd.s32 %s135, 1
    %p139 = scmp.eq.s32.totalorder %s17, 1
    %p140 = scmp.ne.s32.totalorder %s135, %s137
    %p141 = scmp.eq.s32.totalorder %s17, 0
    %p142 = por %p140, %p141
    %p143 = scmp.ne.s32.totalorder %s135, %s137
    %p144 = scmp.eq.s32.totalorder %s22, 1
    %p145 = por %p143, %p144
    %p146 = scmp.ne.s32.totalorder %s137, %s138
    %p147 = scmp.eq.s32.totalorder %s22, 0
    %p148 = por %p146, %p147
    %p149 = scmp.ne.s32.totalorder %s137, %s138
    %p150 = scmp.eq.s32.totalorder %s23, 1
    %p151 = por %p149, %p150
    %p153 = scmp.ne.s32.totalorder %s138, %s152
    %p154 = scmp.eq.s32.totalorder %s23, 0
    %p155 = por %p153, %p154
    %s157 = sadd.s32 %s156, 1
    %p160 = scmp.eq.s32.totalorder %s17, 1
    %p161 = scmp.ne.s32.totalorder %s156, %s158
    %p162 = scmp.eq.s32.totalorder %s17, 0
    %p163 = por %p161, %p162
    %p164 = scmp.ne.s32.totalorder %s156, %s158
    %p165 = scmp.eq.s32.totalorder %s22, 1
    %p166 = por %p164, %p165
    %p167 = scmp.ne.s32.totalorder %s158, %s159
    %p168 = scmp.eq.s32.totalorder %s22, 0
    %p169 = por %p167, %p168
    %p170 = scmp.ne.s32.totalorder %s158, %s159
    %p171 = scmp.eq.s32.totalorder %s23, 1
    %p172 = por %p170, %p171
    %p174 = scmp.ne.s32.totalorder %s159, %s173
    %p175 = scmp.eq.s32.totalorder %s23, 0
    %p176 = por %p174, %p175
    %s178 = sadd.s32 %s177, 1
    %p181 = scmp.eq.s32.totalorder %s17, 1
    %p182 = scmp.ne.s32.totalorder %s177, %s179
    %p183 = scmp.eq.s32.totalorder %s17, 0
    %p184 = por %p182, %p183
    %p185 = scmp.ne.s32.totalorder %s177, %s179
    %p186 = scmp.eq.s32.totalorder %s22, 1
    %p187 = por %p185, %p186
    %p188 = scmp.ne.s32.totalorder %s179, %s180
    %p189 = scmp.eq.s32.totalorder %s22, 0
    %p190 = por %p188, %p189
    %p191 = scmp.ne.s32.totalorder %s179, %s180
    %p192 = scmp.eq.s32.totalorder %s23, 1
    %p193 = por %p191, %p192
    %p195 = scmp.ne.s32.totalorder %s180, %s194
    %p196 = scmp.eq.s32.totalorder %s23, 0
    %p197 = por %p195, %p196
    %s199 = sadd.s32 %s198, 1
    %p202 = scmp.eq.s32.totalorder %s17, 1
    %p203 = scmp.ne.s32.totalorder %s198, %s200
    %p204 = scmp.eq.s32.totalorder %s17, 0
    %p205 = por %p203, %p204
    %p206 = scmp.ne.s32.totalorder %s198, %s200
    %p207 = scmp.eq.s32.totalorder %s22, 1
    %p208 = por %p206, %p207
    %p209 = scmp.ne.s32.totalorder %s200, %s201
    %p210 = scmp.eq.s32.totalorder %s22, 0
    %p211 = por %p209, %p210
    %p212 = scmp.ne.s32.totalorder %s200, %s201
    %p213 = scmp.eq.s32.totalorder %s23, 1
    %p214 = por %p212, %p213
    %p216 = scmp.ne.s32.totalorder %s201, %s215
    %p217 = scmp.eq.s32.totalorder %s23, 0
    %p218 = por %p216, %p217
    %s219 = ssub.s32 %s17, %s24
    %p220 = scmp.eq.s32.totalorder %s219, 0
    %s222 = sadd.s32 %s221, 1
    %s223 = scalar_select %p220, %s221, %s222
    %p226 = pneg %p220
    %p227 = scmp.eq.s32.totalorder %s17, 1
    %p228 = por %p226, %p227
    %p229 = scmp.ne.s32.totalorder %s221, %s224
    %p230 = scmp.eq.s32.totalorder %s17, 0
    %p231 = por %p229, %p230
    %p232 = scmp.ne.s32.totalorder %s221, %s224
    %p233 = scmp.eq.s32.totalorder %s22, 1
    %p234 = por %p232, %p233
    %p235 = scmp.ne.s32.totalorder %s224, %s225
    %p236 = scmp.eq.s32.totalorder %s22, 0
    %p237 = por %p235, %p236
    %p238 = scmp.ne.s32.totalorder %s224, %s225
    %p239 = scmp.eq.s32.totalorder %s23, 1
    %p240 = por %p238, %p239
    %p242 = scmp.ne.s32.totalorder %s225, %s241
    %p243 = scmp.eq.s32.totalorder %s23, 0
    %p244 = por %p242, %p243
    %p245 = scmp.le.s32.totalorder 1, %s17
    %p246 = scmp.lt.s32.totalorder %s17, 3
    %p247 = pnand %p245, %p246
    %p248 = pneg %p247
    // Predicated region
    $region9: #{tpu_custom_call.1} parent=5 // pred_check
      _
    $region10: #{tpu_custom_call.1} parent=5 // pred_check_branch
      %250 = sbr.rel (%p247) target = $region12
    $region11: #{tpu_custom_call.1} parent=5 // pred_region
      %s251 = ssub.s32 %s17, 1
      // Predicated region
      $region13: #{tpu_custom_call.1} parent=11 // pred_check
        %p252 = pneg %p64
      $region14: #{tpu_custom_call.1} parent=11 // pred_check_branch
        %254 = sbr.rel (%p252) target = $region16
      $region15: #{tpu_custom_call.1} parent=11 // pred_region
        _
      $region16: #{tpu_custom_call.1} parent=11 // pred_fallthru
        _
      // Predicated region
      $region17: #{tpu_custom_call.1} parent=11 // pred_check
        %p255 = pneg %p85
      $region18: #{tpu_custom_call.1} parent=11 // pred_check_branch
        %257 = sbr.rel (%p255) target = $region20
      $region19: #{tpu_custom_call.1} parent=11 // pred_region
        _
      $region20: #{tpu_custom_call.1} parent=11 // pred_fallthru
        _
      // Predicated region
      $region21: #{tpu_custom_call.1} parent=11 // pred_check
        %p258 = pneg %p106
      $region22: #{tpu_custom_call.1} parent=11 // pred_check_branch
        %260 = sbr.rel (%p258) target = $region24
      $region23: #{tpu_custom_call.1} parent=11 // pred_region
        _
      $region24: #{tpu_custom_call.1} parent=11 // pred_fallthru
        _
      // Predicated region
      $region25: #{tpu_custom_call.1} parent=11 // pred_check
        %p261 = pneg %p127
      $region26: #{tpu_custom_call.1} parent=11 // pred_check_branch
        %263 = sbr.rel (%p261) target = $region28
      $region27: #{tpu_custom_call.1} parent=11 // pred_region
        _
      $region28: #{tpu_custom_call.1} parent=11 // pred_fallthru
        _
      // Predicated region
      $region29: #{tpu_custom_call.1} parent=11 // pred_check
        %p264 = pneg %p148
      $region30: #{tpu_custom_call.1} parent=11 // pred_check_branch
        %266 = sbr.rel (%p264) target = $region32
      $region31: #{tpu_custom_call.1} parent=11 // pred_region
        _
      $region32: #{tpu_custom_call.1} parent=11 // pred_fallthru
        _
      // Predicated region
      $region33: #{tpu_custom_call.1} parent=11 // pred_check
        %p267 = pneg %p169
      $region34: #{tpu_custom_call.1} parent=11 // pred_check_branch
        %269 = sbr.rel (%p267) target = $region36
      $region35: #{tpu_custom_call.1} parent=11 // pred_region
        _
      $region36: #{tpu_custom_call.1} parent=11 // pred_fallthru
        _
      // Predicated region
      $region37: #{tpu_custom_call.1} parent=11 // pred_check
        %p270 = pneg %p190
      $region38: #{tpu_custom_call.1} parent=11 // pred_check_branch
        %272 = sbr.rel (%p270) target = $region40
      $region39: #{tpu_custom_call.1} parent=11 // pred_region
        _
      $region40: #{tpu_custom_call.1} parent=11 // pred_fallthru
        _
      // Predicated region
      $region41: #{tpu_custom_call.1} parent=11 // pred_check
        %p273 = pneg %p211
      $region42: #{tpu_custom_call.1} parent=11 // pred_check_branch
        %275 = sbr.rel (%p273) target = $region44
      $region43: #{tpu_custom_call.1} parent=11 // pred_region
        _
      $region44: #{tpu_custom_call.1} parent=11 // pred_fallthru
        _
    $region12: #{tpu_custom_call.1} parent=5 // pred_fallthru
      _
    %p276 = scmp.lt.s32.totalorder %s17, 2
    // Predicated region
    $region45: #{tpu_custom_call.1} parent=5 // pred_check
      %p277 = pneg %p276
    $region46: #{tpu_custom_call.1} parent=5 // pred_check_branch
      %279 = sbr.rel (%p277) target = $region48
    $region47: #{tpu_custom_call.1} parent=5 // pred_region
      // Predicated region
      $region49: #{tpu_custom_call.1} parent=47 // pred_check
        %p280 = pneg %p37
      $region50: #{tpu_custom_call.1} parent=47 // pred_check_branch
        %282 = sbr.rel (%p280) target = $region52
      $region51: #{tpu_custom_call.1} parent=47 // pred_region
        %p283 = scmp.lt.s32.totalorder %s17, 1
        %s284 = scalar_select %p283, %s17, 1
        %s285 = smul.addr %s284, 10
        %s286 = smul.addr %s285, 8
        %s287 = scalar_lea.vmem %s0, %s286
      $region52: #{tpu_custom_call.1} parent=47 // pred_fallthru
        _
    $region48: #{tpu_custom_call.1} parent=5 // pred_fallthru
      _
    %p288 = scmp.le.s32.totalorder 1, %s17
    %p289 = scmp.lt.s32.totalorder %s17, 3
    %p290 = pnand %p288, %p289
    %p291 = pneg %p290
    // Predicated region
    $region53: #{tpu_custom_call.1} parent=5 // pred_check
      _
    $region54: #{tpu_custom_call.1} parent=5 // pred_check_branch
      %293 = sbr.rel (%p290) target = $region56
    $region55: #{tpu_custom_call.1} parent=5 // pred_region
      %s294 = ssub.s32 %s17, 1
      %p295 = scmp.lt.s32.totalorder %s22, 1
      %s296 = scalar_select %p295, %s22, 1
      %s297 = smul.addr %s296, 10
      %s298 = smul.addr %s297, 8
      %s299 = scalar_lea.vmem %s0, %s298
      %p300 = pneg %p43
      %p301 = pneg %p40
      %p302 = pneg %p64
      %p303 = pneg %p61
      %p304 = pneg %p85
      %p305 = pneg %p82
      %p306 = pneg %p106
      %p307 = pneg %p103
      %p308 = pneg %p127
      %p309 = pneg %p124
      %p310 = pneg %p148
      %p311 = pneg %p145
      %p312 = pneg %p169
      %p313 = pneg %p166
      %p314 = pneg %p190
      %p315 = pneg %p187
      %p316 = pneg %p211
      %p317 = pneg %p208
      %p318 = pneg %p237
      %p319 = pneg %p234
      %p320 = scmp.lt.s32.totalorder %s22, 1
      %s321 = scalar_select %p320, %s22, 1
      %s322 = smul.addr %s321, 8
      %s323 = scalar_lea.vmem %s9, %s322
      %p324 = scmp.lt.s32.totalorder %s22, 1
      %s325 = scalar_select %p324, %s22, 1
      %s326 = smul.addr %s325, 10
      %s327 = smul.addr %s326, 8
      %s328 = scalar_lea.vmem %s0, %s327
      %p329 = scmp.lt.s32.totalorder %s22, 1
      %s330 = scalar_select %p329, %s22, 1
      %s331 = smul.addr %s330, 8
      %s332 = scalar_lea.vmem %s9, %s331
      %v333 = vld [vmem:[%s2] sm:$0xff]
      %v334 = vld [vmem:[%s2 + $0x8] sm:$0xff]
      %v335 = vld [vmem:[%s2 + $0x10] sm:$0xff]
      %v336 = vld [vmem:[%s2 + $0x18] sm:$0xff]
      %v337 = vld [vmem:[%s4] sm:$0xff]
      %v338 = vld [vmem:[%s4 + $0x8] sm:$0xff]
      %v339 = vld [vmem:[%s4 + $0x10] sm:$0xff]
      %v340 = vld [vmem:[%s4 + $0x18] sm:$0xff]
      %v341 = vld [vmem:[%s5] sm:$0xff]
      %v342 = vld [vmem:[%s5 + $0x8] sm:$0xff]
      %v343 = vld [vmem:[%s5 + $0x10] sm:$0xff]
      %v344 = vld [vmem:[%s5 + $0x18] sm:$0xff]
      %v345 = vld [vmem:[%s6] sm:$0x1]
      %v346 = vld [vmem:[%s328] sm:$0xff]
      %v347 = vld [vmem:[%s328 + $0x8] sm:$0xff]
      %v348 = vld [vmem:[%s328 + $0x10] sm:$0xff]
      %v349 = vld [vmem:[%s328 + $0x18] sm:$0xff]
      %v350 = vld [vmem:[%s328 + $0x20] sm:$0xff]
      %v351 = vld [vmem:[%s328 + $0x28] sm:$0xff]
      %v352 = vld [vmem:[%s328 + $0x30] sm:$0xff]
      %v353 = vld [vmem:[%s328 + $0x38] sm:$0xff]
      %v354 = vld [vmem:[%s328 + $0x40] sm:$0xff]
      %v355 = vld [vmem:[%s328 + $0x48] sm:$0xff]
      %v356 = vld [vmem:[%s1] sm:$0xff]
      %v357 = vld [vmem:[%s1 + $0x8] sm:$0xff]
      %v358 = vld [vmem:[%s3] sm:$0x1]
      %v360 = vlaneseq
      %v361 = vshrl.u32 %v360, 7
      %v362 = vsub.s32 0, %v361
      %v363 = vrot.slane %v358, %v362
      %vm365 = vcmask 130048
      %v367 = vsel %vm365, %v346, 0
      %v370 = vsel %vm365, %v347, 0
      %v373 = vsel %vm365, %v348, 0
      %v376 = vsel %vm365, %v349, 0
      %v379 = vsel %vm365, %v350, 0
      %v382 = vsel %vm365, %v351, 0
      %v385 = vsel %vm365, %v352, 0
      %v388 = vsel %vm365, %v353, 0
      %v391 = vsel %vm365, %v354, 0
      %v394 = vsel %vm365, %v355, 0
      %396 = vmatprep.subr.mxu0 0.0
      %397 = vmatpush1.msra.mxu0 %v356
      %398 = vmatprep.subr.mxu0 0.0
      %399 = vmatpush1.msra.mxu0 %v357
      %400 = vmatprep.subr.mxu0 0.0
      %401 = vmatpush1.msra.mxu0 0.0
      %402 = vmatprep.subr.mxu0 0.0
      %403 = vmatpush1.msra.mxu0 0.0
      %404 = vmatprep.subr.mxu0 0.0
      %405 = vmatpush1.msra.mxu0 0.0
      %406 = vmatprep.subr.mxu0 0.0
      %407 = vmatpush1.msra.mxu0 0.0
      %408 = vmatprep.subr.mxu0 0.0
      %409 = vmatpush1.msra.mxu0 0.0
      %410 = vmatprep.subr.mxu0 0.0
      %411 = vmatpush1.msra.mxu0 0.0
      %412 = vmatprep.subr.mxu0 0.0
      %413 = vmatpush1.msra.mxu0 0.0
      %414 = vmatprep.subr.mxu0 0.0
      %415 = vmatpush1.msra.mxu0 0.0
      %416 = vmatprep.subr.mxu0 0.0
      %417 = vmatpush1.msra.mxu0 0.0
      %418 = vmatprep.subr.mxu0 0.0
      %419 = vmatpush1.msra.mxu0 0.0
      %420 = vmatprep.subr.mxu0 0.0
      %421 = vmatpush1.msra.mxu0 0.0
      %422 = vmatprep.subr.mxu0 0.0
      %423 = vmatpush1.msra.mxu0 0.0
      %424 = vmatprep.subr.mxu0 0.0
      %425 = vmatpush1.msra.mxu0 0.0
      %426 = vmatprep.subr.mxu0 0.0
      %427 = vmatpush1.msra.mxu0 0.0
      %428 = vmatprep.subr.mxu0 0.0
      %429 = vmatpush1.msra.mxu0 0.0
      %430 = vmatprep.subr.mxu0 0.0
      %431 = vmatpush1.msra.mxu0 0.0
      %432 = vmatprep.subr.mxu0 0.0
      %433 = vmatpush1.msra.mxu0 0.0
      %434 = vmatprep.subr.mxu0 0.0
      %435 = vmatpush1.msra.mxu0 0.0
      %436 = vmatprep.subr.mxu0 0.0
      %437 = vmatpush1.msra.mxu0 0.0
      %438 = vmatprep.subr.mxu0 0.0
      %439 = vmatpush1.msra.mxu0 0.0
      %440 = vmatprep.subr.mxu0 0.0
      %441 = vmatpush1.msra.mxu0 0.0
      %442 = vmatprep.subr.mxu0 0.0
      %443 = vmatpush1.msra.mxu0 0.0
      %444 = vmatprep.subr.mxu0 0.0
      %445 = vmatpush1.msra.mxu0 0.0
      %446 = vmatprep.subr.mxu0 0.0
      %447 = vmatpush1.msra.mxu0 0.0
      %448 = vmatprep.subr.mxu0 0.0
      %449 = vmatpush1.msra.mxu0 0.0
      %450 = vmatprep.subr.mxu0 0.0
      %451 = vmatpush1.msra.mxu0 0.0
      %452 = vmatprep.subr.mxu0 0.0
      %453 = vmatpush1.msra.mxu0 0.0
      %454 = vmatprep.subr.mxu0 0.0
      %455 = vmatpush1.msra.mxu0 0.0
      %456 = vmatprep.subr.mxu0 0.0
      %457 = vmatpush1.msra.mxu0 0.0
      %458 = vmatprep.subr.mxu0 0.0
      %459 = vmatpush1.msra.mxu0 0.0
      %460 = vmatprep.mubr.f32.mxu0 0.0
      %461 = vmatmul.mubr.f32.gmra.mrb[0].mxu0 %v367
      %v462 = vpop.f32.mrb[0].mxu0
      %v463 = vadd.f32 %v363, %v462
      %v464 = vpop.f32.mrb[0].mxu0
      %465 = vmatprep.mubr.f32.mxu0 0.0
      %466 = vmatmul.mubr.f32.gmra.mrb[0].mxu0 %v370
      %v467 = vpop.f32.mrb[0].mxu0
      %v468 = vadd.f32 %v363, %v467
      %v469 = vpop.f32.mrb[0].mxu0
      %470 = vmatprep.mubr.f32.mxu0 0.0
      %471 = vmatmul.mubr.f32.gmra.mrb[0].mxu0 %v373
      %v472 = vpop.f32.mrb[0].mxu0
      %v473 = vadd.f32 %v363, %v472
      %v474 = vpop.f32.mrb[0].mxu0
      %475 = vmatprep.mubr.f32.mxu0 0.0
      %476 = vmatmul.mubr.f32.gmra.mrb[0].mxu0 %v376
      %v477 = vpop.f32.mrb[0].mxu0
      %v478 = vadd.f32 %v363, %v477
      %v479 = vpop.f32.mrb[0].mxu0
      %480 = vmatprep.mubr.f32.mxu0 0.0
      %481 = vmatmul.mubr.f32.gmra.mrb[0].mxu0 %v379
      %v482 = vpop.f32.mrb[0].mxu0
      %v483 = vadd.f32 %v363, %v482
      %v484 = vpop.f32.mrb[0].mxu0
      %485 = vmatprep.mubr.f32.mxu0 0.0
      %486 = vmatmul.mubr.f32.gmra.mrb[0].mxu0 %v382
      %v487 = vpop.f32.mrb[0].mxu0
      %v488 = vadd.f32 %v363, %v487
      %v489 = vpop.f32.mrb[0].mxu0
      %490 = vmatprep.mubr.f32.mxu0 0.0
      %491 = vmatmul.mubr.f32.gmra.mrb[0].mxu0 %v385
      %v492 = vpop.f32.mrb[0].mxu0
      %v493 = vadd.f32 %v363, %v492
      %v494 = vpop.f32.mrb[0].mxu0
      %495 = vmatprep.mubr.f32.mxu0 0.0
      %496 = vmatmul.mubr.f32.gmra.mrb[0].mxu0 %v388
      %v497 = vpop.f32.mrb[0].mxu0
      %v498 = vadd.f32 %v363, %v497
      %v499 = vpop.f32.mrb[0].mxu0
      %500 = vmatprep.mubr.f32.mxu0 0.0
      %501 = vmatmul.mubr.f32.gmra.mrb[0].mxu0 %v391
      %v502 = vpop.f32.mrb[0].mxu0
      %v503 = vadd.f32 %v363, %v502
      %v504 = vpop.f32.mrb[0].mxu0
      %505 = vmatprep.mubr.f32.mxu0 0.0
      %506 = vmatmul.mubr.f32.gmra.mrb[0].mxu0 %v394
      %v507 = vpop.f32.mrb[0].mxu0
      %v508 = vadd.f32 %v363, %v507
      %v509 = vpop.f32.mrb[0].mxu0
      %510 = vdwg.mxu0
      %vm511 = vcmask 261120
      %v513 = vsel %vm511, 0.0, 0
      %515 = vmatprep.subr.mxu0 0.0
      %516 = vmatpush1.msra.mxu0 %v333
      %517 = vmatprep.subr.mxu0 0.0
      %518 = vmatpush1.msra.mxu0 %v334
      %519 = vmatprep.subr.mxu0 0.0
      %520 = vmatpush1.msra.mxu0 %v335
      %521 = vmatprep.subr.mxu0 0.0
      %522 = vmatpush1.msra.mxu0 %v336
      %523 = vmatprep.subr.mxu0 0.0
      %524 = vmatpush1.msra.mxu0 0.0
      %525 = vmatprep.subr.mxu0 0.0
      %526 = vmatpush1.msra.mxu0 0.0
      %527 = vmatprep.subr.mxu0 0.0
      %528 = vmatpush1.msra.mxu0 0.0
      %529 = vmatprep.subr.mxu0 0.0
      %530 = vmatpush1.msra.mxu0 0.0
      %531 = vmatprep.subr.mxu0 0.0
      %532 = vmatpush1.msra.mxu0 0.0
      %533 = vmatprep.subr.mxu0 0.0
      %534 = vmatpush1.msra.mxu0 0.0
      %535 = vmatprep.subr.mxu0 0.0
      %536 = vmatpush1.msra.mxu0 0.0
      %537 = vmatprep.subr.mxu0 0.0
      %538 = vmatpush1.msra.mxu0 0.0
      %539 = vmatprep.subr.mxu0 0.0
      %540 = vmatpush1.msra.mxu0 0.0
      %541 = vmatprep.subr.mxu0 0.0
      %542 = vmatpush1.msra.mxu0 0.0
      %543 = vmatprep.subr.mxu0 0.0
      %544 = vmatpush1.msra.mxu0 0.0
      %545 = vmatprep.subr.mxu0 0.0
      %546 = vmatpush1.msra.mxu0 0.0
      %547 = vmatprep.subr.mxu0 0.0
      %548 = vmatpush1.msra.mxu0 0.0
      %549 = vmatprep.subr.mxu0 0.0
      %550 = vmatpush1.msra.mxu0 0.0
      %551 = vmatprep.subr.mxu0 0.0
      %552 = vmatpush1.msra.mxu0 0.0
      %553 = vmatprep.subr.mxu0 0.0
      %554 = vmatpush1.msra.mxu0 0.0
      %555 = vmatprep.subr.mxu0 0.0
      %556 = vmatpush1.msra.mxu0 0.0
      %557 = vmatprep.subr.mxu0 0.0
      %558 = vmatpush1.msra.mxu0 0.0
      %559 = vmatprep.subr.mxu0 0.0
      %560 = vmatpush1.msra.mxu0 0.0
      %561 = vmatprep.subr.mxu0 0.0
      %562 = vmatpush1.msra.mxu0 0.0
      %563 = vmatprep.subr.mxu0 0.0
      %564 = vmatpush1.msra.mxu0 0.0
      %565 = vmatprep.subr.mxu0 0.0
      %566 = vmatpush1.msra.mxu0 0.0
      %567 = vmatprep.subr.mxu0 0.0
      %568 = vmatpush1.msra.mxu0 0.0
      %569 = vmatprep.subr.mxu0 0.0
      %570 = vmatpush1.msra.mxu0 0.0
      %571 = vmatprep.subr.mxu0 0.0
      %572 = vmatpush1.msra.mxu0 0.0
      %573 = vmatprep.subr.mxu0 0.0
      %574 = vmatpush1.msra.mxu0 0.0
      %575 = vmatprep.subr.mxu0 0.0
      %576 = vmatpush1.msra.mxu0 0.0
      %577 = vmatprep.subr.mxu0 0.0
      %578 = vmatpush1.msra.mxu0 0.0
      %579 = vmatprep.mubr.f32.mxu0 0.0
      %580 = vmatmul.mubr.f32.gmra.mrb[0].mxu0 %v513
      %v581 = vpop.f32.mrb[0].mxu0
      %v582 = vadd.f32 0.0, %v581
      %v583 = vpop.f32.mrb[0].mxu0
      %584 = vdwg.mxu0
      %v585 = vadd.f32 %v463, %v582
      %v586 = vxor.u32 %v585, 2147483648
      %v587 = vmul.f32 %v586, 1.442695
      %v588 = vpow.pop %v587
      %v589 = vadd.f32 %v588, 1.0
      %v590 = vrcp.pop %v589
      %v591 = vmul.f32 1.0, %v590
      %v592 = vtanh.pop %v585
      %v593 = vmul.f32 %v591, 0.0
      %595 = vrot.lane.b32.xlu0 %v592, 64
      %v596 = vpop.permute.xlu0 %595
      %v598 = vmul.f32 %v591, %v596
      %600 = vrot.lane.b32.xlu0 %v598, 32
      %v601 = vpop.permute.xlu0 %600
      %v603 = vadd.f32 %v593, %v601
      %v604 = vtanh.pop %v603
      %606 = vrot.lane.b32.xlu0 %v604, 64
      %v607 = vpop.permute.xlu0 %606
      %v609 = vmul.f32 %v591, %v607
      %610 = vmatprep.subr.mxu0 0.0
      %611 = vmatpush1.msra.mxu0 %v341
      %612 = vmatprep.subr.mxu0 0.0
      %613 = vmatpush1.msra.mxu0 %v342
      %614 = vmatprep.subr.mxu0 0.0
      %615 = vmatpush1.msra.mxu0 %v343
      %616 = vmatprep.subr.mxu0 0.0
      %617 = vmatpush1.msra.mxu0 %v344
      %618 = vmatprep.subr.mxu0 0.0
      %619 = vmatpush1.msra.mxu0 0.0
      %620 = vmatprep.subr.mxu0 0.0
      %621 = vmatpush1.msra.mxu0 0.0
      %622 = vmatprep.subr.mxu0 0.0
      %623 = vmatpush1.msra.mxu0 0.0
      %624 = vmatprep.subr.mxu0 0.0
      %625 = vmatpush1.msra.mxu0 0.0
      %626 = vmatprep.subr.mxu0 0.0
      %627 = vmatpush1.msra.mxu0 0.0
      %628 = vmatprep.subr.mxu0 0.0
      %629 = vmatpush1.msra.mxu0 0.0
      %630 = vmatprep.subr.mxu0 0.0
      %631 = vmatpush1.msra.mxu0 0.0
      %632 = vmatprep.subr.mxu0 0.0
      %633 = vmatpush1.msra.mxu0 0.0
      %634 = vmatprep.subr.mxu0 0.0
      %635 = vmatpush1.msra.mxu0 0.0
      %636 = vmatprep.subr.mxu0 0.0
      %637 = vmatpush1.msra.mxu0 0.0
      %638 = vmatprep.subr.mxu0 0.0
      %639 = vmatpush1.msra.mxu0 0.0
      %640 = vmatprep.subr.mxu0 0.0
      %641 = vmatpush1.msra.mxu0 0.0
      %642 = vmatprep.subr.mxu0 0.0
      %643 = vmatpush1.msra.mxu0 0.0
      %644 = vmatprep.subr.mxu0 0.0
      %645 = vmatpush1.msra.mxu0 0.0
      %646 = vmatprep.subr.mxu0 0.0
      %647 = vmatpush1.msra.mxu0 0.0
      %648 = vmatprep.subr.mxu0 0.0
      %649 = vmatpush1.msra.mxu0 0.0
      %650 = vmatprep.subr.mxu0 0.0
      %651 = vmatpush1.msra.mxu0 0.0
      %652 = vmatprep.subr.mxu0 0.0
      %653 = vmatpush1.msra.mxu0 0.0
      %654 = vmatprep.subr.mxu0 0.0
      %655 = vmatpush1.msra.mxu0 0.0
      %656 = vmatprep.subr.mxu0 0.0
      %657 = vmatpush1.msra.mxu0 0.0
      %658 = vmatprep.subr.mxu0 0.0
      %659 = vmatpush1.msra.mxu0 0.0
      %660 = vmatprep.subr.mxu0 0.0
      %661 = vmatpush1.msra.mxu0 0.0
      %662 = vmatprep.subr.mxu0 0.0
      %663 = vmatpush1.msra.mxu0 0.0
      %664 = vmatprep.subr.mxu0 0.0
      %665 = vmatpush1.msra.mxu0 0.0
      %666 = vmatprep.subr.mxu0 0.0
      %667 = vmatpush1.msra.mxu0 0.0
      %668 = vmatprep.subr.mxu0 0.0
      %669 = vmatpush1.msra.mxu0 0.0
      %670 = vmatprep.subr.mxu0 0.0
      %671 = vmatpush1.msra.mxu0 0.0
      %672 = vmatprep.subr.mxu0 0.0
      %673 = vmatpush1.msra.mxu0 0.0
      %674 = vmatprep.mubr.f32.mxu0 0.0
      %675 = vmatmul.mubr.f32.gmra.mrb[0].mxu0 %v513
      %v676 = vpop.f32.mrb[0].mxu0
      %v677 = vadd.f32 0.0, %v676
      %v678 = vpop.f32.mrb[0].mxu0
      %679 = vdwg.mxu0
      %681 = vrot.lane.b32.xlu0 %v609, 32
      %v682 = vpop.permute.xlu0 %681
      %v683 = vsel %vm511, %v682, 0
      %685 = vmatprep.subr.mxu0 0.0
      %686 = vmatpush1.msra.mxu0 %v337
      %687 = vmatprep.subr.mxu0 0.0
      %688 = vmatpush1.msra.mxu0 %v338
      %689 = vmatprep.subr.mxu0 0.0
      %690 = vmatpush1.msra.mxu0 %v339
      %691 = vmatprep.subr.mxu0 0.0
      %692 = vmatpush1.msra.mxu0 %v340
      %693 = vmatprep.subr.mxu0 0.0
      %694 = vmatpush1.msra.mxu0 0.0
      %695 = vmatprep.subr.mxu0 0.0
      %696 = vmatpush1.msra.mxu0 0.0
      %697 = vmatprep.subr.mxu0 0.0
      %698 = vmatpush1.msra.mxu0 0.0
      %699 = vmatprep.subr.mxu0 0.0
      %700 = vmatpush1.msra.mxu0 0.0
      %701 = vmatprep.subr.mxu0 0.0
      %702 = vmatpush1.msra.mxu0 0.0
      %703 = vmatprep.subr.mxu0 0.0
      %704 = vmatpush1.msra.mxu0 0.0
      %705 = vmatprep.subr.mxu0 0.0
      %706 = vmatpush1.msra.mxu0 0.0
      %707 = vmatprep.subr.mxu0 0.0
      %708 = vmatpush1.msra.mxu0 0.0
      %709 = vmatprep.subr.mxu0 0.0
      %710 = vmatpush1.msra.mxu0 0.0
      %711 = vmatprep.subr.mxu0 0.0
      %712 = vmatpush1.msra.mxu0 0.0
      %713 = vmatprep.subr.mxu0 0.0
      %714 = vmatpush1.msra.mxu0 0.0
      %715 = vmatprep.subr.mxu0 0.0
      %716 = vmatpush1.msra.mxu0 0.0
      %717 = vmatprep.subr.mxu0 0.0
      %718 = vmatpush1.msra.mxu0 0.0
      %719 = vmatprep.subr.mxu0 0.0
      %720 = vmatpush1.msra.mxu0 0.0
      %721 = vmatprep.subr.mxu0 0.0
      %722 = vmatpush1.msra.mxu0 0.0
      %723 = vmatprep.subr.mxu0 0.0
      %724 = vmatpush1.msra.mxu0 0.0
      %725 = vmatprep.subr.mxu0 0.0
      %726 = vmatpush1.msra.mxu0 0.0
      %727 = vmatprep.subr.mxu0 0.0
      %728 = vmatpush1.msra.mxu0 0.0
      %729 = vmatprep.subr.mxu0 0.0
      %730 = vmatpush1.msra.mxu0 0.0
      %731 = vmatprep.subr.mxu0 0.0
      %732 = vmatpush1.msra.mxu0 0.0
      %733 = vmatprep.subr.mxu0 0.0
      %734 = vmatpush1.msra.mxu0 0.0
      %735 = vmatprep.subr.mxu0 0.0
      %736 = vmatpush1.msra.mxu0 0.0
      %737 = vmatprep.subr.mxu0 0.0
      %738 = vmatpush1.msra.mxu0 0.0
      %739 = vmatprep.subr.mxu0 0.0
      %740 = vmatpush1.msra.mxu0 0.0
      %741 = vmatprep.subr.mxu0 0.0
      %742 = vmatpush1.msra.mxu0 0.0
      %743 = vmatprep.subr.mxu0 0.0
      %744 = vmatpush1.msra.mxu0 0.0
      %745 = vmatprep.subr.mxu0 0.0
      %746 = vmatpush1.msra.mxu0 0.0
      %747 = vmatprep.subr.mxu0 0.0
      %748 = vmatpush1.msra.mxu0 0.0
      %749 = vmatprep.mubr.f32.mxu0 0.0
      %750 = vmatmul.mubr.f32.gmra.mrb[0].mxu0 %v683
      %v751 = vpop.f32.mrb[0].mxu0
      %v752 = vadd.f32 %v677, %v751
      %v753 = vpop.f32.mrb[0].mxu0
      %754 = vdwg.mxu0
      %v756 = vlaneseq
      %v757 = vshrl.u32 %v756, 7
      %v758 = vsub.s32 0, %v757
      %v759 = vrot.slane %v345, %v758
      %v761 = vadd.f32 %v752, %v759
      %v762 = vxor.u32 %v761, 2147483648
      %v763 = vmul.f32 %v762, 1.442695
      %v764 = vpow.pop %v763
      %v765 = vadd.f32 %v764, 1.0
      %v766 = vrcp.pop %v765
      %v767 = vmul.f32 1.0, %v766
      %v768 = vtanh.pop %v761
      %v769 = vmul.f32 %v767, 0.0
      %771 = vrot.lane.b32.xlu0 %v768, 64
      %v772 = vpop.permute.xlu0 %771
      %v774 = vmul.f32 %v767, %v772
      %776 = vrot.lane.b32.xlu0 %v774, 32
      %v777 = vpop.permute.xlu0 %776
      %v779 = vadd.f32 %v769, %v777
      %v780 = vtanh.pop %v779
      %782 = vrot.lane.b32.xlu0 %v780, 64
      %v783 = vpop.permute.xlu0 %782
      %v785 = vmul.f32 %v767, %v783
      %786 = vmatprep.subr.mxu0 0.0
      %787 = vmatpush1.msra.mxu0 %v333
      %788 = vmatprep.subr.mxu0 0.0
      %789 = vmatpush1.msra.mxu0 %v334
      %790 = vmatprep.subr.mxu0 0.0
      %791 = vmatpush1.msra.mxu0 %v335
      %792 = vmatprep.subr.mxu0 0.0
      %793 = vmatpush1.msra.mxu0 %v336
      %794 = vmatprep.subr.mxu0 0.0
      %795 = vmatpush1.msra.mxu0 0.0
      %796 = vmatprep.subr.mxu0 0.0
      %797 = vmatpush1.msra.mxu0 0.0
      %798 = vmatprep.subr.mxu0 0.0
      %799 = vmatpush1.msra.mxu0 0.0
      %800 = vmatprep.subr.mxu0 0.0
      %801 = vmatpush1.msra.mxu0 0.0
      %802 = vmatprep.subr.mxu0 0.0
      %803 = vmatpush1.msra.mxu0 0.0
      %804 = vmatprep.subr.mxu0 0.0
      %805 = vmatpush1.msra.mxu0 0.0
      %806 = vmatprep.subr.mxu0 0.0
      %807 = vmatpush1.msra.mxu0 0.0
      %808 = vmatprep.subr.mxu0 0.0
      %809 = vmatpush1.msra.mxu0 0.0
      %810 = vmatprep.subr.mxu0 0.0
      %811 = vmatpush1.msra.mxu0 0.0
      %812 = vmatprep.subr.mxu0 0.0
      %813 = vmatpush1.msra.mxu0 0.0
      %814 = vmatprep.subr.mxu0 0.0
      %815 = vmatpush1.msra.mxu0 0.0
      %816 = vmatprep.subr.mxu0 0.0
      %817 = vmatpush1.msra.mxu0 0.0
      %818 = vmatprep.subr.mxu0 0.0
      %819 = vmatpush1.msra.mxu0 0.0
      %820 = vmatprep.subr.mxu0 0.0
      %821 = vmatpush1.msra.mxu0 0.0
      %822 = vmatprep.subr.mxu0 0.0
      %823 = vmatpush1.msra.mxu0 0.0
      %824 = vmatprep.subr.mxu0 0.0
      %825 = vmatpush1.msra.mxu0 0.0
      %826 = vmatprep.subr.mxu0 0.0
      %827 = vmatpush1.msra.mxu0 0.0
      %828 = vmatprep.subr.mxu0 0.0
      %829 = vmatpush1.msra.mxu0 0.0
      %830 = vmatprep.subr.mxu0 0.0
      %831 = vmatpush1.msra.mxu0 0.0
      %832 = vmatprep.subr.mxu0 0.0
      %833 = vmatpush1.msra.mxu0 0.0
      %834 = vmatprep.subr.mxu0 0.0
      %835 = vmatpush1.msra.mxu0 0.0
      %836 = vmatprep.subr.mxu0 0.0
      %837 = vmatpush1.msra.mxu0 0.0
      %838 = vmatprep.subr.mxu0 0.0
      %839 = vmatpush1.msra.mxu0 0.0
      %840 = vmatprep.subr.mxu0 0.0
      %841 = vmatpush1.msra.mxu0 0.0
      %842 = vmatprep.subr.mxu0 0.0
      %843 = vmatpush1.msra.mxu0 0.0
      %844 = vmatprep.subr.mxu0 0.0
      %845 = vmatpush1.msra.mxu0 0.0
      %846 = vmatprep.subr.mxu0 0.0
      %847 = vmatpush1.msra.mxu0 0.0
      %848 = vmatprep.subr.mxu0 0.0
      %849 = vmatpush1.msra.mxu0 0.0
      %850 = vmatprep.mubr.f32.mxu0 0.0
      %851 = vmatmul.mubr.f32.gmra.mrb[0].mxu0 %v683
      %v852 = vpop.f32.mrb[0].mxu0
      %v853 = vadd.f32 0.0, %v852
      %v854 = vpop.f32.mrb[0].mxu0
      %855 = vdwg.mxu0
      %v856 = vadd.f32 %v468, %v853
      %v857 = vxor.u32 %v856, 2147483648
      %v858 = vmul.f32 %v857, 1.442695
      %v859 = vpow.pop %v858
      %v860 = vadd.f32 %v859, 1.0
      %v861 = vrcp.pop %v860
      %v862 = vmul.f32 1.0, %v861
      %v863 = vtanh.pop %v856
      %v864 = vmul.f32 %v862, %v603
      %866 = vrot.lane.b32.xlu0 %v863, 64
      %v867 = vpop.permute.xlu0 %866
      %v869 = vmul.f32 %v862, %v867
      %871 = vrot.lane.b32.xlu0 %v869, 32
      %v872 = vpop.permute.xlu0 %871
      %v874 = vadd.f32 %v864, %v872
      %v875 = vtanh.pop %v874
      %877 = vrot.lane.b32.xlu0 %v875, 64
      %v878 = vpop.permute.xlu0 %877
      %v880 = vmul.f32 %v862, %v878
      %882 = vrot.lane.b32.xlu0 %v785, 32
      %v883 = vpop.permute.xlu0 %882
      %v884 = vsel %vm511, %v883, 0
      %886 = vmatprep.subr.mxu0 0.0
      %887 = vmatpush1.msra.mxu0 %v341
      %888 = vmatprep.subr.mxu0 0.0
      %889 = vmatpush1.msra.mxu0 %v342
      %890 = vmatprep.subr.mxu0 0.0
      %891 = vmatpush1.msra.mxu0 %v343
      %892 = vmatprep.subr.mxu0 0.0
      %893 = vmatpush1.msra.mxu0 %v344
      %894 = vmatprep.subr.mxu0 0.0
      %895 = vmatpush1.msra.mxu0 0.0
      %896 = vmatprep.subr.mxu0 0.0
      %897 = vmatpush1.msra.mxu0 0.0
      %898 = vmatprep.subr.mxu0 0.0
      %899 = vmatpush1.msra.mxu0 0.0
      %900 = vmatprep.subr.mxu0 0.0
      %901 = vmatpush1.msra.mxu0 0.0
      %902 = vmatprep.subr.mxu0 0.0
      %903 = vmatpush1.msra.mxu0 0.0
      %904 = vmatprep.subr.mxu0 0.0
      %905 = vmatpush1.msra.mxu0 0.0
      %906 = vmatprep.subr.mxu0 0.0
      %907 = vmatpush1.msra.mxu0 0.0
      %908 = vmatprep.subr.mxu0 0.0
      %909 = vmatpush1.msra.mxu0 0.0
      %910 = vmatprep.subr.mxu0 0.0
      %911 = vmatpush1.msra.mxu0 0.0
      %912 = vmatprep.subr.mxu0 0.0
      %913 = vmatpush1.msra.mxu0 0.0
      %914 = vmatprep.subr.mxu0 0.0
      %915 = vmatpush1.msra.mxu0 0.0
      %916 = vmatprep.subr.mxu0 0.0
      %917 = vmatpush1.msra.mxu0 0.0
      %918 = vmatprep.subr.mxu0 0.0
      %919 = vmatpush1.msra.mxu0 0.0
      %920 = vmatprep.subr.mxu0 0.0
      %921 = vmatpush1.msra.mxu0 0.0
      %922 = vmatprep.subr.mxu0 0.0
      %923 = vmatpush1.msra.mxu0 0.0
      %924 = vmatprep.subr.mxu0 0.0
      %925 = vmatpush1.msra.mxu0 0.0
      %926 = vmatprep.subr.mxu0 0.0
      %927 = vmatpush1.msra.mxu0 0.0
      %928 = vmatprep.subr.mxu0 0.0
      %929 = vmatpush1.msra.mxu0 0.0
      %930 = vmatprep.subr.mxu0 0.0
      %931 = vmatpush1.msra.mxu0 0.0
      %932 = vmatprep.subr.mxu0 0.0
      %933 = vmatpush1.msra.mxu0 0.0
      %934 = vmatprep.subr.mxu0 0.0
      %935 = vmatpush1.msra.mxu0 0.0
      %936 = vmatprep.subr.mxu0 0.0
      %937 = vmatpush1.msra.mxu0 0.0
      %938 = vmatprep.subr.mxu0 0.0
      %939 = vmatpush1.msra.mxu0 0.0
      %940 = vmatprep.subr.mxu0 0.0
      %941 = vmatpush1.msra.mxu0 0.0
      %942 = vmatprep.subr.mxu0 0.0
      %943 = vmatpush1.msra.mxu0 0.0
      %944 = vmatprep.subr.mxu0 0.0
      %945 = vmatpush1.msra.mxu0 0.0
      %946 = vmatprep.subr.mxu0 0.0
      %947 = vmatpush1.msra.mxu0 0.0
      %948 = vmatprep.subr.mxu0 0.0
      %949 = vmatpush1.msra.mxu0 0.0
      %950 = vmatprep.mubr.f32.mxu0 0.0
      %951 = vmatmul.mubr.f32.gmra.mrb[0].mxu0 %v884
      %v952 = vpop.f32.mrb[0].mxu0
      %v953 = vadd.f32 0.0, %v952
      %v954 = vpop.f32.mrb[0].mxu0
      %955 = vdwg.mxu0
      %957 = vrot.lane.b32.xlu0 %v880, 32
      %v958 = vpop.permute.xlu0 %957
      %v959 = vsel %vm511, %v958, 0
      %961 = vmatprep.subr.mxu0 0.0
      %962 = vmatpush1.msra.mxu0 %v337
      %963 = vmatprep.subr.mxu0 0.0
      %964 = vmatpush1.msra.mxu0 %v338
      %965 = vmatprep.subr.mxu0 0.0
      %966 = vmatpush1.msra.mxu0 %v339
      %967 = vmatprep.subr.mxu0 0.0
      %968 = vmatpush1.msra.mxu0 %v340
      %969 = vmatprep.subr.mxu0 0.0
      %970 = vmatpush1.msra.mxu0 0.0
      %971 = vmatprep.subr.mxu0 0.0
      %972 = vmatpush1.msra.mxu0 0.0
      %973 = vmatprep.subr.mxu0 0.0
      %974 = vmatpush1.msra.mxu0 0.0
      %975 = vmatprep.subr.mxu0 0.0
      %976 = vmatpush1.msra.mxu0 0.0
      %977 = vmatprep.subr.mxu0 0.0
      %978 = vmatpush1.msra.mxu0 0.0
      %979 = vmatprep.subr.mxu0 0.0
      %980 = vmatpush1.msra.mxu0 0.0
      %981 = vmatprep.subr.mxu0 0.0
      %982 = vmatpush1.msra.mxu0 0.0
      %983 = vmatprep.subr.mxu0 0.0
      %984 = vmatpush1.msra.mxu0 0.0
      %985 = vmatprep.subr.mxu0 0.0
      %986 = vmatpush1.msra.mxu0 0.0
      %987 = vmatprep.subr.mxu0 0.0
      %988 = vmatpush1.msra.mxu0 0.0
      %989 = vmatprep.subr.mxu0 0.0
      %990 = vmatpush1.msra.mxu0 0.0
      %991 = vmatprep.subr.mxu0 0.0
      %992 = vmatpush1.msra.mxu0 0.0
      %993 = vmatprep.subr.mxu0 0.0
      %994 = vmatpush1.msra.mxu0 0.0
      %995 = vmatprep.subr.mxu0 0.0
      %996 = vmatpush1.msra.mxu0 0.0
      %997 = vmatprep.subr.mxu0 0.0
      %998 = vmatpush1.msra.mxu0 0.0
      %999 = vmatprep.subr.mxu0 0.0
      %1000 = vmatpush1.msra.mxu0 0.0
      %1001 = vmatprep.subr.mxu0 0.0
      %1002 = vmatpush1.msra.mxu0 0.0
      %1003 = vmatprep.subr.mxu0 0.0
      %1004 = vmatpush1.msra.mxu0 0.0
      %1005 = vmatprep.subr.mxu0 0.0
      %1006 = vmatpush1.msra.mxu0 0.0
      %1007 = vmatprep.subr.mxu0 0.0
      %1008 = vmatpush1.msra.mxu0 0.0
      %1009 = vmatprep.subr.mxu0 0.0
      %1010 = vmatpush1.msra.mxu0 0.0
      %1011 = vmatprep.subr.mxu0 0.0
      %1012 = vmatpush1.msra.mxu0 0.0
      %1013 = vmatprep.subr.mxu0 0.0
      %1014 = vmatpush1.msra.mxu0 0.0
      %1015 = vmatprep.subr.mxu0 0.0
      %1016 = vmatpush1.msra.mxu0 0.0
      %1017 = vmatprep.subr.mxu0 0.0
      %1018 = vmatpush1.msra.mxu0 0.0
      %1019 = vmatprep.subr.mxu0 0.0
      %1020 = vmatpush1.msra.mxu0 0.0
      %1021 = vmatprep.subr.mxu0 0.0
      %1022 = vmatpush1.msra.mxu0 0.0
      %1023 = vmatprep.subr.mxu0 0.0
      %1024 = vmatpush1.msra.mxu0 0.0
      %1025 = vmatprep.mubr.f32.mxu0 0.0
      %1026 = vmatmul.mubr.f32.gmra.mrb[0].mxu0 %v959
      %v1027 = vpop.f32.mrb[0].mxu0
      %v1028 = vadd.f32 %v953, %v1027
      %v1029 = vpop.f32.mrb[0].mxu0
      %1030 = vdwg.mxu0
      %v1031 = vadd.f32 %v1028, %v759
      %v1032 = vxor.u32 %v1031, 2147483648
      %v1033 = vmul.f32 %v1032, 1.442695
      %v1034 = vpow.pop %v1033
      %v1035 = vadd.f32 %v1034, 1.0
      %v1036 = vrcp.pop %v1035
      %v1037 = vmul.f32 1.0, %v1036
      %v1038 = vtanh.pop %v1031
      %v1039 = vmul.f32 %v1037, %v779
      %1041 = vrot.lane.b32.xlu0 %v1038, 64
      %v1042 = vpop.permute.xlu0 %1041
      %v1044 = vmul.f32 %v1037, %v1042
      %1046 = vrot.lane.b32.xlu0 %v1044, 32
      %v1047 = vpop.permute.xlu0 %1046
      %v1049 = vadd.f32 %v1039, %v1047
      %v1050 = vtanh.pop %v1049
      %1052 = vrot.lane.b32.xlu0 %v1050, 64
      %v1053 = vpop.permute.xlu0 %1052
      %v1055 = vmul.f32 %v1037, %v1053
      %1056 = vmatprep.subr.mxu0 0.0
      %1057 = vmatpush1.msra.mxu0 %v333
      %1058 = vmatprep.subr.mxu0 0.0
      %1059 = vmatpush1.msra.mxu0 %v334
      %1060 = vmatprep.subr.mxu0 0.0
      %1061 = vmatpush1.msra.mxu0 %v335
      %1062 = vmatprep.subr.mxu0 0.0
      %1063 = vmatpush1.msra.mxu0 %v336
      %1064 = vmatprep.subr.mxu0 0.0
      %1065 = vmatpush1.msra.mxu0 0.0
      %1066 = vmatprep.subr.mxu0 0.0
      %1067 = vmatpush1.msra.mxu0 0.0
      %1068 = vmatprep.subr.mxu0 0.0
      %1069 = vmatpush1.msra.mxu0 0.0
      %1070 = vmatprep.subr.mxu0 0.0
      %1071 = vmatpush1.msra.mxu0 0.0
      %1072 = vmatprep.subr.mxu0 0.0
      %1073 = vmatpush1.msra.mxu0 0.0
      %1074 = vmatprep.subr.mxu0 0.0
      %1075 = vmatpush1.msra.mxu0 0.0
      %1076 = vmatprep.subr.mxu0 0.0
      %1077 = vmatpush1.msra.mxu0 0.0
      %1078 = vmatprep.subr.mxu0 0.0
      %1079 = vmatpush1.msra.mxu0 0.0
      %1080 = vmatprep.subr.mxu0 0.0
      %1081 = vmatpush1.msra.mxu0 0.0
      %1082 = vmatprep.subr.mxu0 0.0
      %1083 = vmatpush1.msra.mxu0 0.0
      %1084 = vmatprep.subr.mxu0 0.0
      %1085 = vmatpush1.msra.mxu0 0.0
      %1086 = vmatprep.subr.mxu0 0.0
      %1087 = vmatpush1.msra.mxu0 0.0
      %1088 = vmatprep.subr.mxu0 0.0
      %1089 = vmatpush1.msra.mxu0 0.0
      %1090 = vmatprep.subr.mxu0 0.0
      %1091 = vmatpush1.msra.mxu0 0.0
      %1092 = vmatprep.subr.mxu0 0.0
      %1093 = vmatpush1.msra.mxu0 0.0
      %1094 = vmatprep.subr.mxu0 0.0
      %1095 = vmatpush1.msra.mxu0 0.0
      %1096 = vmatprep.subr.mxu0 0.0
      %1097 = vmatpush1.msra.mxu0 0.0
      %1098 = vmatprep.subr.mxu0 0.0
      %1099 = vmatpush1.msra.mxu0 0.0
      %1100 = vmatprep.subr.mxu0 0.0
      %1101 = vmatpush1.msra.mxu0 0.0
      %1102 = vmatprep.subr.mxu0 0.0
      %1103 = vmatpush1.msra.mxu0 0.0
      %1104 = vmatprep.subr.mxu0 0.0
      %1105 = vmatpush1.msra.mxu0 0.0
      %1106 = vmatprep.subr.mxu0 0.0
      %1107 = vmatpush1.msra.mxu0 0.0
      %1108 = vmatprep.subr.mxu0 0.0
      %1109 = vmatpush1.msra.mxu0 0.0
      %1110 = vmatprep.subr.mxu0 0.0
      %1111 = vmatpush1.msra.mxu0 0.0
      %1112 = vmatprep.subr.mxu0 0.0
      %1113 = vmatpush1.msra.mxu0 0.0
      %1114 = vmatprep.subr.mxu0 0.0
      %1115 = vmatpush1.msra.mxu0 0.0
      %1116 = vmatprep.subr.mxu0 0.0
      %1117 = vmatpush1.msra.mxu0 0.0
      %1118 = vmatprep.subr.mxu0 0.0
      %1119 = vmatpush1.msra.mxu0 0.0
      %1120 = vmatprep.mubr.f32.mxu0 0.0
      %1121 = vmatmul.mubr.f32.gmra.mrb[0].mxu0 %v959
      %v1122 = vpop.f32.mrb[0].mxu0
      %v1123 = vadd.f32 0.0, %v1122
      %v1124 = vpop.f32.mrb[0].mxu0
      %1125 = vdwg.mxu0
      %v1126 = vadd.f32 %v473, %v1123
      %v1127 = vxor.u32 %v1126, 2147483648
      %v1128 = vmul.f32 %v1127, 1.442695
      %v1129 = vpow.pop %v1128
      %v1130 = vadd.f32 %v1129, 1.0
      %v1131 = vrcp.pop %v1130
      %v1132 = vmul.f32 1.0, %v1131
      %v1133 = vtanh.pop %v1126
      %v1134 = vmul.f32 %v1132, %v874
      %1136 = vrot.lane.b32.xlu0 %v1133, 64
      %v1137 = vpop.permute.xlu0 %1136
      %v1139 = vmul.f32 %v1132, %v1137
      %1141 = vrot.lane.b32.xlu0 %v1139, 32
      %v1142 = vpop.permute.xlu0 %1141
      %v1144 = vadd.f32 %v1134, %v1142
      %v1145 = vtanh.pop %v1144
      %1147 = vrot.lane.b32.xlu0 %v1145, 64
      %v1148 = vpop.permute.xlu0 %1147
      %v1150 = vmul.f32 %v1132, %v1148
      %1152 = vrot.lane.b32.xlu0 %v1055, 32
      %v1153 = vpop.permute.xlu0 %1152
      %v1154 = vsel %vm511, %v1153, 0
      %1156 = vmatprep.subr.mxu0 0.0
      %1157 = vmatpush1.msra.mxu0 %v341
      %1158 = vmatprep.subr.mxu0 0.0
      %1159 = vmatpush1.msra.mxu0 %v342
      %1160 = vmatprep.subr.mxu0 0.0
      %1161 = vmatpush1.msra.mxu0 %v343
      %1162 = vmatprep.subr.mxu0 0.0
      %1163 = vmatpush1.msra.mxu0 %v344
      %1164 = vmatprep.subr.mxu0 0.0
      %1165 = vmatpush1.msra.mxu0 0.0
      %1166 = vmatprep.subr.mxu0 0.0
      %1167 = vmatpush1.msra.mxu0 0.0
      %1168 = vmatprep.subr.mxu0 0.0
      %1169 = vmatpush1.msra.mxu0 0.0
      %1170 = vmatprep.subr.mxu0 0.0
      %1171 = vmatpush1.msra.mxu0 0.0
      %1172 = vmatprep.subr.mxu0 0.0
      %1173 = vmatpush1.msra.mxu0 0.0
      %1174 = vmatprep.subr.mxu0 0.0
      %1175 = vmatpush1.msra.mxu0 0.0
      %1176 = vmatprep.subr.mxu0 0.0
      %1177 = vmatpush1.msra.mxu0 0.0
      %1178 = vmatprep.subr.mxu0 0.0
      %1179 = vmatpush1.msra.mxu0 0.0
      %1180 = vmatprep.subr.mxu0 0.0
      %1181 = vmatpush1.msra.mxu0 0.0
      %1182 = vmatprep.subr.mxu0 0.0
      %1183 = vmatpush1.msra.mxu0 0.0
      %1184 = vmatprep.subr.mxu0 0.0
      %1185 = vmatpush1.msra.mxu0 0.0
      %1186 = vmatprep.subr.mxu0 0.0
      %1187 = vmatpush1.msra.mxu0 0.0
      %1188 = vmatprep.subr.mxu0 0.0
      %1189 = vmatpush1.msra.mxu0 0.0
      %1190 = vmatprep.subr.mxu0 0.0
      %1191 = vmatpush1.msra.mxu0 0.0
      %1192 = vmatprep.subr.mxu0 0.0
      %1193 = vmatpush1.msra.mxu0 0.0
      %1194 = vmatprep.subr.mxu0 0.0
      %1195 = vmatpush1.msra.mxu0 0.0
      %1196 = vmatprep.subr.mxu0 0.0
      %1197 = vmatpush1.msra.mxu0 0.0
      %1198 = vmatprep.subr.mxu0 0.0
      %1199 = vmatpush1.msra.mxu0 0.0
      %1200 = vmatprep.subr.mxu0 0.0
      %1201 = vmatpush1.msra.mxu0 0.0
      %1202 = vmatprep.subr.mxu0 0.0
      %1203 = vmatpush1.msra.mxu0 0.0
      %1204 = vmatprep.subr.mxu0 0.0
      %1205 = vmatpush1.msra.mxu0 0.0
      %1206 = vmatprep.subr.mxu0 0.0
      %1207 = vmatpush1.msra.mxu0 0.0
      %1208 = vmatprep.subr.mxu0 0.0
      %1209 = vmatpush1.msra.mxu0 0.0
      %1210 = vmatprep.subr.mxu0 0.0
      %1211 = vmatpush1.msra.mxu0 0.0
      %1212 = vmatprep.subr.mxu0 0.0
      %1213 = vmatpush1.msra.mxu0 0.0
      %1214 = vmatprep.subr.mxu0 0.0
      %1215 = vmatpush1.msra.mxu0 0.0
      %1216 = vmatprep.subr.mxu0 0.0
      %1217 = vmatpush1.msra.mxu0 0.0
      %1218 = vmatprep.subr.mxu0 0.0
      %1219 = vmatpush1.msra.mxu0 0.0
      %1220 = vmatprep.mubr.f32.mxu0 0.0
      %1221 = vmatmul.mubr.f32.gmra.mrb[0].mxu0 %v1154
      %v1222 = vpop.f32.mrb[0].mxu0
      %v1223 = vadd.f32 0.0, %v1222
      %v1224 = vpop.f32.mrb[0].mxu0
      %1225 = vdwg.mxu0
      %1227 = vrot.lane.b32.xlu0 %v1150, 32
      %v1228 = vpop.permute.xlu0 %1227
      %v1229 = vsel %vm511, %v1228, 0
      %1231 = vmatprep.subr.mxu0 0.0
      %1232 = vmatpush1.msra.mxu0 %v337
      %1233 = vmatprep.subr.mxu0 0.0
      %1234 = vmatpush1.msra.mxu0 %v338
      %1235 = vmatprep.subr.mxu0 0.0
      %1236 = vmatpush1.msra.mxu0 %v339
      %1237 = vmatprep.subr.mxu0 0.0
      %1238 = vmatpush1.msra.mxu0 %v340
      %1239 = vmatprep.subr.mxu0 0.0
      %1240 = vmatpush1.msra.mxu0 0.0
      %1241 = vmatprep.subr.mxu0 0.0
      %1242 = vmatpush1.msra.mxu0 0.0
      %1243 = vmatprep.subr.mxu0 0.0
      %1244 = vmatpush1.msra.mxu0 0.0
      %1245 = vmatprep.subr.mxu0 0.0
      %1246 = vmatpush1.msra.mxu0 0.0
      %1247 = vmatprep.subr.mxu0 0.0
      %1248 = vmatpush1.msra.mxu0 0.0
      %1249 = vmatprep.subr.mxu0 0.0
      %1250 = vmatpush1.msra.mxu0 0.0
      %1251 = vmatprep.subr.mxu0 0.0
      %1252 = vmatpush1.msra.mxu0 0.0
      %1253 = vmatprep.subr.mxu0 0.0
      %1254 = vmatpush1.msra.mxu0 0.0
      %1255 = vmatprep.subr.mxu0 0.0
      %1256 = vmatpush1.msra.mxu0 0.0
      %1257 = vmatprep.subr.mxu0 0.0
      %1258 = vmatpush1.msra.mxu0 0.0
      %1259 = vmatprep.subr.mxu0 0.0
      %1260 = vmatpush1.msra.mxu0 0.0
      %1261 = vmatprep.subr.mxu0 0.0
      %1262 = vmatpush1.msra.mxu0 0.0
      %1263 = vmatprep.subr.mxu0 0.0
      %1264 = vmatpush1.msra.mxu0 0.0
      %1265 = vmatprep.subr.mxu0 0.0
      %1266 = vmatpush1.msra.mxu0 0.0
      %1267 = vmatprep.subr.mxu0 0.0
      %1268 = vmatpush1.msra.mxu0 0.0
      %1269 = vmatprep.subr.mxu0 0.0
      %1270 = vmatpush1.msra.mxu0 0.0
      %1271 = vmatprep.subr.mxu0 0.0
      %1272 = vmatpush1.msra.mxu0 0.0
      %1273 = vmatprep.subr.mxu0 0.0
      %1274 = vmatpush1.msra.mxu0 0.0
      %1275 = vmatprep.subr.mxu0 0.0
      %1276 = vmatpush1.msra.mxu0 0.0
      %1277 = vmatprep.subr.mxu0 0.0
      %1278 = vmatpush1.msra.mxu0 0.0
      %1279 = vmatprep.subr.mxu0 0.0
      %1280 = vmatpush1.msra.mxu0 0.0
      %1281 = vmatprep.subr.mxu0 0.0
      %1282 = vmatpush1.msra.mxu0 0.0
      %1283 = vmatprep.subr.mxu0 0.0
      %1284 = vmatpush1.msra.mxu0 0.0
      %1285 = vmatprep.subr.mxu0 0.0
      %1286 = vmatpush1.msra.mxu0 0.0
      %1287 = vmatprep.subr.mxu0 0.0
      %1288 = vmatpush1.msra.mxu0 0.0
      %1289 = vmatprep.subr.mxu0 0.0
      %1290 = vmatpush1.msra.mxu0 0.0
      %1291 = vmatprep.subr.mxu0 0.0
      %1292 = vmatpush1.msra.mxu0 0.0
      %1293 = vmatprep.subr.mxu0 0.0
      %1294 = vmatpush1.msra.mxu0 0.0
      %1295 = vmatprep.mubr.f32.mxu0 0.0
      %1296 = vmatmul.mubr.f32.gmra.mrb[0].mxu0 %v1229
      %v1297 = vpop.f32.mrb[0].mxu0
      %v1298 = vadd.f32 %v1223, %v1297
      %v1299 = vpop.f32.mrb[0].mxu0
      %1300 = vdwg.mxu0
      %v1301 = vadd.f32 %v1298, %v759
      %v1302 = vxor.u32 %v1301, 2147483648
      %v1303 = vmul.f32 %v1302, 1.442695
      %v1304 = vpow.pop %v1303
      %v1305 = vadd.f32 %v1304, 1.0
      %v1306 = vrcp.pop %v1305
      %v1307 = vmul.f32 1.0, %v1306
      %v1308 = vtanh.pop %v1301
      %v1309 = vmul.f32 %v1307, %v1049
      %1311 = vrot.lane.b32.xlu0 %v1308, 64
      %v1312 = vpop.permute.xlu0 %1311
      %v1314 = vmul.f32 %v1307, %v1312
      %1316 = vrot.lane.b32.xlu0 %v1314, 32
      %v1317 = vpop.permute.xlu0 %1316
      %v1319 = vadd.f32 %v1309, %v1317
      %v1320 = vtanh.pop %v1319
      %1322 = vrot.lane.b32.xlu0 %v1320, 64
      %v1323 = vpop.permute.xlu0 %1322
      %v1325 = vmul.f32 %v1307, %v1323
      %1326 = vmatprep.subr.mxu0 0.0
      %1327 = vmatpush1.msra.mxu0 %v333
      %1328 = vmatprep.subr.mxu0 0.0
      %1329 = vmatpush1.msra.mxu0 %v334
      %1330 = vmatprep.subr.mxu0 0.0
      %1331 = vmatpush1.msra.mxu0 %v335
      %1332 = vmatprep.subr.mxu0 0.0
      %1333 = vmatpush1.msra.mxu0 %v336
      %1334 = vmatprep.subr.mxu0 0.0
      %1335 = vmatpush1.msra.mxu0 0.0
      %1336 = vmatprep.subr.mxu0 0.0
      %1337 = vmatpush1.msra.mxu0 0.0
      %1338 = vmatprep.subr.mxu0 0.0
      %1339 = vmatpush1.msra.mxu0 0.0
      %1340 = vmatprep.subr.mxu0 0.0
      %1341 = vmatpush1.msra.mxu0 0.0
      %1342 = vmatprep.subr.mxu0 0.0
      %1343 = vmatpush1.msra.mxu0 0.0
      %1344 = vmatprep.subr.mxu0 0.0
      %1345 = vmatpush1.msra.mxu0 0.0
      %1346 = vmatprep.subr.mxu0 0.0
      %1347 = vmatpush1.msra.mxu0 0.0
      %1348 = vmatprep.subr.mxu0 0.0
      %1349 = vmatpush1.msra.mxu0 0.0
      %1350 = vmatprep.subr.mxu0 0.0
      %1351 = vmatpush1.msra.mxu0 0.0
      %1352 = vmatprep.subr.mxu0 0.0
      %1353 = vmatpush1.msra.mxu0 0.0
      %1354 = vmatprep.subr.mxu0 0.0
      %1355 = vmatpush1.msra.mxu0 0.0
      %1356 = vmatprep.subr.mxu0 0.0
      %1357 = vmatpush1.msra.mxu0 0.0
      %1358 = vmatprep.subr.mxu0 0.0
      %1359 = vmatpush1.msra.mxu0 0.0
      %1360 = vmatprep.subr.mxu0 0.0
      %1361 = vmatpush1.msra.mxu0 0.0
      %1362 = vmatprep.subr.mxu0 0.0
      %1363 = vmatpush1.msra.mxu0 0.0
      %1364 = vmatprep.subr.mxu0 0.0
      %1365 = vmatpush1.msra.mxu0 0.0
      %1366 = vmatprep.subr.mxu0 0.0
      %1367 = vmatpush1.msra.mxu0 0.0
      %1368 = vmatprep.subr.mxu0 0.0
      %1369 = vmatpush1.msra.mxu0 0.0
      %1370 = vmatprep.subr.mxu0 0.0
      %1371 = vmatpush1.msra.mxu0 0.0
      %1372 = vmatprep.subr.mxu0 0.0
      %1373 = vmatpush1.msra.mxu0 0.0
      %1374 = vmatprep.subr.mxu0 0.0
      %1375 = vmatpush1.msra.mxu0 0.0
      %1376 = vmatprep.subr.mxu0 0.0
      %1377 = vmatpush1.msra.mxu0 0.0
      %1378 = vmatprep.subr.mxu0 0.0
      %1379 = vmatpush1.msra.mxu0 0.0
      %1380 = vmatprep.subr.mxu0 0.0
      %1381 = vmatpush1.msra.mxu0 0.0
      %1382 = vmatprep.subr.mxu0 0.0
      %1383 = vmatpush1.msra.mxu0 0.0
      %1384 = vmatprep.subr.mxu0 0.0
      %1385 = vmatpush1.msra.mxu0 0.0
      %1386 = vmatprep.subr.mxu0 0.0
      %1387 = vmatpush1.msra.mxu0 0.0
      %1388 = vmatprep.subr.mxu0 0.0
      %1389 = vmatpush1.msra.mxu0 0.0
      %1390 = vmatprep.mubr.f32.mxu0 0.0
      %1391 = vmatmul.mubr.f32.gmra.mrb[0].mxu0 %v1229
      %v1392 = vpop.f32.mrb[0].mxu0
      %v1393 = vadd.f32 0.0, %v1392
      %v1394 = vpop.f32.mrb[0].mxu0
      %1395 = vdwg.mxu0
      %v1396 = vadd.f32 %v478, %v1393
      %v1397 = vxor.u32 %v1396, 2147483648
      %v1398 = vmul.f32 %v1397, 1.442695
      %v1399 = vpow.pop %v1398
      %v1400 = vadd.f32 %v1399, 1.0
      %v1401 = vrcp.pop %v1400
      %v1402 = vmul.f32 1.0, %v1401
      %v1403 = vtanh.pop %v1396
      %v1404 = vmul.f32 %v1402, %v1144
      %1406 = vrot.lane.b32.xlu0 %v1403, 64
      %v1407 = vpop.permute.xlu0 %1406
      %v1409 = vmul.f32 %v1402, %v1407
      %1411 = vrot.lane.b32.xlu0 %v1409, 32
      %v1412 = vpop.permute.xlu0 %1411
      %v1414 = vadd.f32 %v1404, %v1412
      %v1415 = vtanh.pop %v1414
      %1417 = vrot.lane.b32.xlu0 %v1415, 64
      %v1418 = vpop.permute.xlu0 %1417
      %v1420 = vmul.f32 %v1402, %v1418
      %1422 = vrot.lane.b32.xlu0 %v1325, 32
      %v1423 = vpop.permute.xlu0 %1422
      %v1424 = vsel %vm511, %v1423, 0
      %1426 = vmatprep.subr.mxu0 0.0
      %1427 = vmatpush1.msra.mxu0 %v341
      %1428 = vmatprep.subr.mxu0 0.0
      %1429 = vmatpush1.msra.mxu0 %v342
      %1430 = vmatprep.subr.mxu0 0.0
      %1431 = vmatpush1.msra.mxu0 %v343
      %1432 = vmatprep.subr.mxu0 0.0
      %1433 = vmatpush1.msra.mxu0 %v344
      %1434 = vmatprep.subr.mxu0 0.0
      %1435 = vmatpush1.msra.mxu0 0.0
      %1436 = vmatprep.subr.mxu0 0.0
      %1437 = vmatpush1.msra.mxu0 0.0
      %1438 = vmatprep.subr.mxu0 0.0
      %1439 = vmatpush1.msra.mxu0 0.0
      %1440 = vmatprep.subr.mxu0 0.0
      %1441 = vmatpush1.msra.mxu0 0.0
      %1442 = vmatprep.subr.mxu0 0.0
      %1443 = vmatpush1.msra.mxu0 0.0
      %1444 = vmatprep.subr.mxu0 0.0
      %1445 = vmatpush1.msra.mxu0 0.0
      %1446 = vmatprep.subr.mxu0 0.0
      %1447 = vmatpush1.msra.mxu0 0.0
      %1448 = vmatprep.subr.mxu0 0.0
      %1449 = vmatpush1.msra.mxu0 0.0
      %1450 = vmatprep.subr.mxu0 0.0
      %1451 = vmatpush1.msra.mxu0 0.0
      %1452 = vmatprep.subr.mxu0 0.0
      %1453 = vmatpush1.msra.mxu0 0.0
      %1454 = vmatprep.subr.mxu0 0.0
      %1455 = vmatpush1.msra.mxu0 0.0
      %1456 = vmatprep.subr.mxu0 0.0
      %1457 = vmatpush1.msra.mxu0 0.0
      %1458 = vmatprep.subr.mxu0 0.0
      %1459 = vmatpush1.msra.mxu0 0.0
      %1460 = vmatprep.subr.mxu0 0.0
      %1461 = vmatpush1.msra.mxu0 0.0
      %1462 = vmatprep.subr.mxu0 0.0
      %1463 = vmatpush1.msra.mxu0 0.0
      %1464 = vmatprep.subr.mxu0 0.0
      %1465 = vmatpush1.msra.mxu0 0.0
      %1466 = vmatprep.subr.mxu0 0.0
      %1467 = vmatpush1.msra.mxu0 0.0
      %1468 = vmatprep.subr.mxu0 0.0
      %1469 = vmatpush1.msra.mxu0 0.0
      %1470 = vmatprep.subr.mxu0 0.0
      %1471 = vmatpush1.msra.mxu0 0.0
      %1472 = vmatprep.subr.mxu0 0.0
      %1473 = vmatpush1.msra.mxu0 0.0
      %1474 = vmatprep.subr.mxu0 0.0
      %1475 = vmatpush1.msra.mxu0 0.0
      %1476 = vmatprep.subr.mxu0 0.0
      %1477 = vmatpush1.msra.mxu0 0.0
      %1478 = vmatprep.subr.mxu0 0.0
      %1479 = vmatpush1.msra.mxu0 0.0
      %1480 = vmatprep.subr.mxu0 0.0
      %1481 = vmatpush1.msra.mxu0 0.0
      %1482 = vmatprep.subr.mxu0 0.0
      %1483 = vmatpush1.msra.mxu0 0.0
      %1484 = vmatprep.subr.mxu0 0.0
      %1485 = vmatpush1.msra.mxu0 0.0
      %1486 = vmatprep.subr.mxu0 0.0
      %1487 = vmatpush1.msra.mxu0 0.0
      %1488 = vmatprep.subr.mxu0 0.0
      %1489 = vmatpush1.msra.mxu0 0.0
      %1490 = vmatprep.mubr.f32.mxu0 0.0
      %1491 = vmatmul.mubr.f32.gmra.mrb[0].mxu0 %v1424
      %v1492 = vpop.f32.mrb[0].mxu0
      %v1493 = vadd.f32 0.0, %v1492
      %v1494 = vpop.f32.mrb[0].mxu0
      %1495 = vdwg.mxu0
      %1497 = vrot.lane.b32.xlu0 %v1420, 32
      %v1498 = vpop.permute.xlu0 %1497
      %v1499 = vsel %vm511, %v1498, 0
      %1501 = vmatprep.subr.mxu0 0.0
      %1502 = vmatpush1.msra.mxu0 %v337
      %1503 = vmatprep.subr.mxu0 0.0
      %1504 = vmatpush1.msra.mxu0 %v338
      %1505 = vmatprep.subr.mxu0 0.0
      %1506 = vmatpush1.msra.mxu0 %v339
      %1507 = vmatprep.subr.mxu0 0.0
      %1508 = vmatpush1.msra.mxu0 %v340
      %1509 = vmatprep.subr.mxu0 0.0
      %1510 = vmatpush1.msra.mxu0 0.0
      %1511 = vmatprep.subr.mxu0 0.0
      %1512 = vmatpush1.msra.mxu0 0.0
      %1513 = vmatprep.subr.mxu0 0.0
      %1514 = vmatpush1.msra.mxu0 0.0
      %1515 = vmatprep.subr.mxu0 0.0
      %1516 = vmatpush1.msra.mxu0 0.0
      %1517 = vmatprep.subr.mxu0 0.0
      %1518 = vmatpush1.msra.mxu0 0.0
      %1519 = vmatprep.subr.mxu0 0.0
      %1520 = vmatpush1.msra.mxu0 0.0
      %1521 = vmatprep.subr.mxu0 0.0
      %1522 = vmatpush1.msra.mxu0 0.0
      %1523 = vmatprep.subr.mxu0 0.0
      %1524 = vmatpush1.msra.mxu0 0.0
      %1525 = vmatprep.subr.mxu0 0.0
      %1526 = vmatpush1.msra.mxu0 0.0
      %1527 = vmatprep.subr.mxu0 0.0
      %1528 = vmatpush1.msra.mxu0 0.0
      %1529 = vmatprep.subr.mxu0 0.0
      %1530 = vmatpush1.msra.mxu0 0.0
      %1531 = vmatprep.subr.mxu0 0.0
      %1532 = vmatpush1.msra.mxu0 0.0
      %1533 = vmatprep.subr.mxu0 0.0
      %1534 = vmatpush1.msra.mxu0 0.0
      %1535 = vmatprep.subr.mxu0 0.0
      %1536 = vmatpush1.msra.mxu0 0.0
      %1537 = vmatprep.subr.mxu0 0.0
      %1538 = vmatpush1.msra.mxu0 0.0
      %1539 = vmatprep.subr.mxu0 0.0
      %1540 = vmatpush1.msra.mxu0 0.0
      %1541 = vmatprep.subr.mxu0 0.0
      %1542 = vmatpush1.msra.mxu0 0.0
      %1543 = vmatprep.subr.mxu0 0.0
      %1544 = vmatpush1.msra.mxu0 0.0
      %1545 = vmatprep.subr.mxu0 0.0
      %1546 = vmatpush1.msra.mxu0 0.0
      %1547 = vmatprep.subr.mxu0 0.0
      %1548 = vmatpush1.msra.mxu0 0.0
      %1549 = vmatprep.subr.mxu0 0.0
      %1550 = vmatpush1.msra.mxu0 0.0
      %1551 = vmatprep.subr.mxu0 0.0
      %1552 = vmatpush1.msra.mxu0 0.0
      %1553 = vmatprep.subr.mxu0 0.0
      %1554 = vmatpush1.msra.mxu0 0.0
      %1555 = vmatprep.subr.mxu0 0.0
      %1556 = vmatpush1.msra.mxu0 0.0
      %1557 = vmatprep.subr.mxu0 0.0
      %1558 = vmatpush1.msra.mxu0 0.0
      %1559 = vmatprep.subr.mxu0 0.0
      %1560 = vmatpush1.msra.mxu0 0.0
      %1561 = vmatprep.subr.mxu0 0.0
      %1562 = vmatpush1.msra.mxu0 0.0
      %1563 = vmatprep.subr.mxu0 0.0
      %1564 = vmatpush1.msra.mxu0 0.0
      %1565 = vmatprep.mubr.f32.mxu0 0.0
      %1566 = vmatmul.mubr.f32.gmra.mrb[0].mxu0 %v1499
      %v1567 = vpop.f32.mrb[0].mxu0
      %v1568 = vadd.f32 %v1493, %v1567
      %v1569 = vpop.f32.mrb[0].mxu0
      %1570 = vdwg.mxu0
      %v1571 = vadd.f32 %v1568, %v759
      %v1572 = vxor.u32 %v1571, 2147483648
      %v1573 = vmul.f32 %v1572, 1.442695
      %v1574 = vpow.pop %v1573
      %v1575 = vadd.f32 %v1574, 1.0
      %v1576 = vrcp.pop %v1575
      %v1577 = vmul.f32 1.0, %v1576
      %v1578 = vtanh.pop %v1571
      %v1579 = vmul.f32 %v1577, %v1319
      %1581 = vrot.lane.b32.xlu0 %v1578, 64
      %v1582 = vpop.permute.xlu0 %1581
      %v1584 = vmul.f32 %v1577, %v1582
      %1586 = vrot.lane.b32.xlu0 %v1584, 32
      %v1587 = vpop.permute.xlu0 %1586
      %v1589 = vadd.f32 %v1579, %v1587
      %v1590 = vtanh.pop %v1589
      %1592 = vrot.lane.b32.xlu0 %v1590, 64
      %v1593 = vpop.permute.xlu0 %1592
      %v1595 = vmul.f32 %v1577, %v1593
      %1596 = vmatprep.subr.mxu0 0.0
      %1597 = vmatpush1.msra.mxu0 %v333
      %1598 = vmatprep.subr.mxu0 0.0
      %1599 = vmatpush1.msra.mxu0 %v334
      %1600 = vmatprep.subr.mxu0 0.0
      %1601 = vmatpush1.msra.mxu0 %v335
      %1602 = vmatprep.subr.mxu0 0.0
      %1603 = vmatpush1.msra.mxu0 %v336
      %1604 = vmatprep.subr.mxu0 0.0
      %1605 = vmatpush1.msra.mxu0 0.0
      %1606 = vmatprep.subr.mxu0 0.0
      %1607 = vmatpush1.msra.mxu0 0.0
      %1608 = vmatprep.subr.mxu0 0.0
      %1609 = vmatpush1.msra.mxu0 0.0
      %1610 = vmatprep.subr.mxu0 0.0
      %1611 = vmatpush1.msra.mxu0 0.0
      %1612 = vmatprep.subr.mxu0 0.0
      %1613 = vmatpush1.msra.mxu0 0.0
      %1614 = vmatprep.subr.mxu0 0.0
      %1615 = vmatpush1.msra.mxu0 0.0
      %1616 = vmatprep.subr.mxu0 0.0
      %1617 = vmatpush1.msra.mxu0 0.0
      %1618 = vmatprep.subr.mxu0 0.0
      %1619 = vmatpush1.msra.mxu0 0.0
      %1620 = vmatprep.subr.mxu0 0.0
      %1621 = vmatpush1.msra.mxu0 0.0
      %1622 = vmatprep.subr.mxu0 0.0
      %1623 = vmatpush1.msra.mxu0 0.0
      %1624 = vmatprep.subr.mxu0 0.0
      %1625 = vmatpush1.msra.mxu0 0.0
      %1626 = vmatprep.subr.mxu0 0.0
      %1627 = vmatpush1.msra.mxu0 0.0
      %1628 = vmatprep.subr.mxu0 0.0
      %1629 = vmatpush1.msra.mxu0 0.0
      %1630 = vmatprep.subr.mxu0 0.0
      %1631 = vmatpush1.msra.mxu0 0.0
      %1632 = vmatprep.subr.mxu0 0.0
      %1633 = vmatpush1.msra.mxu0 0.0
      %1634 = vmatprep.subr.mxu0 0.0
      %1635 = vmatpush1.msra.mxu0 0.0
      %1636 = vmatprep.subr.mxu0 0.0
      %1637 = vmatpush1.msra.mxu0 0.0
      %1638 = vmatprep.subr.mxu0 0.0
      %1639 = vmatpush1.msra.mxu0 0.0
      %1640 = vmatprep.subr.mxu0 0.0
      %1641 = vmatpush1.msra.mxu0 0.0
      %1642 = vmatprep.subr.mxu0 0.0
      %1643 = vmatpush1.msra.mxu0 0.0
      %1644 = vmatprep.subr.mxu0 0.0
      %1645 = vmatpush1.msra.mxu0 0.0
      %1646 = vmatprep.subr.mxu0 0.0
      %1647 = vmatpush1.msra.mxu0 0.0
      %1648 = vmatprep.subr.mxu0 0.0
      %1649 = vmatpush1.msra.mxu0 0.0
      %1650 = vmatprep.subr.mxu0 0.0
      %1651 = vmatpush1.msra.mxu0 0.0
      %1652 = vmatprep.subr.mxu0 0.0
      %1653 = vmatpush1.msra.mxu0 0.0
      %1654 = vmatprep.subr.mxu0 0.0
      %1655 = vmatpush1.msra.mxu0 0.0
      %1656 = vmatprep.subr.mxu0 0.0
      %1657 = vmatpush1.msra.mxu0 0.0
      %1658 = vmatprep.subr.mxu0 0.0
      %1659 = vmatpush1.msra.mxu0 0.0
      %1660 = vmatprep.mubr.f32.mxu0 0.0
      %1661 = vmatmul.mubr.f32.gmra.mrb[0].mxu0 %v1499
      %v1662 = vpop.f32.mrb[0].mxu0
      %v1663 = vadd.f32 0.0, %v1662
      %v1664 = vpop.f32.mrb[0].mxu0
      %1665 = vdwg.mxu0
      %v1666 = vadd.f32 %v483, %v1663
      %v1667 = vxor.u32 %v1666, 2147483648
      %v1668 = vmul.f32 %v1667, 1.442695
      %v1669 = vpow.pop %v1668
      %v1670 = vadd.f32 %v1669, 1.0
      %v1671 = vrcp.pop %v1670
      %v1672 = vmul.f32 1.0, %v1671
      %v1673 = vtanh.pop %v1666
      %v1674 = vmul.f32 %v1672, %v1414
      %1676 = vrot.lane.b32.xlu0 %v1673, 64
      %v1677 = vpop.permute.xlu0 %1676
      %v1679 = vmul.f32 %v1672, %v1677
      %1681 = vrot.lane.b32.xlu0 %v1679, 32
      %v1682 = vpop.permute.xlu0 %1681
      %v1684 = vadd.f32 %v1674, %v1682
      %v1685 = vtanh.pop %v1684
      %1687 = vrot.lane.b32.xlu0 %v1685, 64
      %v1688 = vpop.permute.xlu0 %1687
      %v1690 = vmul.f32 %v1672, %v1688
      %1692 = vrot.lane.b32.xlu0 %v1595, 32
      %v1693 = vpop.permute.xlu0 %1692
      %v1694 = vsel %vm511, %v1693, 0
      %1696 = vmatprep.subr.mxu0 0.0
      %1697 = vmatpush1.msra.mxu0 %v341
      %1698 = vmatprep.subr.mxu0 0.0
      %1699 = vmatpush1.msra.mxu0 %v342
      %1700 = vmatprep.subr.mxu0 0.0
      %1701 = vmatpush1.msra.mxu0 %v343
      %1702 = vmatprep.subr.mxu0 0.0
      %1703 = vmatpush1.msra.mxu0 %v344
      %1704 = vmatprep.subr.mxu0 0.0
      %1705 = vmatpush1.msra.mxu0 0.0
      %1706 = vmatprep.subr.mxu0 0.0
      %1707 = vmatpush1.msra.mxu0 0.0
      %1708 = vmatprep.subr.mxu0 0.0
      %1709 = vmatpush1.msra.mxu0 0.0
      %1710 = vmatprep.subr.mxu0 0.0
      %1711 = vmatpush1.msra.mxu0 0.0
      %1712 = vmatprep.subr.mxu0 0.0
      %1713 = vmatpush1.msra.mxu0 0.0
      %1714 = vmatprep.subr.mxu0 0.0
      %1715 = vmatpush1.msra.mxu0 0.0
      %1716 = vmatprep.subr.mxu0 0.0
      %1717 = vmatpush1.msra.mxu0 0.0
      %1718 = vmatprep.subr.mxu0 0.0
      %1719 = vmatpush1.msra.mxu0 0.0
      %1720 = vmatprep.subr.mxu0 0.0
      %1721 = vmatpush1.msra.mxu0 0.0
      %1722 = vmatprep.subr.mxu0 0.0
      %1723 = vmatpush1.msra.mxu0 0.0
      %1724 = vmatprep.subr.mxu0 0.0
      %1725 = vmatpush1.msra.mxu0 0.0
      %1726 = vmatprep.subr.mxu0 0.0
      %1727 = vmatpush1.msra.mxu0 0.0
      %1728 = vmatprep.subr.mxu0 0.0
      %1729 = vmatpush1.msra.mxu0 0.0
      %1730 = vmatprep.subr.mxu0 0.0
      %1731 = vmatpush1.msra.mxu0 0.0
      %1732 = vmatprep.subr.mxu0 0.0
      %1733 = vmatpush1.msra.mxu0 0.0
      %1734 = vmatprep.subr.mxu0 0.0
      %1735 = vmatpush1.msra.mxu0 0.0
      %1736 = vmatprep.subr.mxu0 0.0
      %1737 = vmatpush1.msra.mxu0 0.0
      %1738 = vmatprep.subr.mxu0 0.0
      %1739 = vmatpush1.msra.mxu0 0.0
      %1740 = vmatprep.subr.mxu0 0.0
      %1741 = vmatpush1.msra.mxu0 0.0
      %1742 = vmatprep.subr.mxu0 0.0
      %1743 = vmatpush1.msra.mxu0 0.0
      %1744 = vmatprep.subr.mxu0 0.0
      %1745 = vmatpush1.msra.mxu0 0.0
      %1746 = vmatprep.subr.mxu0 0.0
      %1747 = vmatpush1.msra.mxu0 0.0
      %1748 = vmatprep.subr.mxu0 0.0
      %1749 = vmatpush1.msra.mxu0 0.0
      %1750 = vmatprep.subr.mxu0 0.0
      %1751 = vmatpush1.msra.mxu0 0.0
      %1752 = vmatprep.subr.mxu0 0.0
      %1753 = vmatpush1.msra.mxu0 0.0
      %1754 = vmatprep.subr.mxu0 0.0
      %1755 = vmatpush1.msra.mxu0 0.0
      %1756 = vmatprep.subr.mxu0 0.0
      %1757 = vmatpush1.msra.mxu0 0.0
      %1758 = vmatprep.subr.mxu0 0.0
      %1759 = vmatpush1.msra.mxu0 0.0
      %1760 = vmatprep.mubr.f32.mxu0 0.0
      %1761 = vmatmul.mubr.f32.gmra.mrb[0].mxu0 %v1694
      %v1762 = vpop.f32.mrb[0].mxu0
      %v1763 = vadd.f32 0.0, %v1762
      %v1764 = vpop.f32.mrb[0].mxu0
      %1765 = vdwg.mxu0
      %1767 = vrot.lane.b32.xlu0 %v1690, 32
      %v1768 = vpop.permute.xlu0 %1767
      %v1769 = vsel %vm511, %v1768, 0
      %1771 = vmatprep.subr.mxu0 0.0
      %1772 = vmatpush1.msra.mxu0 %v337
      %1773 = vmatprep.subr.mxu0 0.0
      %1774 = vmatpush1.msra.mxu0 %v338
      %1775 = vmatprep.subr.mxu0 0.0
      %1776 = vmatpush1.msra.mxu0 %v339
      %1777 = vmatprep.subr.mxu0 0.0
      %1778 = vmatpush1.msra.mxu0 %v340
      %1779 = vmatprep.subr.mxu0 0.0
      %1780 = vmatpush1.msra.mxu0 0.0
      %1781 = vmatprep.subr.mxu0 0.0
      %1782 = vmatpush1.msra.mxu0 0.0
      %1783 = vmatprep.subr.mxu0 0.0
      %1784 = vmatpush1.msra.mxu0 0.0
      %1785 = vmatprep.subr.mxu0 0.0
      %1786 = vmatpush1.msra.mxu0 0.0
      %1787 = vmatprep.subr.mxu0 0.0
      %1788 = vmatpush1.msra.mxu0 0.0
      %1789 = vmatprep.subr.mxu0 0.0
      %1790 = vmatpush1.msra.mxu0 0.0
      %1791 = vmatprep.subr.mxu0 0.0
      %1792 = vmatpush1.msra.mxu0 0.0
      %1793 = vmatprep.subr.mxu0 0.0
      %1794 = vmatpush1.msra.mxu0 0.0
      %1795 = vmatprep.subr.mxu0 0.0
      %1796 = vmatpush1.msra.mxu0 0.0
      %1797 = vmatprep.subr.mxu0 0.0
      %1798 = vmatpush1.msra.mxu0 0.0
      %1799 = vmatprep.subr.mxu0 0.0
      %1800 = vmatpush1.msra.mxu0 0.0
      %1801 = vmatprep.subr.mxu0 0.0
      %1802 = vmatpush1.msra.mxu0 0.0
      %1803 = vmatprep.subr.mxu0 0.0
      %1804 = vmatpush1.msra.mxu0 0.0
      %1805 = vmatprep.subr.mxu0 0.0
      %1806 = vmatpush1.msra.mxu0 0.0
      %1807 = vmatprep.subr.mxu0 0.0
      %1808 = vmatpush1.msra.mxu0 0.0
      %1809 = vmatprep.subr.mxu0 0.0
      %1810 = vmatpush1.msra.mxu0 0.0
      %1811 = vmatprep.subr.mxu0 0.0
      %1812 = vmatpush1.msra.mxu0 0.0
      %1813 = vmatprep.subr.mxu0 0.0
      %1814 = vmatpush1.msra.mxu0 0.0
      %1815 = vmatprep.subr.mxu0 0.0
      %1816 = vmatpush1.msra.mxu0 0.0
      %1817 = vmatprep.subr.mxu0 0.0
      %1818 = vmatpush1.msra.mxu0 0.0
      %1819 = vmatprep.subr.mxu0 0.0
      %1820 = vmatpush1.msra.mxu0 0.0
      %1821 = vmatprep.subr.mxu0 0.0
      %1822 = vmatpush1.msra.mxu0 0.0
      %1823 = vmatprep.subr.mxu0 0.0
      %1824 = vmatpush1.msra.mxu0 0.0
      %1825 = vmatprep.subr.mxu0 0.0
      %1826 = vmatpush1.msra.mxu0 0.0
      %1827 = vmatprep.subr.mxu0 0.0
      %1828 = vmatpush1.msra.mxu0 0.0
      %1829 = vmatprep.subr.mxu0 0.0
      %1830 = vmatpush1.msra.mxu0 0.0
      %1831 = vmatprep.subr.mxu0 0.0
      %1832 = vmatpush1.msra.mxu0 0.0
      %1833 = vmatprep.subr.mxu0 0.0
      %1834 = vmatpush1.msra.mxu0 0.0
      %1835 = vmatprep.mubr.f32.mxu0 0.0
      %1836 = vmatmul.mubr.f32.gmra.mrb[0].mxu0 %v1769
      %v1837 = vpop.f32.mrb[0].mxu0
      %v1838 = vadd.f32 %v1763, %v1837
      %v1839 = vpop.f32.mrb[0].mxu0
      %1840 = vdwg.mxu0
      %v1841 = vadd.f32 %v1838, %v759
      %v1842 = vxor.u32 %v1841, 2147483648
      %v1843 = vmul.f32 %v1842, 1.442695
      %v1844 = vpow.pop %v1843
      %v1845 = vadd.f32 %v1844, 1.0
      %v1846 = vrcp.pop %v1845
      %v1847 = vmul.f32 1.0, %v1846
      %v1848 = vtanh.pop %v1841
      %v1849 = vmul.f32 %v1847, %v1589
      %1851 = vrot.lane.b32.xlu0 %v1848, 64
      %v1852 = vpop.permute.xlu0 %1851
      %v1854 = vmul.f32 %v1847, %v1852
      %1856 = vrot.lane.b32.xlu0 %v1854, 32
      %v1857 = vpop.permute.xlu0 %1856
      %v1859 = vadd.f32 %v1849, %v1857
      %v1860 = vtanh.pop %v1859
      %1862 = vrot.lane.b32.xlu0 %v1860, 64
      %v1863 = vpop.permute.xlu0 %1862
      %v1865 = vmul.f32 %v1847, %v1863
      %1866 = vmatprep.subr.mxu0 0.0
      %1867 = vmatpush1.msra.mxu0 %v333
      %1868 = vmatprep.subr.mxu0 0.0
      %1869 = vmatpush1.msra.mxu0 %v334
      %1870 = vmatprep.subr.mxu0 0.0
      %1871 = vmatpush1.msra.mxu0 %v335
      %1872 = vmatprep.subr.mxu0 0.0
      %1873 = vmatpush1.msra.mxu0 %v336
      %1874 = vmatprep.subr.mxu0 0.0
      %1875 = vmatpush1.msra.mxu0 0.0
      %1876 = vmatprep.subr.mxu0 0.0
      %1877 = vmatpush1.msra.mxu0 0.0
      %1878 = vmatprep.subr.mxu0 0.0
      %1879 = vmatpush1.msra.mxu0 0.0
      %1880 = vmatprep.subr.mxu0 0.0
      %1881 = vmatpush1.msra.mxu0 0.0
      %1882 = vmatprep.subr.mxu0 0.0
      %1883 = vmatpush1.msra.mxu0 0.0
      %1884 = vmatprep.subr.mxu0 0.0
      %1885 = vmatpush1.msra.mxu0 0.0
      %1886 = vmatprep.subr.mxu0 0.0
      %1887 = vmatpush1.msra.mxu0 0.0
      %1888 = vmatprep.subr.mxu0 0.0
      %1889 = vmatpush1.msra.mxu0 0.0
      %1890 = vmatprep.subr.mxu0 0.0
      %1891 = vmatpush1.msra.mxu0 0.0
      %1892 = vmatprep.subr.mxu0 0.0
      %1893 = vmatpush1.msra.mxu0 0.0
      %1894 = vmatprep.subr.mxu0 0.0
      %1895 = vmatpush1.msra.mxu0 0.0
      %1896 = vmatprep.subr.mxu0 0.0
      %1897 = vmatpush1.msra.mxu0 0.0
      %1898 = vmatprep.subr.mxu0 0.0
      %1899 = vmatpush1.msra.mxu0 0.0
      %1900 = vmatprep.subr.mxu0 0.0
      %1901 = vmatpush1.msra.mxu0 0.0
      %1902 = vmatprep.subr.mxu0 0.0
      %1903 = vmatpush1.msra.mxu0 0.0
      %1904 = vmatprep.subr.mxu0 0.0
      %1905 = vmatpush1.msra.mxu0 0.0
      %1906 = vmatprep.subr.mxu0 0.0
      %1907 = vmatpush1.msra.mxu0 0.0
      %1908 = vmatprep.subr.mxu0 0.0
      %1909 = vmatpush1.msra.mxu0 0.0
      %1910 = vmatprep.subr.mxu0 0.0
      %1911 = vmatpush1.msra.mxu0 0.0
      %1912 = vmatprep.subr.mxu0 0.0
      %1913 = vmatpush1.msra.mxu0 0.0
      %1914 = vmatprep.subr.mxu0 0.0
      %1915 = vmatpush1.msra.mxu0 0.0
      %1916 = vmatprep.subr.mxu0 0.0
      %1917 = vmatpush1.msra.mxu0 0.0
      %1918 = vmatprep.subr.mxu0 0.0
      %1919 = vmatpush1.msra.mxu0 0.0
      %1920 = vmatprep.subr.mxu0 0.0
      %1921 = vmatpush1.msra.mxu0 0.0
      %1922 = vmatprep.subr.mxu0 0.0
      %1923 = vmatpush1.msra.mxu0 0.0
      %1924 = vmatprep.subr.mxu0 0.0
      %1925 = vmatpush1.msra.mxu0 0.0
      %1926 = vmatprep.subr.mxu0 0.0
      %1927 = vmatpush1.msra.mxu0 0.0
      %1928 = vmatprep.subr.mxu0 0.0
      %1929 = vmatpush1.msra.mxu0 0.0
      %1930 = vmatprep.mubr.f32.mxu0 0.0
      %1931 = vmatmul.mubr.f32.gmra.mrb[0].mxu0 %v1769
      %v1932 = vpop.f32.mrb[0].mxu0
      %v1933 = vadd.f32 0.0, %v1932
      %v1934 = vpop.f32.mrb[0].mxu0
      %1935 = vdwg.mxu0
      %v1936 = vadd.f32 %v488, %v1933
      %v1937 = vxor.u32 %v1936, 2147483648
      %v1938 = vmul.f32 %v1937, 1.442695
      %v1939 = vpow.pop %v1938
      %v1940 = vadd.f32 %v1939, 1.0
      %v1941 = vrcp.pop %v1940
      %v1942 = vmul.f32 1.0, %v1941
      %v1943 = vtanh.pop %v1936
      %v1944 = vmul.f32 %v1942, %v1684
      %1946 = vrot.lane.b32.xlu0 %v1943, 64
      %v1947 = vpop.permute.xlu0 %1946
      %v1949 = vmul.f32 %v1942, %v1947
      %1951 = vrot.lane.b32.xlu0 %v1949, 32
      %v1952 = vpop.permute.xlu0 %1951
      %v1954 = vadd.f32 %v1944, %v1952
      %v1955 = vtanh.pop %v1954
      %1957 = vrot.lane.b32.xlu0 %v1955, 64
      %v1958 = vpop.permute.xlu0 %1957
      %v1960 = vmul.f32 %v1942, %v1958
      %1962 = vrot.lane.b32.xlu0 %v1865, 32
      %v1963 = vpop.permute.xlu0 %1962
      %v1964 = vsel %vm511, %v1963, 0
      %1966 = vmatprep.subr.mxu0 0.0
      %1967 = vmatpush1.msra.mxu0 %v341
      %1968 = vmatprep.subr.mxu0 0.0
      %1969 = vmatpush1.msra.mxu0 %v342
      %1970 = vmatprep.subr.mxu0 0.0
      %1971 = vmatpush1.msra.mxu0 %v343
      %1972 = vmatprep.subr.mxu0 0.0
      %1973 = vmatpush1.msra.mxu0 %v344
      %1974 = vmatprep.subr.mxu0 0.0
      %1975 = vmatpush1.msra.mxu0 0.0
      %1976 = vmatprep.subr.mxu0 0.0
      %1977 = vmatpush1.msra.mxu0 0.0
      %1978 = vmatprep.subr.mxu0 0.0
      %1979 = vmatpush1.msra.mxu0 0.0
      %1980 = vmatprep.subr.mxu0 0.0
      %1981 = vmatpush1.msra.mxu0 0.0
      %1982 = vmatprep.subr.mxu0 0.0
      %1983 = vmatpush1.msra.mxu0 0.0
      %1984 = vmatprep.subr.mxu0 0.0
      %1985 = vmatpush1.msra.mxu0 0.0
      %1986 = vmatprep.subr.mxu0 0.0
      %1987 = vmatpush1.msra.mxu0 0.0
      %1988 = vmatprep.subr.mxu0 0.0
      %1989 = vmatpush1.msra.mxu0 0.0
      %1990 = vmatprep.subr.mxu0 0.0
      %1991 = vmatpush1.msra.mxu0 0.0
      %1992 = vmatprep.subr.mxu0 0.0
      %1993 = vmatpush1.msra.mxu0 0.0
      %1994 = vmatprep.subr.mxu0 0.0
      %1995 = vmatpush1.msra.mxu0 0.0
      %1996 = vmatprep.subr.mxu0 0.0
      %1997 = vmatpush1.msra.mxu0 0.0
      %1998 = vmatprep.subr.mxu0 0.0
      %1999 = vmatpush1.msra.mxu0 0.0
      %2000 = vmatprep.subr.mxu0 0.0
      %2001 = vmatpush1.msra.mxu0 0.0
      %2002 = vmatprep.subr.mxu0 0.0
      %2003 = vmatpush1.msra.mxu0 0.0
      %2004 = vmatprep.subr.mxu0 0.0
      %2005 = vmatpush1.msra.mxu0 0.0
      %2006 = vmatprep.subr.mxu0 0.0
      %2007 = vmatpush1.msra.mxu0 0.0
      %2008 = vmatprep.subr.mxu0 0.0
      %2009 = vmatpush1.msra.mxu0 0.0
      %2010 = vmatprep.subr.mxu0 0.0
      %2011 = vmatpush1.msra.mxu0 0.0
      %2012 = vmatprep.subr.mxu0 0.0
      %2013 = vmatpush1.msra.mxu0 0.0
      %2014 = vmatprep.subr.mxu0 0.0
      %2015 = vmatpush1.msra.mxu0 0.0
      %2016 = vmatprep.subr.mxu0 0.0
      %2017 = vmatpush1.msra.mxu0 0.0
      %2018 = vmatprep.subr.mxu0 0.0
      %2019 = vmatpush1.msra.mxu0 0.0
      %2020 = vmatprep.subr.mxu0 0.0
      %2021 = vmatpush1.msra.mxu0 0.0
      %2022 = vmatprep.subr.mxu0 0.0
      %2023 = vmatpush1.msra.mxu0 0.0
      %2024 = vmatprep.subr.mxu0 0.0
      %2025 = vmatpush1.msra.mxu0 0.0
      %2026 = vmatprep.subr.mxu0 0.0
      %2027 = vmatpush1.msra.mxu0 0.0
      %2028 = vmatprep.subr.mxu0 0.0
      %2029 = vmatpush1.msra.mxu0 0.0
      %2030 = vmatprep.mubr.f32.mxu0 0.0
      %2031 = vmatmul.mubr.f32.gmra.mrb[0].mxu0 %v1964
      %v2032 = vpop.f32.mrb[0].mxu0
      %v2033 = vadd.f32 0.0, %v2032
      %v2034 = vpop.f32.mrb[0].mxu0
      %2035 = vdwg.mxu0
      %2037 = vrot.lane.b32.xlu0 %v1960, 32
      %v2038 = vpop.permute.xlu0 %2037
      %v2039 = vsel %vm511, %v2038, 0
      %2041 = vmatprep.subr.mxu0 0.0
      %2042 = vmatpush1.msra.mxu0 %v337
      %2043 = vmatprep.subr.mxu0 0.0
      %2044 = vmatpush1.msra.mxu0 %v338
      %2045 = vmatprep.subr.mxu0 0.0
      %2046 = vmatpush1.msra.mxu0 %v339
      %2047 = vmatprep.subr.mxu0 0.0
      %2048 = vmatpush1.msra.mxu0 %v340
      %2049 = vmatprep.subr.mxu0 0.0
      %2050 = vmatpush1.msra.mxu0 0.0
      %2051 = vmatprep.subr.mxu0 0.0
      %2052 = vmatpush1.msra.mxu0 0.0
      %2053 = vmatprep.subr.mxu0 0.0
      %2054 = vmatpush1.msra.mxu0 0.0
      %2055 = vmatprep.subr.mxu0 0.0
      %2056 = vmatpush1.msra.mxu0 0.0
      %2057 = vmatprep.subr.mxu0 0.0
      %2058 = vmatpush1.msra.mxu0 0.0
      %2059 = vmatprep.subr.mxu0 0.0
      %2060 = vmatpush1.msra.mxu0 0.0
      %2061 = vmatprep.subr.mxu0 0.0
      %2062 = vmatpush1.msra.mxu0 0.0
      %2063 = vmatprep.subr.mxu0 0.0
      %2064 = vmatpush1.msra.mxu0 0.0
      %2065 = vmatprep.subr.mxu0 0.0
      %2066 = vmatpush1.msra.mxu0 0.0
      %2067 = vmatprep.subr.mxu0 0.0
      %2068 = vmatpush1.msra.mxu0 0.0
      %2069 = vmatprep.subr.mxu0 0.0
      %2070 = vmatpush1.msra.mxu0 0.0
      %2071 = vmatprep.subr.mxu0 0.0
      %2072 = vmatpush1.msra.mxu0 0.0
      %2073 = vmatprep.subr.mxu0 0.0
      %2074 = vmatpush1.msra.mxu0 0.0
      %2075 = vmatprep.subr.mxu0 0.0
      %2076 = vmatpush1.msra.mxu0 0.0
      %2077 = vmatprep.subr.mxu0 0.0
      %2078 = vmatpush1.msra.mxu0 0.0
      %2079 = vmatprep.subr.mxu0 0.0
      %2080 = vmatpush1.msra.mxu0 0.0
      %2081 = vmatprep.subr.mxu0 0.0
      %2082 = vmatpush1.msra.mxu0 0.0
      %2083 = vmatprep.subr.mxu0 0.0
      %2084 = vmatpush1.msra.mxu0 0.0
      %2085 = vmatprep.subr.mxu0 0.0
      %2086 = vmatpush1.msra.mxu0 0.0
      %2087 = vmatprep.subr.mxu0 0.0
      %2088 = vmatpush1.msra.mxu0 0.0
      %2089 = vmatprep.subr.mxu0 0.0
      %2090 = vmatpush1.msra.mxu0 0.0
      %2091 = vmatprep.subr.mxu0 0.0
      %2092 = vmatpush1.msra.mxu0 0.0
      %2093 = vmatprep.subr.mxu0 0.0
      %2094 = vmatpush1.msra.mxu0 0.0
      %2095 = vmatprep.subr.mxu0 0.0
      %2096 = vmatpush1.msra.mxu0 0.0
      %2097 = vmatprep.subr.mxu0 0.0
      %2098 = vmatpush1.msra.mxu0 0.0
      %2099 = vmatprep.subr.mxu0 0.0
      %2100 = vmatpush1.msra.mxu0 0.0
      %2101 = vmatprep.subr.mxu0 0.0
      %2102 = vmatpush1.msra.mxu0 0.0
      %2103 = vmatprep.subr.mxu0 0.0
      %2104 = vmatpush1.msra.mxu0 0.0
      %2105 = vmatprep.mubr.f32.mxu0 0.0
      %2106 = vmatmul.mubr.f32.gmra.mrb[0].mxu0 %v2039
      %v2107 = vpop.f32.mrb[0].mxu0
      %v2108 = vadd.f32 %v2033, %v2107
      %v2109 = vpop.f32.mrb[0].mxu0
      %2110 = vdwg.mxu0
      %v2111 = vadd.f32 %v2108, %v759
      %v2112 = vxor.u32 %v2111, 2147483648
      %v2113 = vmul.f32 %v2112, 1.442695
      %v2114 = vpow.pop %v2113
      %v2115 = vadd.f32 %v2114, 1.0
      %v2116 = vrcp.pop %v2115
      %v2117 = vmul.f32 1.0, %v2116
      %v2118 = vtanh.pop %v2111
      %v2119 = vmul.f32 %v2117, %v1859
      %2121 = vrot.lane.b32.xlu0 %v2118, 64
      %v2122 = vpop.permute.xlu0 %2121
      %v2124 = vmul.f32 %v2117, %v2122
      %2126 = vrot.lane.b32.xlu0 %v2124, 32
      %v2127 = vpop.permute.xlu0 %2126
      %v2129 = vadd.f32 %v2119, %v2127
      %v2130 = vtanh.pop %v2129
      %2132 = vrot.lane.b32.xlu0 %v2130, 64
      %v2133 = vpop.permute.xlu0 %2132
      %v2135 = vmul.f32 %v2117, %v2133
      %2136 = vmatprep.subr.mxu0 0.0
      %2137 = vmatpush1.msra.mxu0 %v333
      %2138 = vmatprep.subr.mxu0 0.0
      %2139 = vmatpush1.msra.mxu0 %v334
      %2140 = vmatprep.subr.mxu0 0.0
      %2141 = vmatpush1.msra.mxu0 %v335
      %2142 = vmatprep.subr.mxu0 0.0
      %2143 = vmatpush1.msra.mxu0 %v336
      %2144 = vmatprep.subr.mxu0 0.0
      %2145 = vmatpush1.msra.mxu0 0.0
      %2146 = vmatprep.subr.mxu0 0.0
      %2147 = vmatpush1.msra.mxu0 0.0
      %2148 = vmatprep.subr.mxu0 0.0
      %2149 = vmatpush1.msra.mxu0 0.0
      %2150 = vmatprep.subr.mxu0 0.0
      %2151 = vmatpush1.msra.mxu0 0.0
      %2152 = vmatprep.subr.mxu0 0.0
      %2153 = vmatpush1.msra.mxu0 0.0
      %2154 = vmatprep.subr.mxu0 0.0
      %2155 = vmatpush1.msra.mxu0 0.0
      %2156 = vmatprep.subr.mxu0 0.0
      %2157 = vmatpush1.msra.mxu0 0.0
      %2158 = vmatprep.subr.mxu0 0.0
      %2159 = vmatpush1.msra.mxu0 0.0
      %2160 = vmatprep.subr.mxu0 0.0
      %2161 = vmatpush1.msra.mxu0 0.0
      %2162 = vmatprep.subr.mxu0 0.0
      %2163 = vmatpush1.msra.mxu0 0.0
      %2164 = vmatprep.subr.mxu0 0.0
      %2165 = vmatpush1.msra.mxu0 0.0
      %2166 = vmatprep.subr.mxu0 0.0
      %2167 = vmatpush1.msra.mxu0 0.0
      %2168 = vmatprep.subr.mxu0 0.0
      %2169 = vmatpush1.msra.mxu0 0.0
      %2170 = vmatprep.subr.mxu0 0.0
      %2171 = vmatpush1.msra.mxu0 0.0
      %2172 = vmatprep.subr.mxu0 0.0
      %2173 = vmatpush1.msra.mxu0 0.0
      %2174 = vmatprep.subr.mxu0 0.0
      %2175 = vmatpush1.msra.mxu0 0.0
      %2176 = vmatprep.subr.mxu0 0.0
      %2177 = vmatpush1.msra.mxu0 0.0
      %2178 = vmatprep.subr.mxu0 0.0
      %2179 = vmatpush1.msra.mxu0 0.0
      %2180 = vmatprep.subr.mxu0 0.0
      %2181 = vmatpush1.msra.mxu0 0.0
      %2182 = vmatprep.subr.mxu0 0.0
      %2183 = vmatpush1.msra.mxu0 0.0
      %2184 = vmatprep.subr.mxu0 0.0
      %2185 = vmatpush1.msra.mxu0 0.0
      %2186 = vmatprep.subr.mxu0 0.0
      %2187 = vmatpush1.msra.mxu0 0.0
      %2188 = vmatprep.subr.mxu0 0.0
      %2189 = vmatpush1.msra.mxu0 0.0
      %2190 = vmatprep.subr.mxu0 0.0
      %2191 = vmatpush1.msra.mxu0 0.0
      %2192 = vmatprep.subr.mxu0 0.0
      %2193 = vmatpush1.msra.mxu0 0.0
      %2194 = vmatprep.subr.mxu0 0.0
      %2195 = vmatpush1.msra.mxu0 0.0
      %2196 = vmatprep.subr.mxu0 0.0
      %2197 = vmatpush1.msra.mxu0 0.0
      %2198 = vmatprep.subr.mxu0 0.0
      %2199 = vmatpush1.msra.mxu0 0.0
      %2200 = vmatprep.mubr.f32.mxu0 0.0
      %2201 = vmatmul.mubr.f32.gmra.mrb[0].mxu0 %v2039
      %v2202 = vpop.f32.mrb[0].mxu0
      %v2203 = vadd.f32 0.0, %v2202
      %v2204 = vpop.f32.mrb[0].mxu0
      %2205 = vdwg.mxu0
      %v2206 = vadd.f32 %v493, %v2203
      %v2207 = vxor.u32 %v2206, 2147483648
      %v2208 = vmul.f32 %v2207, 1.442695
      %v2209 = vpow.pop %v2208
      %v2210 = vadd.f32 %v2209, 1.0
      %v2211 = vrcp.pop %v2210
      %v2212 = vmul.f32 1.0, %v2211
      %v2213 = vtanh.pop %v2206
      %v2214 = vmul.f32 %v2212, %v1954
      %2216 = vrot.lane.b32.xlu0 %v2213, 64
      %v2217 = vpop.permute.xlu0 %2216
      %v2219 = vmul.f32 %v2212, %v2217
      %2221 = vrot.lane.b32.xlu0 %v2219, 32
      %v2222 = vpop.permute.xlu0 %2221
      %v2224 = vadd.f32 %v2214, %v2222
      %v2225 = vtanh.pop %v2224
      %2227 = vrot.lane.b32.xlu0 %v2225, 64
      %v2228 = vpop.permute.xlu0 %2227
      %v2230 = vmul.f32 %v2212, %v2228
      %2232 = vrot.lane.b32.xlu0 %v2135, 32
      %v2233 = vpop.permute.xlu0 %2232
      %v2234 = vsel %vm511, %v2233, 0
      %2236 = vmatprep.subr.mxu0 0.0
      %2237 = vmatpush1.msra.mxu0 %v341
      %2238 = vmatprep.subr.mxu0 0.0
      %2239 = vmatpush1.msra.mxu0 %v342
      %2240 = vmatprep.subr.mxu0 0.0
      %2241 = vmatpush1.msra.mxu0 %v343
      %2242 = vmatprep.subr.mxu0 0.0
      %2243 = vmatpush1.msra.mxu0 %v344
      %2244 = vmatprep.subr.mxu0 0.0
      %2245 = vmatpush1.msra.mxu0 0.0
      %2246 = vmatprep.subr.mxu0 0.0
      %2247 = vmatpush1.msra.mxu0 0.0
      %2248 = vmatprep.subr.mxu0 0.0
      %2249 = vmatpush1.msra.mxu0 0.0
      %2250 = vmatprep.subr.mxu0 0.0
      %2251 = vmatpush1.msra.mxu0 0.0
      %2252 = vmatprep.subr.mxu0 0.0
      %2253 = vmatpush1.msra.mxu0 0.0
      %2254 = vmatprep.subr.mxu0 0.0
      %2255 = vmatpush1.msra.mxu0 0.0
      %2256 = vmatprep.subr.mxu0 0.0
      %2257 = vmatpush1.msra.mxu0 0.0
      %2258 = vmatprep.subr.mxu0 0.0
      %2259 = vmatpush1.msra.mxu0 0.0
      %2260 = vmatprep.subr.mxu0 0.0
      %2261 = vmatpush1.msra.mxu0 0.0
      %2262 = vmatprep.subr.mxu0 0.0
      %2263 = vmatpush1.msra.mxu0 0.0
      %2264 = vmatprep.subr.mxu0 0.0
      %2265 = vmatpush1.msra.mxu0 0.0
      %2266 = vmatprep.subr.mxu0 0.0
      %2267 = vmatpush1.msra.mxu0 0.0
      %2268 = vmatprep.subr.mxu0 0.0
      %2269 = vmatpush1.msra.mxu0 0.0
      %2270 = vmatprep.subr.mxu0 0.0
      %2271 = vmatpush1.msra.mxu0 0.0
      %2272 = vmatprep.subr.mxu0 0.0
      %2273 = vmatpush1.msra.mxu0 0.0
      %2274 = vmatprep.subr.mxu0 0.0
      %2275 = vmatpush1.msra.mxu0 0.0
      %2276 = vmatprep.subr.mxu0 0.0
      %2277 = vmatpush1.msra.mxu0 0.0
      %2278 = vmatprep.subr.mxu0 0.0
      %2279 = vmatpush1.msra.mxu0 0.0
      %2280 = vmatprep.subr.mxu0 0.0
      %2281 = vmatpush1.msra.mxu0 0.0
      %2282 = vmatprep.subr.mxu0 0.0
      %2283 = vmatpush1.msra.mxu0 0.0
      %2284 = vmatprep.subr.mxu0 0.0
      %2285 = vmatpush1.msra.mxu0 0.0
      %2286 = vmatprep.subr.mxu0 0.0
      %2287 = vmatpush1.msra.mxu0 0.0
      %2288 = vmatprep.subr.mxu0 0.0
      %2289 = vmatpush1.msra.mxu0 0.0
      %2290 = vmatprep.subr.mxu0 0.0
      %2291 = vmatpush1.msra.mxu0 0.0
      %2292 = vmatprep.subr.mxu0 0.0
      %2293 = vmatpush1.msra.mxu0 0.0
      %2294 = vmatprep.subr.mxu0 0.0
      %2295 = vmatpush1.msra.mxu0 0.0
      %2296 = vmatprep.subr.mxu0 0.0
      %2297 = vmatpush1.msra.mxu0 0.0
      %2298 = vmatprep.subr.mxu0 0.0
      %2299 = vmatpush1.msra.mxu0 0.0
      %2300 = vmatprep.mubr.f32.mxu0 0.0
      %2301 = vmatmul.mubr.f32.gmra.mrb[0].mxu0 %v2234
      %v2302 = vpop.f32.mrb[0].mxu0
      %v2303 = vadd.f32 0.0, %v2302
      %v2304 = vpop.f32.mrb[0].mxu0
      %2305 = vdwg.mxu0
      %2307 = vrot.lane.b32.xlu0 %v2230, 32
      %v2308 = vpop.permute.xlu0 %2307
      %v2309 = vsel %vm511, %v2308, 0
      %2311 = vmatprep.subr.mxu0 0.0
      %2312 = vmatpush1.msra.mxu0 %v337
      %2313 = vmatprep.subr.mxu0 0.0
      %2314 = vmatpush1.msra.mxu0 %v338
      %2315 = vmatprep.subr.mxu0 0.0
      %2316 = vmatpush1.msra.mxu0 %v339
      %2317 = vmatprep.subr.mxu0 0.0
      %2318 = vmatpush1.msra.mxu0 %v340
      %2319 = vmatprep.subr.mxu0 0.0
      %2320 = vmatpush1.msra.mxu0 0.0
      %2321 = vmatprep.subr.mxu0 0.0
      %2322 = vmatpush1.msra.mxu0 0.0
      %2323 = vmatprep.subr.mxu0 0.0
      %2324 = vmatpush1.msra.mxu0 0.0
      %2325 = vmatprep.subr.mxu0 0.0
      %2326 = vmatpush1.msra.mxu0 0.0
      %2327 = vmatprep.subr.mxu0 0.0
      %2328 = vmatpush1.msra.mxu0 0.0
      %2329 = vmatprep.subr.mxu0 0.0
      %2330 = vmatpush1.msra.mxu0 0.0
      %2331 = vmatprep.subr.mxu0 0.0
      %2332 = vmatpush1.msra.mxu0 0.0
      %2333 = vmatprep.subr.mxu0 0.0
      %2334 = vmatpush1.msra.mxu0 0.0
      %2335 = vmatprep.subr.mxu0 0.0
      %2336 = vmatpush1.msra.mxu0 0.0
      %2337 = vmatprep.subr.mxu0 0.0
      %2338 = vmatpush1.msra.mxu0 0.0
      %2339 = vmatprep.subr.mxu0 0.0
      %2340 = vmatpush1.msra.mxu0 0.0
      %2341 = vmatprep.subr.mxu0 0.0
      %2342 = vmatpush1.msra.mxu0 0.0
      %2343 = vmatprep.subr.mxu0 0.0
      %2344 = vmatpush1.msra.mxu0 0.0
      %2345 = vmatprep.subr.mxu0 0.0
      %2346 = vmatpush1.msra.mxu0 0.0
      %2347 = vmatprep.subr.mxu0 0.0
      %2348 = vmatpush1.msra.mxu0 0.0
      %2349 = vmatprep.subr.mxu0 0.0
      %2350 = vmatpush1.msra.mxu0 0.0
      %2351 = vmatprep.subr.mxu0 0.0
      %2352 = vmatpush1.msra.mxu0 0.0
      %2353 = vmatprep.subr.mxu0 0.0
      %2354 = vmatpush1.msra.mxu0 0.0
      %2355 = vmatprep.subr.mxu0 0.0
      %2356 = vmatpush1.msra.mxu0 0.0
      %2357 = vmatprep.subr.mxu0 0.0
      %2358 = vmatpush1.msra.mxu0 0.0
      %2359 = vmatprep.subr.mxu0 0.0
      %2360 = vmatpush1.msra.mxu0 0.0
      %2361 = vmatprep.subr.mxu0 0.0
      %2362 = vmatpush1.msra.mxu0 0.0
      %2363 = vmatprep.subr.mxu0 0.0
      %2364 = vmatpush1.msra.mxu0 0.0
      %2365 = vmatprep.subr.mxu0 0.0
      %2366 = vmatpush1.msra.mxu0 0.0
      %2367 = vmatprep.subr.mxu0 0.0
      %2368 = vmatpush1.msra.mxu0 0.0
      %2369 = vmatprep.subr.mxu0 0.0
      %2370 = vmatpush1.msra.mxu0 0.0
      %2371 = vmatprep.subr.mxu0 0.0
      %2372 = vmatpush1.msra.mxu0 0.0
      %2373 = vmatprep.subr.mxu0 0.0
      %2374 = vmatpush1.msra.mxu0 0.0
      %2375 = vmatprep.mubr.f32.mxu0 0.0
      %2376 = vmatmul.mubr.f32.gmra.mrb[0].mxu0 %v2309
      %v2377 = vpop.f32.mrb[0].mxu0
      %v2378 = vadd.f32 %v2303, %v2377
      %v2379 = vpop.f32.mrb[0].mxu0
      %2380 = vdwg.mxu0
      %v2381 = vadd.f32 %v2378, %v759
      %v2382 = vxor.u32 %v2381, 2147483648
      %v2383 = vmul.f32 %v2382, 1.442695
      %v2384 = vpow.pop %v2383
      %v2385 = vadd.f32 %v2384, 1.0
      %v2386 = vrcp.pop %v2385
      %v2387 = vmul.f32 1.0, %v2386
      %v2388 = vtanh.pop %v2381
      %v2389 = vmul.f32 %v2387, %v2129
      %2391 = vrot.lane.b32.xlu0 %v2388, 64
      %v2392 = vpop.permute.xlu0 %2391
      %v2394 = vmul.f32 %v2387, %v2392
      %2396 = vrot.lane.b32.xlu0 %v2394, 32
      %v2397 = vpop.permute.xlu0 %2396
      %v2399 = vadd.f32 %v2389, %v2397
      %v2400 = vtanh.pop %v2399
      %2402 = vrot.lane.b32.xlu0 %v2400, 64
      %v2403 = vpop.permute.xlu0 %2402
      %v2405 = vmul.f32 %v2387, %v2403
      %2406 = vmatprep.subr.mxu0 0.0
      %2407 = vmatpush1.msra.mxu0 %v333
      %2408 = vmatprep.subr.mxu0 0.0
      %2409 = vmatpush1.msra.mxu0 %v334
      %2410 = vmatprep.subr.mxu0 0.0
      %2411 = vmatpush1.msra.mxu0 %v335
      %2412 = vmatprep.subr.mxu0 0.0
      %2413 = vmatpush1.msra.mxu0 %v336
      %2414 = vmatprep.subr.mxu0 0.0
      %2415 = vmatpush1.msra.mxu0 0.0
      %2416 = vmatprep.subr.mxu0 0.0
      %2417 = vmatpush1.msra.mxu0 0.0
      %2418 = vmatprep.subr.mxu0 0.0
      %2419 = vmatpush1.msra.mxu0 0.0
      %2420 = vmatprep.subr.mxu0 0.0
      %2421 = vmatpush1.msra.mxu0 0.0
      %2422 = vmatprep.subr.mxu0 0.0
      %2423 = vmatpush1.msra.mxu0 0.0
      %2424 = vmatprep.subr.mxu0 0.0
      %2425 = vmatpush1.msra.mxu0 0.0
      %2426 = vmatprep.subr.mxu0 0.0
      %2427 = vmatpush1.msra.mxu0 0.0
      %2428 = vmatprep.subr.mxu0 0.0
      %2429 = vmatpush1.msra.mxu0 0.0
      %2430 = vmatprep.subr.mxu0 0.0
      %2431 = vmatpush1.msra.mxu0 0.0
      %2432 = vmatprep.subr.mxu0 0.0
      %2433 = vmatpush1.msra.mxu0 0.0
      %2434 = vmatprep.subr.mxu0 0.0
      %2435 = vmatpush1.msra.mxu0 0.0
      %2436 = vmatprep.subr.mxu0 0.0
      %2437 = vmatpush1.msra.mxu0 0.0
      %2438 = vmatprep.subr.mxu0 0.0
      %2439 = vmatpush1.msra.mxu0 0.0
      %2440 = vmatprep.subr.mxu0 0.0
      %2441 = vmatpush1.msra.mxu0 0.0
      %2442 = vmatprep.subr.mxu0 0.0
      %2443 = vmatpush1.msra.mxu0 0.0
      %2444 = vmatprep.subr.mxu0 0.0
      %2445 = vmatpush1.msra.mxu0 0.0
      %2446 = vmatprep.subr.mxu0 0.0
      %2447 = vmatpush1.msra.mxu0 0.0
      %2448 = vmatprep.subr.mxu0 0.0
      %2449 = vmatpush1.msra.mxu0 0.0
      %2450 = vmatprep.subr.mxu0 0.0
      %2451 = vmatpush1.msra.mxu0 0.0
      %2452 = vmatprep.subr.mxu0 0.0
      %2453 = vmatpush1.msra.mxu0 0.0
      %2454 = vmatprep.subr.mxu0 0.0
      %2455 = vmatpush1.msra.mxu0 0.0
      %2456 = vmatprep.subr.mxu0 0.0
      %2457 = vmatpush1.msra.mxu0 0.0
      %2458 = vmatprep.subr.mxu0 0.0
      %2459 = vmatpush1.msra.mxu0 0.0
      %2460 = vmatprep.subr.mxu0 0.0
      %2461 = vmatpush1.msra.mxu0 0.0
      %2462 = vmatprep.subr.mxu0 0.0
      %2463 = vmatpush1.msra.mxu0 0.0
      %2464 = vmatprep.subr.mxu0 0.0
      %2465 = vmatpush1.msra.mxu0 0.0
      %2466 = vmatprep.subr.mxu0 0.0
      %2467 = vmatpush1.msra.mxu0 0.0
      %2468 = vmatprep.subr.mxu0 0.0
      %2469 = vmatpush1.msra.mxu0 0.0
      %2470 = vmatprep.mubr.f32.mxu0 0.0
      %2471 = vmatmul.mubr.f32.gmra.mrb[0].mxu0 %v2309
      %v2472 = vpop.f32.mrb[0].mxu0
      %v2473 = vadd.f32 0.0, %v2472
      %v2474 = vpop.f32.mrb[0].mxu0
      %2475 = vdwg.mxu0
      %v2476 = vadd.f32 %v498, %v2473
      %v2477 = vxor.u32 %v2476, 2147483648
      %v2478 = vmul.f32 %v2477, 1.442695
      %v2479 = vpow.pop %v2478
      %v2480 = vadd.f32 %v2479, 1.0
      %v2481 = vrcp.pop %v2480
      %v2482 = vmul.f32 1.0, %v2481
      %v2483 = vtanh.pop %v2476
      %v2484 = vmul.f32 %v2482, %v2224
      %2486 = vrot.lane.b32.xlu0 %v2483, 64
      %v2487 = vpop.permute.xlu0 %2486
      %v2489 = vmul.f32 %v2482, %v2487
      %2491 = vrot.lane.b32.xlu0 %v2489, 32
      %v2492 = vpop.permute.xlu0 %2491
      %v2494 = vadd.f32 %v2484, %v2492
      %v2495 = vtanh.pop %v2494
      %2497 = vrot.lane.b32.xlu0 %v2495, 64
      %v2498 = vpop.permute.xlu0 %2497
      %v2500 = vmul.f32 %v2482, %v2498
      %2502 = vrot.lane.b32.xlu0 %v2405, 32
      %v2503 = vpop.permute.xlu0 %2502
      %v2504 = vsel %vm511, %v2503, 0
      %2506 = vmatprep.subr.mxu0 0.0
      %2507 = vmatpush1.msra.mxu0 %v341
      %2508 = vmatprep.subr.mxu0 0.0
      %2509 = vmatpush1.msra.mxu0 %v342
      %2510 = vmatprep.subr.mxu0 0.0
      %2511 = vmatpush1.msra.mxu0 %v343
      %2512 = vmatprep.subr.mxu0 0.0
      %2513 = vmatpush1.msra.mxu0 %v344
      %2514 = vmatprep.subr.mxu0 0.0
      %2515 = vmatpush1.msra.mxu0 0.0
      %2516 = vmatprep.subr.mxu0 0.0
      %2517 = vmatpush1.msra.mxu0 0.0
      %2518 = vmatprep.subr.mxu0 0.0
      %2519 = vmatpush1.msra.mxu0 0.0
      %2520 = vmatprep.subr.mxu0 0.0
      %2521 = vmatpush1.msra.mxu0 0.0
      %2522 = vmatprep.subr.mxu0 0.0
      %2523 = vmatpush1.msra.mxu0 0.0
      %2524 = vmatprep.subr.mxu0 0.0
      %2525 = vmatpush1.msra.mxu0 0.0
      %2526 = vmatprep.subr.mxu0 0.0
      %2527 = vmatpush1.msra.mxu0 0.0
      %2528 = vmatprep.subr.mxu0 0.0
      %2529 = vmatpush1.msra.mxu0 0.0
      %2530 = vmatprep.subr.mxu0 0.0
      %2531 = vmatpush1.msra.mxu0 0.0
      %2532 = vmatprep.subr.mxu0 0.0
      %2533 = vmatpush1.msra.mxu0 0.0
      %2534 = vmatprep.subr.mxu0 0.0
      %2535 = vmatpush1.msra.mxu0 0.0
      %2536 = vmatprep.subr.mxu0 0.0
      %2537 = vmatpush1.msra.mxu0 0.0
      %2538 = vmatprep.subr.mxu0 0.0
      %2539 = vmatpush1.msra.mxu0 0.0
      %2540 = vmatprep.subr.mxu0 0.0
      %2541 = vmatpush1.msra.mxu0 0.0
      %2542 = vmatprep.subr.mxu0 0.0
      %2543 = vmatpush1.msra.mxu0 0.0
      %2544 = vmatprep.subr.mxu0 0.0
      %2545 = vmatpush1.msra.mxu0 0.0
      %2546 = vmatprep.subr.mxu0 0.0
      %2547 = vmatpush1.msra.mxu0 0.0
      %2548 = vmatprep.subr.mxu0 0.0
      %2549 = vmatpush1.msra.mxu0 0.0
      %2550 = vmatprep.subr.mxu0 0.0
      %2551 = vmatpush1.msra.mxu0 0.0
      %2552 = vmatprep.subr.mxu0 0.0
      %2553 = vmatpush1.msra.mxu0 0.0
      %2554 = vmatprep.subr.mxu0 0.0
      %2555 = vmatpush1.msra.mxu0 0.0
      %2556 = vmatprep.subr.mxu0 0.0
      %2557 = vmatpush1.msra.mxu0 0.0
      %2558 = vmatprep.subr.mxu0 0.0
      %2559 = vmatpush1.msra.mxu0 0.0
      %2560 = vmatprep.subr.mxu0 0.0
      %2561 = vmatpush1.msra.mxu0 0.0
      %2562 = vmatprep.subr.mxu0 0.0
      %2563 = vmatpush1.msra.mxu0 0.0
      %2564 = vmatprep.subr.mxu0 0.0
      %2565 = vmatpush1.msra.mxu0 0.0
      %2566 = vmatprep.subr.mxu0 0.0
      %2567 = vmatpush1.msra.mxu0 0.0
      %2568 = vmatprep.subr.mxu0 0.0
      %2569 = vmatpush1.msra.mxu0 0.0
      %2570 = vmatprep.mubr.f32.mxu0 0.0
      %2571 = vmatmul.mubr.f32.gmra.mrb[0].mxu0 %v2504
      %v2572 = vpop.f32.mrb[0].mxu0
      %v2573 = vadd.f32 0.0, %v2572
      %v2574 = vpop.f32.mrb[0].mxu0
      %2575 = vdwg.mxu0
      %2577 = vrot.lane.b32.xlu0 %v2500, 32
      %v2578 = vpop.permute.xlu0 %2577
      %v2579 = vsel %vm511, %v2578, 0
      %2581 = vmatprep.subr.mxu0 0.0
      %2582 = vmatpush1.msra.mxu0 %v337
      %2583 = vmatprep.subr.mxu0 0.0
      %2584 = vmatpush1.msra.mxu0 %v338
      %2585 = vmatprep.subr.mxu0 0.0
      %2586 = vmatpush1.msra.mxu0 %v339
      %2587 = vmatprep.subr.mxu0 0.0
      %2588 = vmatpush1.msra.mxu0 %v340
      %2589 = vmatprep.subr.mxu0 0.0
      %2590 = vmatpush1.msra.mxu0 0.0
      %2591 = vmatprep.subr.mxu0 0.0
      %2592 = vmatpush1.msra.mxu0 0.0
      %2593 = vmatprep.subr.mxu0 0.0
      %2594 = vmatpush1.msra.mxu0 0.0
      %2595 = vmatprep.subr.mxu0 0.0
      %2596 = vmatpush1.msra.mxu0 0.0
      %2597 = vmatprep.subr.mxu0 0.0
      %2598 = vmatpush1.msra.mxu0 0.0
      %2599 = vmatprep.subr.mxu0 0.0
      %2600 = vmatpush1.msra.mxu0 0.0
      %2601 = vmatprep.subr.mxu0 0.0
      %2602 = vmatpush1.msra.mxu0 0.0
      %2603 = vmatprep.subr.mxu0 0.0
      %2604 = vmatpush1.msra.mxu0 0.0
      %2605 = vmatprep.subr.mxu0 0.0
      %2606 = vmatpush1.msra.mxu0 0.0
      %2607 = vmatprep.subr.mxu0 0.0
      %2608 = vmatpush1.msra.mxu0 0.0
      %2609 = vmatprep.subr.mxu0 0.0
      %2610 = vmatpush1.msra.mxu0 0.0
      %2611 = vmatprep.subr.mxu0 0.0
      %2612 = vmatpush1.msra.mxu0 0.0
      %2613 = vmatprep.subr.mxu0 0.0
      %2614 = vmatpush1.msra.mxu0 0.0
      %2615 = vmatprep.subr.mxu0 0.0
      %2616 = vmatpush1.msra.mxu0 0.0
      %2617 = vmatprep.subr.mxu0 0.0
      %2618 = vmatpush1.msra.mxu0 0.0
      %2619 = vmatprep.subr.mxu0 0.0
      %2620 = vmatpush1.msra.mxu0 0.0
      %2621 = vmatprep.subr.mxu0 0.0
      %2622 = vmatpush1.msra.mxu0 0.0
      %2623 = vmatprep.subr.mxu0 0.0
      %2624 = vmatpush1.msra.mxu0 0.0
      %2625 = vmatprep.subr.mxu0 0.0
      %2626 = vmatpush1.msra.mxu0 0.0
      %2627 = vmatprep.subr.mxu0 0.0
      %2628 = vmatpush1.msra.mxu0 0.0
      %2629 = vmatprep.subr.mxu0 0.0
      %2630 = vmatpush1.msra.mxu0 0.0
      %2631 = vmatprep.subr.mxu0 0.0
      %2632 = vmatpush1.msra.mxu0 0.0
      %2633 = vmatprep.subr.mxu0 0.0
      %2634 = vmatpush1.msra.mxu0 0.0
      %2635 = vmatprep.subr.mxu0 0.0
      %2636 = vmatpush1.msra.mxu0 0.0
      %2637 = vmatprep.subr.mxu0 0.0
      %2638 = vmatpush1.msra.mxu0 0.0
      %2639 = vmatprep.subr.mxu0 0.0
      %2640 = vmatpush1.msra.mxu0 0.0
      %2641 = vmatprep.subr.mxu0 0.0
      %2642 = vmatpush1.msra.mxu0 0.0
      %2643 = vmatprep.subr.mxu0 0.0
      %2644 = vmatpush1.msra.mxu0 0.0
      %2645 = vmatprep.mubr.f32.mxu0 0.0
      %2646 = vmatmul.mubr.f32.gmra.mrb[0].mxu0 %v2579
      %v2647 = vpop.f32.mrb[0].mxu0
      %v2648 = vadd.f32 %v2573, %v2647
      %v2649 = vpop.f32.mrb[0].mxu0
      %2650 = vdwg.mxu0
      %v2651 = vadd.f32 %v2648, %v759
      %v2652 = vxor.u32 %v2651, 2147483648
      %v2653 = vmul.f32 %v2652, 1.442695
      %v2654 = vpow.pop %v2653
      %v2655 = vadd.f32 %v2654, 1.0
      %v2656 = vrcp.pop %v2655
      %v2657 = vmul.f32 1.0, %v2656
      %v2658 = vtanh.pop %v2651
      %v2659 = vmul.f32 %v2657, %v2399
      %2661 = vrot.lane.b32.xlu0 %v2658, 64
      %v2662 = vpop.permute.xlu0 %2661
      %v2664 = vmul.f32 %v2657, %v2662
      %2666 = vrot.lane.b32.xlu0 %v2664, 32
      %v2667 = vpop.permute.xlu0 %2666
      %v2669 = vadd.f32 %v2659, %v2667
      %v2670 = vtanh.pop %v2669
      %2672 = vrot.lane.b32.xlu0 %v2670, 64
      %v2673 = vpop.permute.xlu0 %2672
      %v2675 = vmul.f32 %v2657, %v2673
      %2676 = vmatprep.subr.mxu0 0.0
      %2677 = vmatpush1.msra.mxu0 %v333
      %2678 = vmatprep.subr.mxu0 0.0
      %2679 = vmatpush1.msra.mxu0 %v334
      %2680 = vmatprep.subr.mxu0 0.0
      %2681 = vmatpush1.msra.mxu0 %v335
      %2682 = vmatprep.subr.mxu0 0.0
      %2683 = vmatpush1.msra.mxu0 %v336
      %2684 = vmatprep.subr.mxu0 0.0
      %2685 = vmatpush1.msra.mxu0 0.0
      %2686 = vmatprep.subr.mxu0 0.0
      %2687 = vmatpush1.msra.mxu0 0.0
      %2688 = vmatprep.subr.mxu0 0.0
      %2689 = vmatpush1.msra.mxu0 0.0
      %2690 = vmatprep.subr.mxu0 0.0
      %2691 = vmatpush1.msra.mxu0 0.0
      %2692 = vmatprep.subr.mxu0 0.0
      %2693 = vmatpush1.msra.mxu0 0.0
      %2694 = vmatprep.subr.mxu0 0.0
      %2695 = vmatpush1.msra.mxu0 0.0
      %2696 = vmatprep.subr.mxu0 0.0
      %2697 = vmatpush1.msra.mxu0 0.0
      %2698 = vmatprep.subr.mxu0 0.0
      %2699 = vmatpush1.msra.mxu0 0.0
      %2700 = vmatprep.subr.mxu0 0.0
      %2701 = vmatpush1.msra.mxu0 0.0
      %2702 = vmatprep.subr.mxu0 0.0
      %2703 = vmatpush1.msra.mxu0 0.0
      %2704 = vmatprep.subr.mxu0 0.0
      %2705 = vmatpush1.msra.mxu0 0.0
      %2706 = vmatprep.subr.mxu0 0.0
      %2707 = vmatpush1.msra.mxu0 0.0
      %2708 = vmatprep.subr.mxu0 0.0
      %2709 = vmatpush1.msra.mxu0 0.0
      %2710 = vmatprep.subr.mxu0 0.0
      %2711 = vmatpush1.msra.mxu0 0.0
      %2712 = vmatprep.subr.mxu0 0.0
      %2713 = vmatpush1.msra.mxu0 0.0
      %2714 = vmatprep.subr.mxu0 0.0
      %2715 = vmatpush1.msra.mxu0 0.0
      %2716 = vmatprep.subr.mxu0 0.0
      %2717 = vmatpush1.msra.mxu0 0.0
      %2718 = vmatprep.subr.mxu0 0.0
      %2719 = vmatpush1.msra.mxu0 0.0
      %2720 = vmatprep.subr.mxu0 0.0
      %2721 = vmatpush1.msra.mxu0 0.0
      %2722 = vmatprep.subr.mxu0 0.0
      %2723 = vmatpush1.msra.mxu0 0.0
      %2724 = vmatprep.subr.mxu0 0.0
      %2725 = vmatpush1.msra.mxu0 0.0
      %2726 = vmatprep.subr.mxu0 0.0
      %2727 = vmatpush1.msra.mxu0 0.0
      %2728 = vmatprep.subr.mxu0 0.0
      %2729 = vmatpush1.msra.mxu0 0.0
      %2730 = vmatprep.subr.mxu0 0.0
      %2731 = vmatpush1.msra.mxu0 0.0
      %2732 = vmatprep.subr.mxu0 0.0
      %2733 = vmatpush1.msra.mxu0 0.0
      %2734 = vmatprep.subr.mxu0 0.0
      %2735 = vmatpush1.msra.mxu0 0.0
      %2736 = vmatprep.subr.mxu0 0.0
      %2737 = vmatpush1.msra.mxu0 0.0
      %2738 = vmatprep.subr.mxu0 0.0
      %2739 = vmatpush1.msra.mxu0 0.0
      %2740 = vmatprep.mubr.f32.mxu0 0.0
      %2741 = vmatmul.mubr.f32.gmra.mrb[0].mxu0 %v2579
      %v2742 = vpop.f32.mrb[0].mxu0
      %v2743 = vadd.f32 0.0, %v2742
      %v2744 = vpop.f32.mrb[0].mxu0
      %2745 = vdwg.mxu0
      %v2746 = vadd.f32 %v503, %v2743
      %v2747 = vxor.u32 %v2746, 2147483648
      %v2748 = vmul.f32 %v2747, 1.442695
      %v2749 = vpow.pop %v2748
      %v2750 = vadd.f32 %v2749, 1.0
      %v2751 = vrcp.pop %v2750
      %v2752 = vmul.f32 1.0, %v2751
      %v2753 = vtanh.pop %v2746
      %v2754 = vmul.f32 %v2752, %v2494
      %2756 = vrot.lane.b32.xlu0 %v2753, 64
      %v2757 = vpop.permute.xlu0 %2756
      %v2759 = vmul.f32 %v2752, %v2757
      %2761 = vrot.lane.b32.xlu0 %v2759, 32
      %v2762 = vpop.permute.xlu0 %2761
      %v2764 = vadd.f32 %v2754, %v2762
      %v2765 = vtanh.pop %v2764
      %2767 = vrot.lane.b32.xlu0 %v2765, 64
      %v2768 = vpop.permute.xlu0 %2767
      %v2770 = vmul.f32 %v2752, %v2768
      %2772 = vrot.lane.b32.xlu0 %v2675, 32
      %v2773 = vpop.permute.xlu0 %2772
      %v2774 = vsel %vm511, %v2773, 0
      %2776 = vmatprep.subr.mxu0 0.0
      %2777 = vmatpush1.msra.mxu0 %v341
      %2778 = vmatprep.subr.mxu0 0.0
      %2779 = vmatpush1.msra.mxu0 %v342
      %2780 = vmatprep.subr.mxu0 0.0
      %2781 = vmatpush1.msra.mxu0 %v343
      %2782 = vmatprep.subr.mxu0 0.0
      %2783 = vmatpush1.msra.mxu0 %v344
      %2784 = vmatprep.subr.mxu0 0.0
      %2785 = vmatpush1.msra.mxu0 0.0
      %2786 = vmatprep.subr.mxu0 0.0
      %2787 = vmatpush1.msra.mxu0 0.0
      %2788 = vmatprep.subr.mxu0 0.0
      %2789 = vmatpush1.msra.mxu0 0.0
      %2790 = vmatprep.subr.mxu0 0.0
      %2791 = vmatpush1.msra.mxu0 0.0
      %2792 = vmatprep.subr.mxu0 0.0
      %2793 = vmatpush1.msra.mxu0 0.0
      %2794 = vmatprep.subr.mxu0 0.0
      %2795 = vmatpush1.msra.mxu0 0.0
      %2796 = vmatprep.subr.mxu0 0.0
      %2797 = vmatpush1.msra.mxu0 0.0
      %2798 = vmatprep.subr.mxu0 0.0
      %2799 = vmatpush1.msra.mxu0 0.0
      %2800 = vmatprep.subr.mxu0 0.0
      %2801 = vmatpush1.msra.mxu0 0.0
      %2802 = vmatprep.subr.mxu0 0.0
      %2803 = vmatpush1.msra.mxu0 0.0
      %2804 = vmatprep.subr.mxu0 0.0
      %2805 = vmatpush1.msra.mxu0 0.0
      %2806 = vmatprep.subr.mxu0 0.0
      %2807 = vmatpush1.msra.mxu0 0.0
      %2808 = vmatprep.subr.mxu0 0.0
      %2809 = vmatpush1.msra.mxu0 0.0
      %2810 = vmatprep.subr.mxu0 0.0
      %2811 = vmatpush1.msra.mxu0 0.0
      %2812 = vmatprep.subr.mxu0 0.0
      %2813 = vmatpush1.msra.mxu0 0.0
      %2814 = vmatprep.subr.mxu0 0.0
      %2815 = vmatpush1.msra.mxu0 0.0
      %2816 = vmatprep.subr.mxu0 0.0
      %2817 = vmatpush1.msra.mxu0 0.0
      %2818 = vmatprep.subr.mxu0 0.0
      %2819 = vmatpush1.msra.mxu0 0.0
      %2820 = vmatprep.subr.mxu0 0.0
      %2821 = vmatpush1.msra.mxu0 0.0
      %2822 = vmatprep.subr.mxu0 0.0
      %2823 = vmatpush1.msra.mxu0 0.0
      %2824 = vmatprep.subr.mxu0 0.0
      %2825 = vmatpush1.msra.mxu0 0.0
      %2826 = vmatprep.subr.mxu0 0.0
      %2827 = vmatpush1.msra.mxu0 0.0
      %2828 = vmatprep.subr.mxu0 0.0
      %2829 = vmatpush1.msra.mxu0 0.0
      %2830 = vmatprep.subr.mxu0 0.0
      %2831 = vmatpush1.msra.mxu0 0.0
      %2832 = vmatprep.subr.mxu0 0.0
      %2833 = vmatpush1.msra.mxu0 0.0
      %2834 = vmatprep.subr.mxu0 0.0
      %2835 = vmatpush1.msra.mxu0 0.0
      %2836 = vmatprep.subr.mxu0 0.0
      %2837 = vmatpush1.msra.mxu0 0.0
      %2838 = vmatprep.subr.mxu0 0.0
      %2839 = vmatpush1.msra.mxu0 0.0
      %2840 = vmatprep.mubr.f32.mxu0 0.0
      %2841 = vmatmul.mubr.f32.gmra.mrb[0].mxu0 %v2774
      %v2842 = vpop.f32.mrb[0].mxu0
      %v2843 = vadd.f32 0.0, %v2842
      %v2844 = vpop.f32.mrb[0].mxu0
      %2845 = vdwg.mxu0
      %2847 = vrot.lane.b32.xlu0 %v2770, 32
      %v2848 = vpop.permute.xlu0 %2847
      %v2849 = vsel %vm511, %v2848, 0
      %2851 = vmatprep.subr.mxu0 0.0
      %2852 = vmatpush1.msra.mxu0 %v337
      %2853 = vmatprep.subr.mxu0 0.0
      %2854 = vmatpush1.msra.mxu0 %v338
      %2855 = vmatprep.subr.mxu0 0.0
      %2856 = vmatpush1.msra.mxu0 %v339
      %2857 = vmatprep.subr.mxu0 0.0
      %2858 = vmatpush1.msra.mxu0 %v340
      %2859 = vmatprep.subr.mxu0 0.0
      %2860 = vmatpush1.msra.mxu0 0.0
      %2861 = vmatprep.subr.mxu0 0.0
      %2862 = vmatpush1.msra.mxu0 0.0
      %2863 = vmatprep.subr.mxu0 0.0
      %2864 = vmatpush1.msra.mxu0 0.0
      %2865 = vmatprep.subr.mxu0 0.0
      %2866 = vmatpush1.msra.mxu0 0.0
      %2867 = vmatprep.subr.mxu0 0.0
      %2868 = vmatpush1.msra.mxu0 0.0
      %2869 = vmatprep.subr.mxu0 0.0
      %2870 = vmatpush1.msra.mxu0 0.0
      %2871 = vmatprep.subr.mxu0 0.0
      %2872 = vmatpush1.msra.mxu0 0.0
      %2873 = vmatprep.subr.mxu0 0.0
      %2874 = vmatpush1.msra.mxu0 0.0
      %2875 = vmatprep.subr.mxu0 0.0
      %2876 = vmatpush1.msra.mxu0 0.0
      %2877 = vmatprep.subr.mxu0 0.0
      %2878 = vmatpush1.msra.mxu0 0.0
      %2879 = vmatprep.subr.mxu0 0.0
      %2880 = vmatpush1.msra.mxu0 0.0
      %2881 = vmatprep.subr.mxu0 0.0
      %2882 = vmatpush1.msra.mxu0 0.0
      %2883 = vmatprep.subr.mxu0 0.0
      %2884 = vmatpush1.msra.mxu0 0.0
      %2885 = vmatprep.subr.mxu0 0.0
      %2886 = vmatpush1.msra.mxu0 0.0
      %2887 = vmatprep.subr.mxu0 0.0
      %2888 = vmatpush1.msra.mxu0 0.0
      %2889 = vmatprep.subr.mxu0 0.0
      %2890 = vmatpush1.msra.mxu0 0.0
      %2891 = vmatprep.subr.mxu0 0.0
      %2892 = vmatpush1.msra.mxu0 0.0
      %2893 = vmatprep.subr.mxu0 0.0
      %2894 = vmatpush1.msra.mxu0 0.0
      %2895 = vmatprep.subr.mxu0 0.0
      %2896 = vmatpush1.msra.mxu0 0.0
      %2897 = vmatprep.subr.mxu0 0.0
      %2898 = vmatpush1.msra.mxu0 0.0
      %2899 = vmatprep.subr.mxu0 0.0
      %2900 = vmatpush1.msra.mxu0 0.0
      %2901 = vmatprep.subr.mxu0 0.0
      %2902 = vmatpush1.msra.mxu0 0.0
      %2903 = vmatprep.subr.mxu0 0.0
      %2904 = vmatpush1.msra.mxu0 0.0
      %2905 = vmatprep.subr.mxu0 0.0
      %2906 = vmatpush1.msra.mxu0 0.0
      %2907 = vmatprep.subr.mxu0 0.0
      %2908 = vmatpush1.msra.mxu0 0.0
      %2909 = vmatprep.subr.mxu0 0.0
      %2910 = vmatpush1.msra.mxu0 0.0
      %2911 = vmatprep.subr.mxu0 0.0
      %2912 = vmatpush1.msra.mxu0 0.0
      %2913 = vmatprep.subr.mxu0 0.0
      %2914 = vmatpush1.msra.mxu0 0.0
      %2915 = vmatprep.mubr.f32.mxu0 0.0
      %2916 = vmatmul.mubr.f32.gmra.mrb[0].mxu0 %v2849
      %v2917 = vpop.f32.mrb[0].mxu0
      %v2918 = vadd.f32 %v2843, %v2917
      %v2919 = vpop.f32.mrb[0].mxu0
      %2920 = vdwg.mxu0
      %v2921 = vadd.f32 %v2918, %v759
      %v2922 = vxor.u32 %v2921, 2147483648
      %v2923 = vmul.f32 %v2922, 1.442695
      %v2924 = vpow.pop %v2923
      %v2925 = vadd.f32 %v2924, 1.0
      %v2926 = vrcp.pop %v2925
      %v2927 = vmul.f32 1.0, %v2926
      %v2928 = vtanh.pop %v2921
      %v2929 = vmul.f32 %v2927, %v2669
      %2931 = vrot.lane.b32.xlu0 %v2928, 64
      %v2932 = vpop.permute.xlu0 %2931
      %v2934 = vmul.f32 %v2927, %v2932
      %2936 = vrot.lane.b32.xlu0 %v2934, 32
      %v2937 = vpop.permute.xlu0 %2936
      %v2939 = vadd.f32 %v2929, %v2937
      %v2940 = vtanh.pop %v2939
      %2942 = vrot.lane.b32.xlu0 %v2940, 64
      %v2943 = vpop.permute.xlu0 %2942
      %v2945 = vmul.f32 %v2927, %v2943
      %2946 = vmatprep.subr.mxu0 0.0
      %2947 = vmatpush1.msra.mxu0 %v333
      %2948 = vmatprep.subr.mxu0 0.0
      %2949 = vmatpush1.msra.mxu0 %v334
      %2950 = vmatprep.subr.mxu0 0.0
      %2951 = vmatpush1.msra.mxu0 %v335
      %2952 = vmatprep.subr.mxu0 0.0
      %2953 = vmatpush1.msra.mxu0 %v336
      %2954 = vmatprep.subr.mxu0 0.0
      %2955 = vmatpush1.msra.mxu0 0.0
      %2956 = vmatprep.subr.mxu0 0.0
      %2957 = vmatpush1.msra.mxu0 0.0
      %2958 = vmatprep.subr.mxu0 0.0
      %2959 = vmatpush1.msra.mxu0 0.0
      %2960 = vmatprep.subr.mxu0 0.0
      %2961 = vmatpush1.msra.mxu0 0.0
      %2962 = vmatprep.subr.mxu0 0.0
      %2963 = vmatpush1.msra.mxu0 0.0
      %2964 = vmatprep.subr.mxu0 0.0
      %2965 = vmatpush1.msra.mxu0 0.0
      %2966 = vmatprep.subr.mxu0 0.0
      %2967 = vmatpush1.msra.mxu0 0.0
      %2968 = vmatprep.subr.mxu0 0.0
      %2969 = vmatpush1.msra.mxu0 0.0
      %2970 = vmatprep.subr.mxu0 0.0
      %2971 = vmatpush1.msra.mxu0 0.0
      %2972 = vmatprep.subr.mxu0 0.0
      %2973 = vmatpush1.msra.mxu0 0.0
      %2974 = vmatprep.subr.mxu0 0.0
      %2975 = vmatpush1.msra.mxu0 0.0
      %2976 = vmatprep.subr.mxu0 0.0
      %2977 = vmatpush1.msra.mxu0 0.0
      %2978 = vmatprep.subr.mxu0 0.0
      %2979 = vmatpush1.msra.mxu0 0.0
      %2980 = vmatprep.subr.mxu0 0.0
      %2981 = vmatpush1.msra.mxu0 0.0
      %2982 = vmatprep.subr.mxu0 0.0
      %2983 = vmatpush1.msra.mxu0 0.0
      %2984 = vmatprep.subr.mxu0 0.0
      %2985 = vmatpush1.msra.mxu0 0.0
      %2986 = vmatprep.subr.mxu0 0.0
      %2987 = vmatpush1.msra.mxu0 0.0
      %2988 = vmatprep.subr.mxu0 0.0
      %2989 = vmatpush1.msra.mxu0 0.0
      %2990 = vmatprep.subr.mxu0 0.0
      %2991 = vmatpush1.msra.mxu0 0.0
      %2992 = vmatprep.subr.mxu0 0.0
      %2993 = vmatpush1.msra.mxu0 0.0
      %2994 = vmatprep.subr.mxu0 0.0
      %2995 = vmatpush1.msra.mxu0 0.0
      %2996 = vmatprep.subr.mxu0 0.0
      %2997 = vmatpush1.msra.mxu0 0.0
      %2998 = vmatprep.subr.mxu0 0.0
      %2999 = vmatpush1.msra.mxu0 0.0
      %3000 = vmatprep.subr.mxu0 0.0
      %3001 = vmatpush1.msra.mxu0 0.0
      %3002 = vmatprep.subr.mxu0 0.0
      %3003 = vmatpush1.msra.mxu0 0.0
      %3004 = vmatprep.subr.mxu0 0.0
      %3005 = vmatpush1.msra.mxu0 0.0
      %3006 = vmatprep.subr.mxu0 0.0
      %3007 = vmatpush1.msra.mxu0 0.0
      %3008 = vmatprep.subr.mxu0 0.0
      %3009 = vmatpush1.msra.mxu0 0.0
      %3010 = vmatprep.mubr.f32.mxu0 0.0
      %3011 = vmatmul.mubr.f32.gmra.mrb[0].mxu0 %v2849
      %v3012 = vpop.f32.mrb[0].mxu0
      %v3013 = vadd.f32 0.0, %v3012
      %v3014 = vpop.f32.mrb[0].mxu0
      %3015 = vdwg.mxu0
      %v3016 = vadd.f32 %v508, %v3013
      %v3017 = vxor.u32 %v3016, 2147483648
      %v3018 = vmul.f32 %v3017, 1.442695
      %v3019 = vpow.pop %v3018
      %v3020 = vadd.f32 %v3019, 1.0
      %v3021 = vrcp.pop %v3020
      %v3022 = vmul.f32 1.0, %v3021
      %v3023 = vtanh.pop %v3016
      %v3024 = vmul.f32 %v3022, %v2764
      %3026 = vrot.lane.b32.xlu0 %v3023, 64
      %v3027 = vpop.permute.xlu0 %3026
      %v3029 = vmul.f32 %v3022, %v3027
      %3031 = vrot.lane.b32.xlu0 %v3029, 32
      %v3032 = vpop.permute.xlu0 %3031
      %v3034 = vadd.f32 %v3024, %v3032
      %v3035 = vtanh.pop %v3034
      %3037 = vrot.lane.b32.xlu0 %v3035, 64
      %v3038 = vpop.permute.xlu0 %3037
      %v3040 = vmul.f32 %v3022, %v3038
      %3042 = vrot.lane.b32.xlu0 %v2945, 32
      %v3043 = vpop.permute.xlu0 %3042
      %v3044 = vsel %vm511, %v3043, 0
      %3046 = vmatprep.subr.mxu0 0.0
      %3047 = vmatpush1.msra.mxu0 %v341
      %3048 = vmatprep.subr.mxu0 0.0
      %3049 = vmatpush1.msra.mxu0 %v342
      %3050 = vmatprep.subr.mxu0 0.0
      %3051 = vmatpush1.msra.mxu0 %v343
      %3052 = vmatprep.subr.mxu0 0.0
      %3053 = vmatpush1.msra.mxu0 %v344
      %3054 = vmatprep.subr.mxu0 0.0
      %3055 = vmatpush1.msra.mxu0 0.0
      %3056 = vmatprep.subr.mxu0 0.0
      %3057 = vmatpush1.msra.mxu0 0.0
      %3058 = vmatprep.subr.mxu0 0.0
      %3059 = vmatpush1.msra.mxu0 0.0
      %3060 = vmatprep.subr.mxu0 0.0
      %3061 = vmatpush1.msra.mxu0 0.0
      %3062 = vmatprep.subr.mxu0 0.0
      %3063 = vmatpush1.msra.mxu0 0.0
      %3064 = vmatprep.subr.mxu0 0.0
      %3065 = vmatpush1.msra.mxu0 0.0
      %3066 = vmatprep.subr.mxu0 0.0
      %3067 = vmatpush1.msra.mxu0 0.0
      %3068 = vmatprep.subr.mxu0 0.0
      %3069 = vmatpush1.msra.mxu0 0.0
      %3070 = vmatprep.subr.mxu0 0.0
      %3071 = vmatpush1.msra.mxu0 0.0
      %3072 = vmatprep.subr.mxu0 0.0
      %3073 = vmatpush1.msra.mxu0 0.0
      %3074 = vmatprep.subr.mxu0 0.0
      %3075 = vmatpush1.msra.mxu0 0.0
      %3076 = vmatprep.subr.mxu0 0.0
      %3077 = vmatpush1.msra.mxu0 0.0
      %3078 = vmatprep.subr.mxu0 0.0
      %3079 = vmatpush1.msra.mxu0 0.0
      %3080 = vmatprep.subr.mxu0 0.0
      %3081 = vmatpush1.msra.mxu0 0.0
      %3082 = vmatprep.subr.mxu0 0.0
      %3083 = vmatpush1.msra.mxu0 0.0
      %3084 = vmatprep.subr.mxu0 0.0
      %3085 = vmatpush1.msra.mxu0 0.0
      %3086 = vmatprep.subr.mxu0 0.0
      %3087 = vmatpush1.msra.mxu0 0.0
      %3088 = vmatprep.subr.mxu0 0.0
      %3089 = vmatpush1.msra.mxu0 0.0
      %3090 = vmatprep.subr.mxu0 0.0
      %3091 = vmatpush1.msra.mxu0 0.0
      %3092 = vmatprep.subr.mxu0 0.0
      %3093 = vmatpush1.msra.mxu0 0.0
      %3094 = vmatprep.subr.mxu0 0.0
      %3095 = vmatpush1.msra.mxu0 0.0
      %3096 = vmatprep.subr.mxu0 0.0
      %3097 = vmatpush1.msra.mxu0 0.0
      %3098 = vmatprep.subr.mxu0 0.0
      %3099 = vmatpush1.msra.mxu0 0.0
      %3100 = vmatprep.subr.mxu0 0.0
      %3101 = vmatpush1.msra.mxu0 0.0
      %3102 = vmatprep.subr.mxu0 0.0
      %3103 = vmatpush1.msra.mxu0 0.0
      %3104 = vmatprep.subr.mxu0 0.0
      %3105 = vmatpush1.msra.mxu0 0.0
      %3106 = vmatprep.subr.mxu0 0.0
      %3107 = vmatpush1.msra.mxu0 0.0
      %3108 = vmatprep.subr.mxu0 0.0
      %3109 = vmatpush1.msra.mxu0 0.0
      %3110 = vmatprep.mubr.f32.mxu0 0.0
      %3111 = vmatmul.mubr.f32.gmra.mrb[0].mxu0 %v3044
      %v3112 = vpop.f32.mrb[0].mxu0
      %v3113 = vadd.f32 0.0, %v3112
      %v3114 = vpop.f32.mrb[0].mxu0
      %3115 = vdwg.mxu0
      %3117 = vrot.lane.b32.xlu0 %v3040, 32
      %v3118 = vpop.permute.xlu0 %3117
      %v3119 = vsel %vm511, %v3118, 0
      %3121 = vmatprep.subr.mxu0 0.0
      %3122 = vmatpush1.msra.mxu0 %v337
      %3123 = vmatprep.subr.mxu0 0.0
      %3124 = vmatpush1.msra.mxu0 %v338
      %3125 = vmatprep.subr.mxu0 0.0
      %3126 = vmatpush1.msra.mxu0 %v339
      %3127 = vmatprep.subr.mxu0 0.0
      %3128 = vmatpush1.msra.mxu0 %v340
      %3129 = vmatprep.subr.mxu0 0.0
      %3130 = vmatpush1.msra.mxu0 0.0
      %3131 = vmatprep.subr.mxu0 0.0
      %3132 = vmatpush1.msra.mxu0 0.0
      %3133 = vmatprep.subr.mxu0 0.0
      %3134 = vmatpush1.msra.mxu0 0.0
      %3135 = vmatprep.subr.mxu0 0.0
      %3136 = vmatpush1.msra.mxu0 0.0
      %3137 = vmatprep.subr.mxu0 0.0
      %3138 = vmatpush1.msra.mxu0 0.0
      %3139 = vmatprep.subr.mxu0 0.0
      %3140 = vmatpush1.msra.mxu0 0.0
      %3141 = vmatprep.subr.mxu0 0.0
      %3142 = vmatpush1.msra.mxu0 0.0
      %3143 = vmatprep.subr.mxu0 0.0
      %3144 = vmatpush1.msra.mxu0 0.0
      %3145 = vmatprep.subr.mxu0 0.0
      %3146 = vmatpush1.msra.mxu0 0.0
      %3147 = vmatprep.subr.mxu0 0.0
      %3148 = vmatpush1.msra.mxu0 0.0
      %3149 = vmatprep.subr.mxu0 0.0
      %3150 = vmatpush1.msra.mxu0 0.0
      %3151 = vmatprep.subr.mxu0 0.0
      %3152 = vmatpush1.msra.mxu0 0.0
      %3153 = vmatprep.subr.mxu0 0.0
      %3154 = vmatpush1.msra.mxu0 0.0
      %3155 = vmatprep.subr.mxu0 0.0
      %3156 = vmatpush1.msra.mxu0 0.0
      %3157 = vmatprep.subr.mxu0 0.0
      %3158 = vmatpush1.msra.mxu0 0.0
      %3159 = vmatprep.subr.mxu0 0.0
      %3160 = vmatpush1.msra.mxu0 0.0
      %3161 = vmatprep.subr.mxu0 0.0
      %3162 = vmatpush1.msra.mxu0 0.0
      %3163 = vmatprep.subr.mxu0 0.0
      %3164 = vmatpush1.msra.mxu0 0.0
      %3165 = vmatprep.subr.mxu0 0.0
      %3166 = vmatpush1.msra.mxu0 0.0
      %3167 = vmatprep.subr.mxu0 0.0
      %3168 = vmatpush1.msra.mxu0 0.0
      %3169 = vmatprep.subr.mxu0 0.0
      %3170 = vmatpush1.msra.mxu0 0.0
      %3171 = vmatprep.subr.mxu0 0.0
      %3172 = vmatpush1.msra.mxu0 0.0
      %3173 = vmatprep.subr.mxu0 0.0
      %3174 = vmatpush1.msra.mxu0 0.0
      %3175 = vmatprep.subr.mxu0 0.0
      %3176 = vmatpush1.msra.mxu0 0.0
      %3177 = vmatprep.subr.mxu0 0.0
      %3178 = vmatpush1.msra.mxu0 0.0
      %3179 = vmatprep.subr.mxu0 0.0
      %3180 = vmatpush1.msra.mxu0 0.0
      %3181 = vmatprep.subr.mxu0 0.0
      %3182 = vmatpush1.msra.mxu0 0.0
      %3183 = vmatprep.subr.mxu0 0.0
      %3184 = vmatpush1.msra.mxu0 0.0
      %3185 = vmatprep.mubr.f32.mxu0 0.0
      %3186 = vmatmul.mubr.f32.gmra.mrb[0].mxu0 %v3119
      %v3187 = vpop.f32.mrb[0].mxu0
      %v3188 = vadd.f32 %v3113, %v3187
      %v3189 = vpop.f32.mrb[0].mxu0
      %3190 = vdwg.mxu0
      %v3191 = vadd.f32 %v3188, %v759
      %v3192 = vxor.u32 %v3191, 2147483648
      %v3193 = vmul.f32 %v3192, 1.442695
      %v3194 = vpow.pop %v3193
      %v3195 = vadd.f32 %v3194, 1.0
      %v3196 = vrcp.pop %v3195
      %v3197 = vmul.f32 1.0, %v3196
      %v3198 = vtanh.pop %v3191
      %v3199 = vmul.f32 %v3197, %v2939
      %3201 = vrot.lane.b32.xlu0 %v3198, 64
      %v3202 = vpop.permute.xlu0 %3201
      %v3204 = vmul.f32 %v3197, %v3202
      %3206 = vrot.lane.b32.xlu0 %v3204, 32
      %v3207 = vpop.permute.xlu0 %3206
      %v3209 = vadd.f32 %v3199, %v3207
      %v3210 = vtanh.pop %v3209
      %3212 = vrot.lane.b32.xlu0 %v3210, 64
      %v3213 = vpop.permute.xlu0 %3212
      %v3215 = vmul.f32 %v3197, %v3213
      %v3216 = vld [vmem:[%s7] sm:$0xff]
      %v3217 = vld [vmem:[%s7 + $0x8] sm:$0xff]
      %v3218 = vld [vmem:[%s7 + $0x10] sm:$0xff]
      %v3219 = vld [vmem:[%s7 + $0x18] sm:$0xff]
      %v3220 = vld [vmem:[#allocation2] sm:$0x1]
      %v3222 = vlaneseq
      %v3223 = vshrl.u32 %v3222, 7
      %v3224 = vsub.s32 0, %v3223
      %v3225 = vrot.slane %v3220, %v3224
      %3228 = vrot.lane.b32.xlu0 %v3215, 32
      %v3229 = vpop.permute.xlu0 %3228
      %v3230 = vsel %vm511, %v3229, 0
      %3232 = vmatprep.subr.mxu0 0.0
      %3233 = vmatpush1.msra.mxu0 %v3216
      %3234 = vmatprep.subr.mxu0 0.0
      %3235 = vmatpush1.msra.mxu0 %v3217
      %3236 = vmatprep.subr.mxu0 0.0
      %3237 = vmatpush1.msra.mxu0 %v3218
      %3238 = vmatprep.subr.mxu0 0.0
      %3239 = vmatpush1.msra.mxu0 %v3219
      %3240 = vmatprep.subr.mxu0 0.0
      %3241 = vmatpush1.msra.mxu0 0.0
      %3242 = vmatprep.subr.mxu0 0.0
      %3243 = vmatpush1.msra.mxu0 0.0
      %3244 = vmatprep.subr.mxu0 0.0
      %3245 = vmatpush1.msra.mxu0 0.0
      %3246 = vmatprep.subr.mxu0 0.0
      %3247 = vmatpush1.msra.mxu0 0.0
      %3248 = vmatprep.subr.mxu0 0.0
      %3249 = vmatpush1.msra.mxu0 0.0
      %3250 = vmatprep.subr.mxu0 0.0
      %3251 = vmatpush1.msra.mxu0 0.0
      %3252 = vmatprep.subr.mxu0 0.0
      %3253 = vmatpush1.msra.mxu0 0.0
      %3254 = vmatprep.subr.mxu0 0.0
      %3255 = vmatpush1.msra.mxu0 0.0
      %3256 = vmatprep.subr.mxu0 0.0
      %3257 = vmatpush1.msra.mxu0 0.0
      %3258 = vmatprep.subr.mxu0 0.0
      %3259 = vmatpush1.msra.mxu0 0.0
      %3260 = vmatprep.subr.mxu0 0.0
      %3261 = vmatpush1.msra.mxu0 0.0
      %3262 = vmatprep.subr.mxu0 0.0
      %3263 = vmatpush1.msra.mxu0 0.0
      %3264 = vmatprep.subr.mxu0 0.0
      %3265 = vmatpush1.msra.mxu0 0.0
      %3266 = vmatprep.subr.mxu0 0.0
      %3267 = vmatpush1.msra.mxu0 0.0
      %3268 = vmatprep.subr.mxu0 0.0
      %3269 = vmatpush1.msra.mxu0 0.0
      %3270 = vmatprep.subr.mxu0 0.0
      %3271 = vmatpush1.msra.mxu0 0.0
      %3272 = vmatprep.subr.mxu0 0.0
      %3273 = vmatpush1.msra.mxu0 0.0
      %3274 = vmatprep.subr.mxu0 0.0
      %3275 = vmatpush1.msra.mxu0 0.0
      %3276 = vmatprep.subr.mxu0 0.0
      %3277 = vmatpush1.msra.mxu0 0.0
      %3278 = vmatprep.subr.mxu0 0.0
      %3279 = vmatpush1.msra.mxu0 0.0
      %3280 = vmatprep.subr.mxu0 0.0
      %3281 = vmatpush1.msra.mxu0 0.0
      %3282 = vmatprep.subr.mxu0 0.0
      %3283 = vmatpush1.msra.mxu0 0.0
      %3284 = vmatprep.subr.mxu0 0.0
      %3285 = vmatpush1.msra.mxu0 0.0
      %3286 = vmatprep.subr.mxu0 0.0
      %3287 = vmatpush1.msra.mxu0 0.0
      %3288 = vmatprep.subr.mxu0 0.0
      %3289 = vmatpush1.msra.mxu0 0.0
      %3290 = vmatprep.subr.mxu0 0.0
      %3291 = vmatpush1.msra.mxu0 0.0
      %3292 = vmatprep.subr.mxu0 0.0
      %3293 = vmatpush1.msra.mxu0 0.0
      %3294 = vmatprep.subr.mxu0 0.0
      %3295 = vmatpush1.msra.mxu0 0.0
      %3296 = vmatprep.mubr.f32.mxu0 0.0
      %3297 = vmatmul.mubr.f32.gmra.mrb[0].mxu0 %v3230
      %v3298 = vpop.f32.mrb[0].mxu0
      %v3299 = vadd.f32 %v3225, %v3298
      %v3300 = vpop.f32.mrb[0].mxu0
      %3301 = vdwg.mxu0
      %vm3302 = vcmask 7168
      %3303 = vst.msk [vmem:[%s332] sm:$0xff] %vm3302, %v3299
      %p3304 = scmp.lt.s32.totalorder %s22, 1
      %s3305 = scalar_select %p3304, %s22, 1
      %s3306 = smul.addr %s3305, 8
      %s3307 = scalar_lea.vmem %s9, %s3306
      // Predicated region
      $region57: #{tpu_custom_call.1} parent=55 // pred_check
        %p3308 = pneg %p234
      $region58: #{tpu_custom_call.1} parent=55 // pred_check_branch
        %3310 = sbr.rel (%p3308) target = $region60
      $region59: #{tpu_custom_call.1} parent=55 // pred_region
        _
      $region60: #{tpu_custom_call.1} parent=55 // pred_fallthru
        _
    $region56: #{tpu_custom_call.1} parent=5 // pred_fallthru
      _
    %p3311 = scmp.le.s32.totalorder 2, %s17
    // Predicated region
    $region61: #{tpu_custom_call.1} parent=5 // pred_check
      %p3312 = pneg %p3311
    $region62: #{tpu_custom_call.1} parent=5 // pred_check_branch
      %3314 = sbr.rel (%p3312) target = $region64
    $region63: #{tpu_custom_call.1} parent=5 // pred_region
      %s3315 = ssub.s32 %s17, 2
      // Predicated region
      $region65: #{tpu_custom_call.1} parent=63 // pred_check
        %p3316 = pneg %p240
      $region66: #{tpu_custom_call.1} parent=63 // pred_check_branch
        %3318 = sbr.rel (%p3316) target = $region68
      $region67: #{tpu_custom_call.1} parent=63 // pred_region
        %p3319 = scmp.lt.s32.totalorder %s23, 1
        %s3320 = scalar_select %p3319, %s23, 1
        %s3321 = smul.addr %s3320, 8
        %s3322 = scalar_lea.vmem %s9, %s3321
      $region68: #{tpu_custom_call.1} parent=63 // pred_fallthru
        _
    $region64: #{tpu_custom_call.1} parent=5 // pred_fallthru
      _
  $region6: #{tpu_custom_call.1} parent=0 // loop_footer
    %s21 = sadd.s32 1, %s17
  $region7: #{tpu_custom_call.1} parent=0 // loop_footer_branch
    %16 = sbr.rel target = $region3
  $region8: #{tpu_custom_call.1} parent=0 // loop_exit
    _

</llo_original>
